<compile_context>
chip_gen: v6e
topology: v6e:2x2x1
jax: 0.10.0
libtpu: 0.0.40
codegen_flags: <defaults>
</compile_context>

<pallas_src>
import math

import jax
import jax.numpy as jnp
from jax.experimental import pallas as pl
from jax.experimental.pallas import tpu as pltpu

LOG2PI = math.log(2.0 * math.pi)
SIGMA_P = 1.0        # std of transition prior p(x_t | x_{t-1}, u_{t-1}; v_t)
SCALE_EPS = 1e-4     # positivity floor for encoder scale / velocity-net softplus
ROWPAD = 8           # sublane tile: batch dim N is padded to this per time step


def _dot(a, b):
    # Default MXU precision (single bf16 pass) + f32 accumulator.
    # TODO(synk): raise precision on the two F-wide contractions (encoder first
    # layer, decoder output) if bit-parity with an f32 torch baseline matters.
    return jnp.dot(a, b, preferred_element_type=jnp.float32)


# ------------------------------- Pallas kernel -------------------------------

def make_nvae_kernel(T, N, D, F, H1, H2, Hv, offsets):
    R = ROWPAD

    def kernel(delta_ref, obs_ref, act_ref, eps_ref, We1_ref, Wd2_ref, pack_ref,
               out_ref, x_scr, loc_scr, scale_scr, pre_scr):

        def P(name):
            o, r, c = offsets[name]          # static, 8-row aligned offsets
            return pack_ref[o:o + r, :c]

        # ---- batched encoder q(x_t | I_t) + reparameterized sample (all rows) ----
        obs = obs_ref[...]                                          # (T*R, F)
        h1 = jnp.maximum(_dot(obs, We1_ref[...]) + P("be1"), 0.0)   # (T*R, H1)
        q_loc = _dot(h1, P("Wq_loc")) + P("bq_loc")                 # (T*R, D)
        q_scale = jax.nn.softplus(_dot(h1, P("Wq_scale")) + P("bq_scale")) + SCALE_EPS
        x = q_loc + q_scale * eps_ref[...]                          # (T*R, D)

        x_scr[...] = x
        loc_scr[...] = q_loc
        scale_scr[...] = q_scale

        # ---- batched decoder p(I_t | x_t) + reconstruction ll, rows t >= 1 only ----
        # TODO(synk): F-chunk this block for realistic frame sizes (never
        # materialize the full (rows, F) slabs) -- mandatory on v7x VMEM.
        h2 = jnp.maximum(_dot(x[R:, :], P("Wd1")) + P("bd1"), 0.0)          # ((T-1)R, H2)
        I_mean = _dot(h2, Wd2_ref[0:H2, :]) + Wd2_ref[H2:H2 + 1, :]         # ((T-1)R, F)
        sq = (obs_ref[R:, :] - I_mean) ** 2
        row_ll = -0.5 * (jnp.sum(sq, axis=-1, keepdims=True) + F * LOG2PI)  # ((T-1)R, 1)
        ridx = jax.lax.broadcasted_iota(jnp.int32, ((T - 1) * R, 1), 0)
        E_ll_sum = jnp.sum(jnp.where((ridx & (R - 1)) < N, row_ll, 0.0))    # mask pad rows

        # ---- hoisted x / u contributions of the velocity net first layer ----
        # pre block (t-1)  <->  step t :  x_{t-1} @ Wv1_x + action[t] @ Wv1_u + bv1
        prex = _dot(x, P("Wv1_x"))                   # block t  <->  x_t
        preu = _dot(act_ref[...], P("Wv1_u"))        # block t  <->  action[t]
        pre_scr[...] = prex[:(T - 1) * R, :] + preu[R:, :] + P("bv1")

        Wv1_v = P("Wv1_v")                                    # (D, Hv)
        wv_rows = [Wv1_v[d:d + 1, :] for d in range(D)]       # hoisted (1, Hv) rows
        WvA, bvA = P("WvA"), P("bvA")
        WvB, bvB = P("WvB"), P("bvB")
        WvC, bvC = P("WvC"), P("bvC")
        bmask = jax.lax.broadcasted_iota(jnp.int32, (R, 1), 0) < N

        # ---- tiny sequential velocity / KL recurrence (carries only v_{t-1}) ----
        # TODO(synk): convert to lax.fori_loop(..., unroll=k) once T becomes large.
        v_tm1 = jnp.zeros((R, D), jnp.float32)
        E_kl_sum = jnp.float32(0.0)
        for t in range(1, T):
            dt = delta_ref[t]                                  # SMEM scalar read
            x_tm1 = x_scr[(t - 1) * R:t * R, :]                # 8-aligned static slices
            loc_t = loc_scr[t * R:(t + 1) * R, :]
            scale_t = scale_scr[t * R:(t + 1) * R, :]
            u_tm1 = act_ref[t * R:(t + 1) * R, :]

            # only the v_{t-1} term of the first layer is step-dependent:
            # D broadcast-FMAs on the VPU, no MXU round-trip in the chain.
            hin = pre_scr[(t - 1) * R:t * R, :]
            for d in range(D):
                hin = hin + v_tm1[:, d:d + 1] * wv_rows[d]
            hv = jnp.maximum(hin, 0.0)                         # (R, Hv)

            # lane-aligned per-head matmuls (no slicing of a fused [A|B|C] result)
            A = _dot(hv, WvA) + bvA
            B = -jnp.log(jax.nn.softplus(_dot(hv, WvB) + bvB) + SCALE_EPS)
            C = jnp.log(jax.nn.softplus(_dot(hv, WvC) + bvC) + SCALE_EPS)
            v_t = v_tm1 + dt * (A * x_tm1 + B * v_tm1 + C * u_tm1)

            # KL( q(x_t | I_t) || N(x_{t-1} + dt * v_t, SIGMA_P^2) )
            p_loc = x_tm1 + dt * v_t
            kl = (jnp.log(SIGMA_P / scale_t)
                  + (scale_t ** 2 + (loc_t - p_loc) ** 2) / (2.0 * SIGMA_P ** 2)
                  - 0.5)
            E_kl_sum = E_kl_sum + jnp.sum(jnp.where(bmask, kl, 0.0))
            v_tm1 = v_t

        inv = 1.0 / (N * T)
        E_ll_m = E_ll_sum * inv
        E_kl_m = E_kl_sum * inv
        out_ref[0] = E_ll_m - E_kl_m      # E
        out_ref[1] = E_ll_m               # E_ll
        out_ref[2] = E_kl_m               # E_kl

    return kernel


# ------------------------------- wrapper -------------------------------

def _pack_small_params(p):
    """Concatenate every small parameter into ONE (rows, width) f32 array.

    Cuts 16+ tiny HBM->VMEM DMA descriptors down to one; each piece starts at
    an 8-row (sublane-tile) aligned offset so in-kernel static slices are free.
    """
    names = ["be1", "Wq_loc", "bq_loc", "Wq_scale", "bq_scale",
             "Wd1", "bd1",
             "Wv1_x", "Wv1_v", "Wv1_u", "bv1",
             "WvA", "bvA", "WvB", "bvB", "WvC", "bvC"]
    arrs = []
    for n in names:
        a = jnp.asarray(p[n], jnp.float32)
        if a.ndim == 1:
            a = a[None, :]
        arrs.append(a)
    width = max(a.shape[1] for a in arrs)
    offsets, rows, cur = {}, [], 0
    for n, a in zip(names, arrs):
        r, c = a.shape
        rpad = (-r) % ROWPAD
        rows.append(jnp.pad(a, ((0, rpad), (0, width - c))))
        offsets[n] = (cur, r, c)
        cur += r + rpad
    return jnp.concatenate(rows, axis=0), offsets


def newtonian_vae_forward(action, observation, delta, noise, params):
    T, N, D = action.shape
    F = observation.shape[2] * observation.shape[3] * observation.shape[4]
    H1 = params["We1"].shape[1]
    H2 = params["Wd2"].shape[0]
    Hv = params["bv1"].shape[0]
    R = ROWPAD
    assert N <= R, "TODO(synk): pad N up to a multiple of 8 for larger batches"

    # Pad the batch dim of every per-frame tensor to the sublane tile and flatten
    # to t-major rows so every per-step access in the kernel is tile aligned.
    def pad_rows(a, last):
        a = a.reshape(T, N, last).astype(jnp.float32)
        return jnp.pad(a, ((0, 0), (0, R - N), (0, 0))).reshape(T * R, last)

    obs_rows = pad_rows(observation, F)            # (T*R, F)
    act_rows = pad_rows(action, D)                 # (T*R, D)
    eps_rows = pad_rows(noise, D)                  # (T*R, D)
    delta_f = delta.astype(jnp.float32)

    pack, offsets = _pack_small_params(params)
    # decoder output weight with its bias folded in as 8-aligned extra rows
    Wd2_aug = jnp.concatenate(
        [params["Wd2"].astype(jnp.float32),
         params["bd2"].astype(jnp.float32)[None, :]], axis=0)
    Wd2_aug = jnp.pad(Wd2_aug, ((0, (-(H2 + 1)) % ROWPAD), (0, 0)))

    kernel = make_nvae_kernel(T, N, D, F, H1, H2, Hv, offsets)

    vmem = pl.BlockSpec(memory_space=pltpu.MemorySpace.VMEM)
    smem = pl.BlockSpec(memory_space=pltpu.MemorySpace.SMEM)

    out = pl.pallas_call(
        kernel,
        out_shape=jax.ShapeDtypeStruct((3,), jnp.float32),      # [E, E_ll, E_kl]
        in_specs=[smem, vmem, vmem, vmem, vmem, vmem, vmem],
        out_specs=smem,
        scratch_shapes=[
            pltpu.VMEM((T * R, D), jnp.float32),         # x samples
            pltpu.VMEM((T * R, D), jnp.float32),         # q loc
            pltpu.VMEM((T * R, D), jnp.float32),         # q scale
            pltpu.VMEM(((T - 1) * R, Hv), jnp.float32),  # hoisted velocity-net pre-act
        ],
    )(delta_f, obs_rows, act_rows, eps_rows,
      params["We1"].astype(jnp.float32), Wd2_aug, pack)

    return out[0], out[1], out[2]


# --------------------------- pure-JAX reference ---------------------------

def newtonian_vae_reference(action, observation, delta, noise, p):
    T, N, D = action.shape
    obs = observation.reshape(T, N, -1).astype(jnp.float32)
    E_sum = E_ll_sum = E_kl_sum = 0.0
    x_tn1 = None
    v_tn1 = jnp.zeros((N, D), jnp.float32)
    for t in range(T):
        I_t, u_tn1, eps = obs[t], action[t], noise[t]
        h1 = jnp.maximum(_dot(I_t, p["We1"]) + p["be1"], 0.0)
        q_loc = _dot(h1, p["Wq_loc"]) + p["bq_loc"]
        q_scale = jax.nn.softplus(_dot(h1, p["Wq_scale"]) + p["bq_scale"]) + SCALE_EPS
        x_t = q_loc + q_scale * eps
        if t > 0:
            dt = delta[t]
            hv = jnp.maximum(_dot(x_tn1, p["Wv1_x"]) + _dot(v_tn1, p["Wv1_v"])
                             + _dot(u_tn1, p["Wv1_u"]) + p["bv1"], 0.0)
            A = _dot(hv, p["WvA"]) + p["bvA"]
            B = -jnp.log(jax.nn.softplus(_dot(hv, p["WvB"]) + p["bvB"]) + SCALE_EPS)
            C = jnp.log(jax.nn.softplus(_dot(hv, p["WvC"]) + p["bvC"]) + SCALE_EPS)
            v_t = v_tn1 + dt * (A * x_tn1 + B * v_tn1 + C * u_tn1)

            h2 = jnp.maximum(_dot(x_t, p["Wd1"]) + p["bd1"], 0.0)
            I_mean = _dot(h2, p["Wd2"]) + p["bd2"]
            E_ll = jnp.sum(-0.5 * ((I_t - I_mean) ** 2 + LOG2PI)) / N

            p_loc = x_tn1 + dt * v_t
            kl = (jnp.log(SIGMA_P / q_scale)
                  + (q_scale ** 2 + (q_loc - p_loc) ** 2) / (2.0 * SIGMA_P ** 2)
                  - 0.5)
            E_kl = jnp.sum(kl) / N

            E_sum = E_sum + (E_ll - E_kl)
            E_ll_sum = E_ll_sum + E_ll
            E_kl_sum = E_kl_sum + E_kl
            v_tn1 = v_t
        x_tn1 = x_t
    return E_sum / T, E_ll_sum / T, E_kl_sum / T


# ------------------------------- params -------------------------------

def init_params(key, D, F, H1, H2, Hv, scale=0.05):
    shapes = {
        "We1": (F, H1), "be1": (H1,),
        "Wq_loc": (H1, D), "bq_loc": (D,),
        "Wq_scale": (H1, D), "bq_scale": (D,),
        "Wd1": (D, H2), "bd1": (H2,),
        "Wd2": (H2, F), "bd2": (F,),
        "Wv1_x": (D, Hv), "Wv1_v": (D, Hv), "Wv1_u": (D, Hv), "bv1": (Hv,),
        "WvA": (Hv, D), "bvA": (D,),
        "WvB": (Hv, D), "bvB": (D,),
        "WvC": (Hv, D), "bvC": (D,),
    }
    keys = jax.random.split(key, len(shapes))
    return {n: scale * jax.random.normal(k, s, dtype=jnp.float32)
            for (n, s), k in zip(shapes.items(), keys)}


if __name__ == "__main__":
    T, N, D = 5, 2, 4          # seq len, batch, dim(x) = dim(u)
    C, H, W = 3, 16, 16        # observation frame
    H1, H2, Hv = 64, 64, 32    # hidden widths
    F = C * H * W

    key = jax.random.PRNGKey(0)
    k_act, k_obs, k_noise, k_par = jax.random.split(key, 4)

    action = jax.random.normal(k_act, (T, N, D), dtype=jnp.float32)
    observation = jax.random.normal(k_obs, (T, N, C, H, W), dtype=jnp.float32)
    delta = jnp.full((T,), 0.1, dtype=jnp.float32)
    noise = jax.random.normal(k_noise, (T, N, D), dtype=jnp.float32)  # rsample eps
    params = init_params(k_par, D, F, H1, H2, Hv)

    E, E_ll, E_kl = jax.block_until_ready(
        newtonian_vae_forward(action, observation, delta, noise, params))

    E_r, E_ll_r, E_kl_r = newtonian_vae_reference(
        action, observation, delta, noise, params)

    assert jnp.allclose(E, E_r, rtol=1e-2, atol=2e-2), (E, E_r)
    assert jnp.allclose(E_ll, E_ll_r, rtol=1e-2, atol=2e-2), (E_ll, E_ll_r)
    assert jnp.allclose(E_kl, E_kl_r, rtol=1e-2, atol=2e-2), (E_kl, E_kl_r)

    print("KERNEL_OK")
</pallas_src>

<mosaic_0001>
module attributes {stable_mosaic.version = 11 : i64} {
  func.func @kernel(%arg0: memref<5xf32, #tpu.memory_space<smem>>, %arg1: memref<40x768xf32, #tpu.memory_space<vmem>>, %arg2: memref<40x4xf32, #tpu.memory_space<vmem>>, %arg3: memref<40x4xf32, #tpu.memory_space<vmem>>, %arg4: memref<768x64xf32, #tpu.memory_space<vmem>>, %arg5: memref<72x768xf32, #tpu.memory_space<vmem>>, %arg6: memref<320x64xf32, #tpu.memory_space<vmem>>, %arg7: memref<3xf32, #tpu.memory_space<smem>>, %arg8: memref<40x4xf32, #tpu.memory_space<vmem>>, %arg9: memref<40x4xf32, #tpu.memory_space<vmem>>, %arg10: memref<40x4xf32, #tpu.memory_space<vmem>>, %arg11: memref<32x32xf32, #tpu.memory_space<vmem>>) attributes {dimension_semantics = [], scalar_prefetch = 0 : i64, scratch_operands = 4 : i64, tpu.core_type = #tpu.core_type<tc>} {
    %c0 = arith.constant 0 : index
    %c0_0 = arith.constant 0 : index
    %0 = vector.load %arg1[%c0, %c0_0] : memref<40x768xf32, #tpu.memory_space<vmem>>, vector<40x768xf32>
    %c0_1 = arith.constant 0 : index
    %c0_2 = arith.constant 0 : index
    %1 = vector.load %arg4[%c0_1, %c0_2] : memref<768x64xf32, #tpu.memory_space<vmem>>, vector<768x64xf32>
    %cst = arith.constant dense<0.000000e+00> : vector<40x64xf32>
    %2 = tpu.matmul %0, %1, %cst {dimension_numbers = #tpu.dot_dimension_numbers<[1], [0], [0], [1], [0, 0, 1, 1], [], []>} : vector<40x768xf32>, vector<768x64xf32>, vector<40x64xf32> -> vector<40x64xf32>
    %c0_3 = arith.constant 0 : index
    %c0_4 = arith.constant 0 : index
    %3 = vector.load %arg6[%c0_3, %c0_4] : memref<320x64xf32, #tpu.memory_space<vmem>>, vector<1x64xf32>
    %4 = vector.broadcast %3 : vector<1x64xf32> to vector<40x64xf32>
    %5 = arith.addf %2, %4 : vector<40x64xf32>
    %cst_5 = arith.constant 0.000000e+00 : f32
    %6 = vector.broadcast %cst_5 : f32 to vector<40x64xf32>
    %7 = arith.maximumf %5, %6 : vector<40x64xf32>
    %c8 = arith.constant 8 : index
    %c0_6 = arith.constant 0 : index
    %8 = vector.load %arg6[%c8, %c0_6] : memref<320x64xf32, #tpu.memory_space<vmem>>, vector<64x4xf32>
    %cst_7 = arith.constant dense<0.000000e+00> : vector<40x4xf32>
    %9 = tpu.matmul %7, %8, %cst_7 {dimension_numbers = #tpu.dot_dimension_numbers<[1], [0], [0], [1], [0, 0, 1, 1], [], []>} : vector<40x64xf32>, vector<64x4xf32>, vector<40x4xf32> -> vector<40x4xf32>
    %c72 = arith.constant 72 : index
    %c0_8 = arith.constant 0 : index
    %10 = vector.load %arg6[%c72, %c0_8] : memref<320x64xf32, #tpu.memory_space<vmem>>, vector<1x4xf32>
    %11 = vector.broadcast %10 : vector<1x4xf32> to vector<40x4xf32>
    %12 = arith.addf %9, %11 : vector<40x4xf32>
    %c80 = arith.constant 80 : index
    %c0_9 = arith.constant 0 : index
    %13 = vector.load %arg6[%c80, %c0_9] : memref<320x64xf32, #tpu.memory_space<vmem>>, vector<64x4xf32>
    %cst_10 = arith.constant dense<0.000000e+00> : vector<40x4xf32>
    %14 = tpu.matmul %7, %13, %cst_10 {dimension_numbers = #tpu.dot_dimension_numbers<[1], [0], [0], [1], [0, 0, 1, 1], [], []>} : vector<40x64xf32>, vector<64x4xf32>, vector<40x4xf32> -> vector<40x4xf32>
    %c144 = arith.constant 144 : index
    %c0_11 = arith.constant 0 : index
    %15 = vector.load %arg6[%c144, %c0_11] : memref<320x64xf32, #tpu.memory_space<vmem>>, vector<1x4xf32>
    %16 = vector.broadcast %15 : vector<1x4xf32> to vector<40x4xf32>
    %17 = arith.addf %14, %16 : vector<40x4xf32>
    %cst_12 = arith.constant 0.000000e+00 : f32
    %18 = vector.broadcast %cst_12 : f32 to vector<40x4xf32>
    %19 = arith.maximumf %17, %18 : vector<40x4xf32>
    %20 = vector.broadcast %cst_12 : f32 to vector<40x4xf32>
    %21 = arith.subf %17, %20 : vector<40x4xf32>
    %22 = arith.cmpf one, %21, %21 : vector<40x4xf32>
    %23 = vector.broadcast %cst_12 : f32 to vector<40x4xf32>
    %24 = arith.addf %17, %23 : vector<40x4xf32>
    %25 = math.absf %21 : vector<40x4xf32>
    %cst_13 = arith.constant 0.000000e+00 : f32
    %26 = vector.broadcast %cst_13 : f32 to vector<40x4xf32>
    %27 = arith.subf %26, %25 : vector<40x4xf32>
    %28 = math.exp %27 : vector<40x4xf32>
    %29 = math.log1p %28 : vector<40x4xf32>
    %30 = arith.addf %19, %29 : vector<40x4xf32>
    %31 = arith.select %22, %24, %30 : vector<40x4xi1>, vector<40x4xf32>
    %cst_14 = arith.constant 9.99999974E-5 : f32
    %32 = vector.broadcast %cst_14 : f32 to vector<40x4xf32>
    %33 = arith.addf %31, %32 : vector<40x4xf32>
    %c0_15 = arith.constant 0 : index
    %c0_16 = arith.constant 0 : index
    %34 = vector.load %arg3[%c0_15, %c0_16] : memref<40x4xf32, #tpu.memory_space<vmem>>, vector<40x4xf32>
    %35 = arith.mulf %33, %34 : vector<40x4xf32>
    %36 = arith.addf %12, %35 : vector<40x4xf32>
    %c0_17 = arith.constant 0 : index
    %c0_18 = arith.constant 0 : index
    %37 = vector.load %arg8[%c0_17, %c0_18] : memref<40x4xf32, #tpu.memory_space<vmem>>, vector<40x4xf32>
    tpu.vector_store %arg8[%c0_17, %c0_18], %36 {strides = array<i32>} : memref<40x4xf32, #tpu.memory_space<vmem>>, vector<40x4xf32>,
    %c0_19 = arith.constant 0 : index
    %c0_20 = arith.constant 0 : index
    %38 = vector.load %arg9[%c0_19, %c0_20] : memref<40x4xf32, #tpu.memory_space<vmem>>, vector<40x4xf32>
    tpu.vector_store %arg9[%c0_19, %c0_20], %12 {strides = array<i32>} : memref<40x4xf32, #tpu.memory_space<vmem>>, vector<40x4xf32>,
    %c0_21 = arith.constant 0 : index
    %c0_22 = arith.constant 0 : index
    %39 = vector.load %arg10[%c0_21, %c0_22] : memref<40x4xf32, #tpu.memory_space<vmem>>, vector<40x4xf32>
    tpu.vector_store %arg10[%c0_21, %c0_22], %33 {strides = array<i32>} : memref<40x4xf32, #tpu.memory_space<vmem>>, vector<40x4xf32>,
    %40 = vector.extract_strided_slice %36 {offsets = [8, 0], sizes = [32, 4], strides = [1, 1]} : vector<40x4xf32> to vector<32x4xf32>
    %c152 = arith.constant 152 : index
    %c0_23 = arith.constant 0 : index
    %41 = vector.load %arg6[%c152, %c0_23] : memref<320x64xf32, #tpu.memory_space<vmem>>, vector<4x64xf32>
    %cst_24 = arith.constant dense<0.000000e+00> : vector<32x64xf32>
    %42 = tpu.matmul %40, %41, %cst_24 {dimension_numbers = #tpu.dot_dimension_numbers<[1], [0], [0], [1], [0, 0, 1, 1], [], []>} : vector<32x4xf32>, vector<4x64xf32>, vector<32x64xf32> -> vector<32x64xf32>
    %c160 = arith.constant 160 : index
    %c0_25 = arith.constant 0 : index
    %43 = vector.load %arg6[%c160, %c0_25] : memref<320x64xf32, #tpu.memory_space<vmem>>, vector<1x64xf32>
    %44 = vector.broadcast %43 : vector<1x64xf32> to vector<32x64xf32>
    %45 = arith.addf %42, %44 : vector<32x64xf32>
    %cst_26 = arith.constant 0.000000e+00 : f32
    %46 = vector.broadcast %cst_26 : f32 to vector<32x64xf32>
    %47 = arith.maximumf %45, %46 : vector<32x64xf32>
    %c0_27 = arith.constant 0 : index
    %c0_28 = arith.constant 0 : index
    %48 = vector.load %arg5[%c0_27, %c0_28] : memref<72x768xf32, #tpu.memory_space<vmem>>, vector<64x768xf32>
    %cst_29 = arith.constant dense<0.000000e+00> : vector<32x768xf32>
    %49 = tpu.matmul %47, %48, %cst_29 {dimension_numbers = #tpu.dot_dimension_numbers<[1], [0], [0], [1], [0, 0, 1, 1], [], []>} : vector<32x64xf32>, vector<64x768xf32>, vector<32x768xf32> -> vector<32x768xf32>
    %c64 = arith.constant 64 : index
    %c0_30 = arith.constant 0 : index
    %50 = vector.load %arg5[%c64, %c0_30] : memref<72x768xf32, #tpu.memory_space<vmem>>, vector<1x768xf32>
    %51 = vector.broadcast %50 : vector<1x768xf32> to vector<32x768xf32>
    %52 = arith.addf %49, %51 : vector<32x768xf32>
    %c8_31 = arith.constant 8 : index
    %c0_32 = arith.constant 0 : index
    %53 = vector.load %arg1[%c8_31, %c0_32] : memref<40x768xf32, #tpu.memory_space<vmem>>, vector<32x768xf32>
    %54 = arith.subf %53, %52 : vector<32x768xf32>
    %55 = arith.mulf %54, %54 : vector<32x768xf32>
    %cst_33 = arith.constant dense<0.000000e+00> : vector<32xf32>
    %56 = vector.multi_reduction <add>, %55, %cst_33 [1] : vector<32x768xf32> to vector<32xf32>
    %57 = vector.shape_cast %56 : vector<32xf32> to vector<32x1xf32>
    %cst_34 = arith.constant 1411.48962 : f32
    %58 = vector.broadcast %cst_34 : f32 to vector<32x1xf32>
    %59 = arith.addf %57, %58 : vector<32x1xf32>
    %cst_35 = arith.constant -5.000000e-01 : f32
    %60 = vector.broadcast %cst_35 : f32 to vector<32x1xf32>
    %61 = arith.mulf %60, %59 : vector<32x1xf32>
    %62 = tpu.iota {dimensions = array<i32: 0>} : vector<32x1xi32>
    %c7_i32 = arith.constant 7 : i32
    %63 = vector.broadcast %c7_i32 : i32 to vector<32x1xi32>
    %64 = arith.andi %62, %63 : vector<32x1xi32>
    %c2_i32 = arith.constant 2 : i32
    %65 = vector.broadcast %c2_i32 : i32 to vector<32x1xi32>
    %66 = arith.cmpi slt, %64, %65 : vector<32x1xi32>
    %cst_36 = arith.constant 0.000000e+00 : f32
    %67 = vector.broadcast %cst_36 : f32 to vector<32x1xf32>
    %68 = arith.select %66, %61, %67 : vector<32x1xi1>, vector<32x1xf32>
    %69 = vector.shape_cast %68 : vector<32x1xf32> to vector<1x32x1xf32>
    %cst_37 = arith.constant dense<0.000000e+00> : vector<1xf32>
    %70 = vector.multi_reduction <add>, %69, %cst_37 [1, 2] : vector<1x32x1xf32> to vector<1xf32>
    %71 = vector.shape_cast %70 : vector<1xf32> to vector<1x1x1xf32>
    %72 = vector.extract %71[0, 0, 0] : f32 from vector<1x1x1xf32>
    %c168 = arith.constant 168 : index
    %c0_38 = arith.constant 0 : index
    %73 = vector.load %arg6[%c168, %c0_38] : memref<320x64xf32, #tpu.memory_space<vmem>>, vector<4x32xf32>
    %cst_39 = arith.constant dense<0.000000e+00> : vector<40x32xf32>
    %74 = tpu.matmul %36, %73, %cst_39 {dimension_numbers = #tpu.dot_dimension_numbers<[1], [0], [0], [1], [0, 0, 1, 1], [], []>} : vector<40x4xf32>, vector<4x32xf32>, vector<40x32xf32> -> vector<40x32xf32>
    %c0_40 = arith.constant 0 : index
    %c0_41 = arith.constant 0 : index
    %75 = vector.load %arg2[%c0_40, %c0_41] : memref<40x4xf32, #tpu.memory_space<vmem>>, vector<40x4xf32>
    %c184 = arith.constant 184 : index
    %c0_42 = arith.constant 0 : index
    %76 = vector.load %arg6[%c184, %c0_42] : memref<320x64xf32, #tpu.memory_space<vmem>>, vector<4x32xf32>
    %cst_43 = arith.constant dense<0.000000e+00> : vector<40x32xf32>
    %77 = tpu.matmul %75, %76, %cst_43 {dimension_numbers = #tpu.dot_dimension_numbers<[1], [0], [0], [1], [0, 0, 1, 1], [], []>} : vector<40x4xf32>, vector<4x32xf32>, vector<40x32xf32> -> vector<40x32xf32>
    %78 = vector.extract_strided_slice %74 {offsets = [0, 0], sizes = [32, 32], strides = [1, 1]} : vector<40x32xf32> to vector<32x32xf32>
    %79 = vector.extract_strided_slice %77 {offsets = [8, 0], sizes = [32, 32], strides = [1, 1]} : vector<40x32xf32> to vector<32x32xf32>
    %80 = arith.addf %78, %79 : vector<32x32xf32>
    %c192 = arith.constant 192 : index
    %c0_44 = arith.constant 0 : index
    %81 = vector.load %arg6[%c192, %c0_44] : memref<320x64xf32, #tpu.memory_space<vmem>>, vector<1x32xf32>
    %82 = vector.broadcast %81 : vector<1x32xf32> to vector<32x32xf32>
    %83 = arith.addf %80, %82 : vector<32x32xf32>
    %c0_45 = arith.constant 0 : index
    %c0_46 = arith.constant 0 : index
    %84 = vector.load %arg11[%c0_45, %c0_46] : memref<32x32xf32, #tpu.memory_space<vmem>>, vector<32x32xf32>
    tpu.vector_store %arg11[%c0_45, %c0_46], %83 {strides = array<i32>} : memref<32x32xf32, #tpu.memory_space<vmem>>, vector<32x32xf32>,
    %c176 = arith.constant 176 : index
    %c0_47 = arith.constant 0 : index
    %85 = vector.load %arg6[%c176, %c0_47] : memref<320x64xf32, #tpu.memory_space<vmem>>, vector<4x32xf32>
    %86 = vector.extract_strided_slice %85 {offsets = [0, 0], sizes = [1, 32], strides = [1, 1]} : vector<4x32xf32> to vector<1x32xf32>
    %87 = vector.extract_strided_slice %85 {offsets = [1, 0], sizes = [1, 32], strides = [1, 1]} : vector<4x32xf32> to vector<1x32xf32>
    %88 = vector.extract_strided_slice %85 {offsets = [2, 0], sizes = [1, 32], strides = [1, 1]} : vector<4x32xf32> to vector<1x32xf32>
    %89 = vector.extract_strided_slice %85 {offsets = [3, 0], sizes = [1, 32], strides = [1, 1]} : vector<4x32xf32> to vector<1x32xf32>
    %c200 = arith.constant 200 : index
    %c0_48 = arith.constant 0 : index
    %90 = vector.load %arg6[%c200, %c0_48] : memref<320x64xf32, #tpu.memory_space<vmem>>, vector<32x4xf32>
    %c232 = arith.constant 232 : index
    %c0_49 = arith.constant 0 : index
    %91 = vector.load %arg6[%c232, %c0_49] : memref<320x64xf32, #tpu.memory_space<vmem>>, vector<1x4xf32>
    %c240 = arith.constant 240 : index
    %c0_50 = arith.constant 0 : index
    %92 = vector.load %arg6[%c240, %c0_50] : memref<320x64xf32, #tpu.memory_space<vmem>>, vector<32x4xf32>
    %c272 = arith.constant 272 : index
    %c0_51 = arith.constant 0 : index
    %93 = vector.load %arg6[%c272, %c0_51] : memref<320x64xf32, #tpu.memory_space<vmem>>, vector<1x4xf32>
    %c280 = arith.constant 280 : index
    %c0_52 = arith.constant 0 : index
    %94 = vector.load %arg6[%c280, %c0_52] : memref<320x64xf32, #tpu.memory_space<vmem>>, vector<32x4xf32>
    %c312 = arith.constant 312 : index
    %c0_53 = arith.constant 0 : index
    %95 = vector.load %arg6[%c312, %c0_53] : memref<320x64xf32, #tpu.memory_space<vmem>>, vector<1x4xf32>
    %96 = tpu.iota {dimensions = array<i32: 0>} : vector<8x1xi32>
    %c2_i32_54 = arith.constant 2 : i32
    %97 = vector.broadcast %c2_i32_54 : i32 to vector<8x1xi32>
    %98 = arith.cmpi slt, %96, %97 : vector<8x1xi32>
    %cst_55 = arith.constant 0.000000e+00 : f32
    %99 = vector.broadcast %cst_55 : f32 to vector<8x4xf32>
    %c1 = arith.constant 1 : index
    %100 = memref.load %arg0[%c1] : memref<5xf32, #tpu.memory_space<smem>>
    %c0_56 = arith.constant 0 : index
    %c0_57 = arith.constant 0 : index
    %101 = vector.load %arg8[%c0_56, %c0_57] : memref<40x4xf32, #tpu.memory_space<vmem>>, vector<8x4xf32>
    %c8_58 = arith.constant 8 : index
    %c0_59 = arith.constant 0 : index
    %102 = vector.load %arg9[%c8_58, %c0_59] : memref<40x4xf32, #tpu.memory_space<vmem>>, vector<8x4xf32>
    %c8_60 = arith.constant 8 : index
    %c0_61 = arith.constant 0 : index
    %103 = vector.load %arg10[%c8_60, %c0_61] : memref<40x4xf32, #tpu.memory_space<vmem>>, vector<8x4xf32>
    %c8_62 = arith.constant 8 : index
    %c0_63 = arith.constant 0 : index
    %104 = vector.load %arg2[%c8_62, %c0_63] : memref<40x4xf32, #tpu.memory_space<vmem>>, vector<8x4xf32>
    %c0_64 = arith.constant 0 : index
    %c0_65 = arith.constant 0 : index
    %105 = vector.load %arg11[%c0_64, %c0_65] : memref<32x32xf32, #tpu.memory_space<vmem>>, vector<8x32xf32>
    %106 = vector.extract_strided_slice %99 {offsets = [0, 0], sizes = [8, 1], strides = [1, 1]} : vector<8x4xf32> to vector<8x1xf32>
    %107 = vector.broadcast %106 : vector<8x1xf32> to vector<8x32xf32>
    %108 = vector.broadcast %86 : vector<1x32xf32> to vector<8x32xf32>
    %109 = arith.mulf %107, %108 : vector<8x32xf32>
    %110 = arith.addf %105, %109 : vector<8x32xf32>
    %111 = vector.extract_strided_slice %99 {offsets = [0, 1], sizes = [8, 1], strides = [1, 1]} : vector<8x4xf32> to vector<8x1xf32>
    %112 = vector.broadcast %111 : vector<8x1xf32> to vector<8x32xf32>
    %113 = vector.broadcast %87 : vector<1x32xf32> to vector<8x32xf32>
    %114 = arith.mulf %112, %113 : vector<8x32xf32>
    %115 = arith.addf %110, %114 : vector<8x32xf32>
    %116 = vector.extract_strided_slice %99 {offsets = [0, 2], sizes = [8, 1], strides = [1, 1]} : vector<8x4xf32> to vector<8x1xf32>
    %117 = vector.broadcast %116 : vector<8x1xf32> to vector<8x32xf32>
    %118 = vector.broadcast %88 : vector<1x32xf32> to vector<8x32xf32>
    %119 = arith.mulf %117, %118 : vector<8x32xf32>
    %120 = arith.addf %115, %119 : vector<8x32xf32>
    %121 = vector.extract_strided_slice %99 {offsets = [0, 3], sizes = [8, 1], strides = [1, 1]} : vector<8x4xf32> to vector<8x1xf32>
    %122 = vector.broadcast %121 : vector<8x1xf32> to vector<8x32xf32>
    %123 = vector.broadcast %89 : vector<1x32xf32> to vector<8x32xf32>
    %124 = arith.mulf %122, %123 : vector<8x32xf32>
    %125 = arith.addf %120, %124 : vector<8x32xf32>
    %cst_66 = arith.constant 0.000000e+00 : f32
    %126 = vector.broadcast %cst_66 : f32 to vector<8x32xf32>
    %127 = arith.maximumf %125, %126 : vector<8x32xf32>
    %cst_67 = arith.constant dense<0.000000e+00> : vector<8x4xf32>
    %128 = tpu.matmul %127, %90, %cst_67 {dimension_numbers = #tpu.dot_dimension_numbers<[1], [0], [0], [1], [0, 0, 1, 1], [], []>} : vector<8x32xf32>, vector<32x4xf32>, vector<8x4xf32> -> vector<8x4xf32>
    %129 = vector.broadcast %91 : vector<1x4xf32> to vector<8x4xf32>
    %130 = arith.addf %128, %129 : vector<8x4xf32>
    %cst_68 = arith.constant dense<0.000000e+00> : vector<8x4xf32>
    %131 = tpu.matmul %127, %92, %cst_68 {dimension_numbers = #tpu.dot_dimension_numbers<[1], [0], [0], [1], [0, 0, 1, 1], [], []>} : vector<8x32xf32>, vector<32x4xf32>, vector<8x4xf32> -> vector<8x4xf32>
    %132 = vector.broadcast %93 : vector<1x4xf32> to vector<8x4xf32>
    %133 = arith.addf %131, %132 : vector<8x4xf32>
    %cst_69 = arith.constant 0.000000e+00 : f32
    %134 = vector.broadcast %cst_69 : f32 to vector<8x4xf32>
    %135 = arith.maximumf %133, %134 : vector<8x4xf32>
    %136 = vector.broadcast %cst_69 : f32 to vector<8x4xf32>
    %137 = arith.subf %133, %136 : vector<8x4xf32>
    %138 = arith.cmpf one, %137, %137 : vector<8x4xf32>
    %139 = vector.broadcast %cst_69 : f32 to vector<8x4xf32>
    %140 = arith.addf %133, %139 : vector<8x4xf32>
    %141 = math.absf %137 : vector<8x4xf32>
    %cst_70 = arith.constant 0.000000e+00 : f32
    %142 = vector.broadcast %cst_70 : f32 to vector<8x4xf32>
    %143 = arith.subf %142, %141 : vector<8x4xf32>
    %144 = math.exp %143 : vector<8x4xf32>
    %145 = math.log1p %144 : vector<8x4xf32>
    %146 = arith.addf %135, %145 : vector<8x4xf32>
    %147 = arith.select %138, %140, %146 : vector<8x4xi1>, vector<8x4xf32>
    %cst_71 = arith.constant 9.99999974E-5 : f32
    %148 = vector.broadcast %cst_71 : f32 to vector<8x4xf32>
    %149 = arith.addf %147, %148 : vector<8x4xf32>
    %150 = math.log %149 : vector<8x4xf32>
    %cst_72 = arith.constant 0.000000e+00 : f32
    %151 = vector.broadcast %cst_72 : f32 to vector<8x4xf32>
    %152 = arith.subf %151, %150 : vector<8x4xf32>
    %cst_73 = arith.constant dense<0.000000e+00> : vector<8x4xf32>
    %153 = tpu.matmul %127, %94, %cst_73 {dimension_numbers = #tpu.dot_dimension_numbers<[1], [0], [0], [1], [0, 0, 1, 1], [], []>} : vector<8x32xf32>, vector<32x4xf32>, vector<8x4xf32> -> vector<8x4xf32>
    %154 = vector.broadcast %95 : vector<1x4xf32> to vector<8x4xf32>
    %155 = arith.addf %153, %154 : vector<8x4xf32>
    %cst_74 = arith.constant 0.000000e+00 : f32
    %156 = vector.broadcast %cst_74 : f32 to vector<8x4xf32>
    %157 = arith.maximumf %155, %156 : vector<8x4xf32>
    %158 = vector.broadcast %cst_74 : f32 to vector<8x4xf32>
    %159 = arith.subf %155, %158 : vector<8x4xf32>
    %160 = arith.cmpf one, %159, %159 : vector<8x4xf32>
    %161 = vector.broadcast %cst_74 : f32 to vector<8x4xf32>
    %162 = arith.addf %155, %161 : vector<8x4xf32>
    %163 = math.absf %159 : vector<8x4xf32>
    %cst_75 = arith.constant 0.000000e+00 : f32
    %164 = vector.broadcast %cst_75 : f32 to vector<8x4xf32>
    %165 = arith.subf %164, %163 : vector<8x4xf32>
    %166 = math.exp %165 : vector<8x4xf32>
    %167 = math.log1p %166 : vector<8x4xf32>
    %168 = arith.addf %157, %167 : vector<8x4xf32>
    %169 = arith.select %160, %162, %168 : vector<8x4xi1>, vector<8x4xf32>
    %cst_76 = arith.constant 9.99999974E-5 : f32
    %170 = vector.broadcast %cst_76 : f32 to vector<8x4xf32>
    %171 = arith.addf %169, %170 : vector<8x4xf32>
    %172 = math.log %171 : vector<8x4xf32>
    %173 = arith.mulf %130, %101 : vector<8x4xf32>
    %174 = arith.mulf %152, %99 : vector<8x4xf32>
    %175 = arith.addf %173, %174 : vector<8x4xf32>
    %176 = arith.mulf %172, %104 : vector<8x4xf32>
    %177 = arith.addf %175, %176 : vector<8x4xf32>
    %178 = vector.broadcast %100 : f32 to vector<8x4xf32>
    %179 = arith.mulf %178, %177 : vector<8x4xf32>
    %180 = arith.addf %99, %179 : vector<8x4xf32>
    %181 = vector.broadcast %100 : f32 to vector<8x4xf32>
    %182 = arith.mulf %181, %180 : vector<8x4xf32>
    %183 = arith.addf %101, %182 : vector<8x4xf32>
    %cst_77 = arith.constant 1.000000e+00 : f32
    %184 = vector.broadcast %cst_77 : f32 to vector<8x4xf32>
    %185 = arith.divf %184, %103 : vector<8x4xf32>
    %186 = math.log %185 : vector<8x4xf32>
    %187 = arith.mulf %103, %103 : vector<8x4xf32>
    %188 = arith.subf %102, %183 : vector<8x4xf32>
    %189 = arith.mulf %188, %188 : vector<8x4xf32>
    %190 = arith.addf %187, %189 : vector<8x4xf32>
    %cst_78 = arith.constant 2.000000e+00 : f32
    %191 = vector.broadcast %cst_78 : f32 to vector<8x4xf32>
    %192 = arith.divf %190, %191 : vector<8x4xf32>
    %193 = arith.addf %186, %192 : vector<8x4xf32>
    %cst_79 = arith.constant 5.000000e-01 : f32
    %194 = vector.broadcast %cst_79 : f32 to vector<8x4xf32>
    %195 = arith.subf %193, %194 : vector<8x4xf32>
    %cst_80 = arith.constant 0.000000e+00 : f32
    %196 = vector.shape_cast %98 : vector<8x1xi1> to vector<8x1xi1>
    %197 = vector.broadcast %196 : vector<8x1xi1> to vector<8x4xi1>
    %198 = vector.broadcast %cst_80 : f32 to vector<8x4xf32>
    %199 = arith.select %197, %195, %198 : vector<8x4xi1>, vector<8x4xf32>
    %200 = vector.shape_cast %199 : vector<8x4xf32> to vector<1x8x4xf32>
    %cst_81 = arith.constant dense<0.000000e+00> : vector<1xf32>
    %201 = vector.multi_reduction <add>, %200, %cst_81 [1, 2] : vector<1x8x4xf32> to vector<1xf32>
    %202 = vector.shape_cast %201 : vector<1xf32> to vector<1x1x1xf32>
    %203 = vector.extract %202[0, 0, 0] : f32 from vector<1x1x1xf32>
    %cst_82 = arith.constant 0.000000e+00 : f32
    %204 = arith.addf %cst_82, %203 : f32
    %c2 = arith.constant 2 : index
    %205 = memref.load %arg0[%c2] : memref<5xf32, #tpu.memory_space<smem>>
    %c8_83 = arith.constant 8 : index
    %c0_84 = arith.constant 0 : index
    %206 = vector.load %arg8[%c8_83, %c0_84] : memref<40x4xf32, #tpu.memory_space<vmem>>, vector<8x4xf32>
    %c16 = arith.constant 16 : index
    %c0_85 = arith.constant 0 : index
    %207 = vector.load %arg9[%c16, %c0_85] : memref<40x4xf32, #tpu.memory_space<vmem>>, vector<8x4xf32>
    %c16_86 = arith.constant 16 : index
    %c0_87 = arith.constant 0 : index
    %208 = vector.load %arg10[%c16_86, %c0_87] : memref<40x4xf32, #tpu.memory_space<vmem>>, vector<8x4xf32>
    %c16_88 = arith.constant 16 : index
    %c0_89 = arith.constant 0 : index
    %209 = vector.load %arg2[%c16_88, %c0_89] : memref<40x4xf32, #tpu.memory_space<vmem>>, vector<8x4xf32>
    %c8_90 = arith.constant 8 : index
    %c0_91 = arith.constant 0 : index
    %210 = vector.load %arg11[%c8_90, %c0_91] : memref<32x32xf32, #tpu.memory_space<vmem>>, vector<8x32xf32>
    %211 = vector.extract_strided_slice %180 {offsets = [0, 0], sizes = [8, 1], strides = [1, 1]} : vector<8x4xf32> to vector<8x1xf32>
    %212 = vector.broadcast %211 : vector<8x1xf32> to vector<8x32xf32>
    %213 = vector.broadcast %86 : vector<1x32xf32> to vector<8x32xf32>
    %214 = arith.mulf %212, %213 : vector<8x32xf32>
    %215 = arith.addf %210, %214 : vector<8x32xf32>
    %216 = vector.extract_strided_slice %180 {offsets = [0, 1], sizes = [8, 1], strides = [1, 1]} : vector<8x4xf32> to vector<8x1xf32>
    %217 = vector.broadcast %216 : vector<8x1xf32> to vector<8x32xf32>
    %218 = vector.broadcast %87 : vector<1x32xf32> to vector<8x32xf32>
    %219 = arith.mulf %217, %218 : vector<8x32xf32>
    %220 = arith.addf %215, %219 : vector<8x32xf32>
    %221 = vector.extract_strided_slice %180 {offsets = [0, 2], sizes = [8, 1], strides = [1, 1]} : vector<8x4xf32> to vector<8x1xf32>
    %222 = vector.broadcast %221 : vector<8x1xf32> to vector<8x32xf32>
    %223 = vector.broadcast %88 : vector<1x32xf32> to vector<8x32xf32>
    %224 = arith.mulf %222, %223 : vector<8x32xf32>
    %225 = arith.addf %220, %224 : vector<8x32xf32>
    %226 = vector.extract_strided_slice %180 {offsets = [0, 3], sizes = [8, 1], strides = [1, 1]} : vector<8x4xf32> to vector<8x1xf32>
    %227 = vector.broadcast %226 : vector<8x1xf32> to vector<8x32xf32>
    %228 = vector.broadcast %89 : vector<1x32xf32> to vector<8x32xf32>
    %229 = arith.mulf %227, %228 : vector<8x32xf32>
    %230 = arith.addf %225, %229 : vector<8x32xf32>
    %cst_92 = arith.constant 0.000000e+00 : f32
    %231 = vector.broadcast %cst_92 : f32 to vector<8x32xf32>
    %232 = arith.maximumf %230, %231 : vector<8x32xf32>
    %cst_93 = arith.constant dense<0.000000e+00> : vector<8x4xf32>
    %233 = tpu.matmul %232, %90, %cst_93 {dimension_numbers = #tpu.dot_dimension_numbers<[1], [0], [0], [1], [0, 0, 1, 1], [], []>} : vector<8x32xf32>, vector<32x4xf32>, vector<8x4xf32> -> vector<8x4xf32>
    %234 = vector.broadcast %91 : vector<1x4xf32> to vector<8x4xf32>
    %235 = arith.addf %233, %234 : vector<8x4xf32>
    %cst_94 = arith.constant dense<0.000000e+00> : vector<8x4xf32>
    %236 = tpu.matmul %232, %92, %cst_94 {dimension_numbers = #tpu.dot_dimension_numbers<[1], [0], [0], [1], [0, 0, 1, 1], [], []>} : vector<8x32xf32>, vector<32x4xf32>, vector<8x4xf32> -> vector<8x4xf32>
    %237 = vector.broadcast %93 : vector<1x4xf32> to vector<8x4xf32>
    %238 = arith.addf %236, %237 : vector<8x4xf32>
    %cst_95 = arith.constant 0.000000e+00 : f32
    %239 = vector.broadcast %cst_95 : f32 to vector<8x4xf32>
    %240 = arith.maximumf %238, %239 : vector<8x4xf32>
    %241 = vector.broadcast %cst_95 : f32 to vector<8x4xf32>
    %242 = arith.subf %238, %241 : vector<8x4xf32>
    %243 = arith.cmpf one, %242, %242 : vector<8x4xf32>
    %244 = vector.broadcast %cst_95 : f32 to vector<8x4xf32>
    %245 = arith.addf %238, %244 : vector<8x4xf32>
    %246 = math.absf %242 : vector<8x4xf32>
    %cst_96 = arith.constant 0.000000e+00 : f32
    %247 = vector.broadcast %cst_96 : f32 to vector<8x4xf32>
    %248 = arith.subf %247, %246 : vector<8x4xf32>
    %249 = math.exp %248 : vector<8x4xf32>
    %250 = math.log1p %249 : vector<8x4xf32>
    %251 = arith.addf %240, %250 : vector<8x4xf32>
    %252 = arith.select %243, %245, %251 : vector<8x4xi1>, vector<8x4xf32>
    %cst_97 = arith.constant 9.99999974E-5 : f32
    %253 = vector.broadcast %cst_97 : f32 to vector<8x4xf32>
    %254 = arith.addf %252, %253 : vector<8x4xf32>
    %255 = math.log %254 : vector<8x4xf32>
    %cst_98 = arith.constant 0.000000e+00 : f32
    %256 = vector.broadcast %cst_98 : f32 to vector<8x4xf32>
    %257 = arith.subf %256, %255 : vector<8x4xf32>
    %cst_99 = arith.constant dense<0.000000e+00> : vector<8x4xf32>
    %258 = tpu.matmul %232, %94, %cst_99 {dimension_numbers = #tpu.dot_dimension_numbers<[1], [0], [0], [1], [0, 0, 1, 1], [], []>} : vector<8x32xf32>, vector<32x4xf32>, vector<8x4xf32> -> vector<8x4xf32>
    %259 = vector.broadcast %95 : vector<1x4xf32> to vector<8x4xf32>
    %260 = arith.addf %258, %259 : vector<8x4xf32>
    %cst_100 = arith.constant 0.000000e+00 : f32
    %261 = vector.broadcast %cst_100 : f32 to vector<8x4xf32>
    %262 = arith.maximumf %260, %261 : vector<8x4xf32>
    %263 = vector.broadcast %cst_100 : f32 to vector<8x4xf32>
    %264 = arith.subf %260, %263 : vector<8x4xf32>
    %265 = arith.cmpf one, %264, %264 : vector<8x4xf32>
    %266 = vector.broadcast %cst_100 : f32 to vector<8x4xf32>
    %267 = arith.addf %260, %266 : vector<8x4xf32>
    %268 = math.absf %264 : vector<8x4xf32>
    %cst_101 = arith.constant 0.000000e+00 : f32
    %269 = vector.broadcast %cst_101 : f32 to vector<8x4xf32>
    %270 = arith.subf %269, %268 : vector<8x4xf32>
    %271 = math.exp %270 : vector<8x4xf32>
    %272 = math.log1p %271 : vector<8x4xf32>
    %273 = arith.addf %262, %272 : vector<8x4xf32>
    %274 = arith.select %265, %267, %273 : vector<8x4xi1>, vector<8x4xf32>
    %cst_102 = arith.constant 9.99999974E-5 : f32
    %275 = vector.broadcast %cst_102 : f32 to vector<8x4xf32>
    %276 = arith.addf %274, %275 : vector<8x4xf32>
    %277 = math.log %276 : vector<8x4xf32>
    %278 = arith.mulf %235, %206 : vector<8x4xf32>
    %279 = arith.mulf %257, %180 : vector<8x4xf32>
    %280 = arith.addf %278, %279 : vector<8x4xf32>
    %281 = arith.mulf %277, %209 : vector<8x4xf32>
    %282 = arith.addf %280, %281 : vector<8x4xf32>
    %283 = vector.broadcast %205 : f32 to vector<8x4xf32>
    %284 = arith.mulf %283, %282 : vector<8x4xf32>
    %285 = arith.addf %180, %284 : vector<8x4xf32>
    %286 = vector.broadcast %205 : f32 to vector<8x4xf32>
    %287 = arith.mulf %286, %285 : vector<8x4xf32>
    %288 = arith.addf %206, %287 : vector<8x4xf32>
    %cst_103 = arith.constant 1.000000e+00 : f32
    %289 = vector.broadcast %cst_103 : f32 to vector<8x4xf32>
    %290 = arith.divf %289, %208 : vector<8x4xf32>
    %291 = math.log %290 : vector<8x4xf32>
    %292 = arith.mulf %208, %208 : vector<8x4xf32>
    %293 = arith.subf %207, %288 : vector<8x4xf32>
    %294 = arith.mulf %293, %293 : vector<8x4xf32>
    %295 = arith.addf %292, %294 : vector<8x4xf32>
    %cst_104 = arith.constant 2.000000e+00 : f32
    %296 = vector.broadcast %cst_104 : f32 to vector<8x4xf32>
    %297 = arith.divf %295, %296 : vector<8x4xf32>
    %298 = arith.addf %291, %297 : vector<8x4xf32>
    %cst_105 = arith.constant 5.000000e-01 : f32
    %299 = vector.broadcast %cst_105 : f32 to vector<8x4xf32>
    %300 = arith.subf %298, %299 : vector<8x4xf32>
    %cst_106 = arith.constant 0.000000e+00 : f32
    %301 = vector.shape_cast %98 : vector<8x1xi1> to vector<8x1xi1>
    %302 = vector.broadcast %301 : vector<8x1xi1> to vector<8x4xi1>
    %303 = vector.broadcast %cst_106 : f32 to vector<8x4xf32>
    %304 = arith.select %302, %300, %303 : vector<8x4xi1>, vector<8x4xf32>
    %305 = vector.shape_cast %304 : vector<8x4xf32> to vector<1x8x4xf32>
    %cst_107 = arith.constant dense<0.000000e+00> : vector<1xf32>
    %306 = vector.multi_reduction <add>, %305, %cst_107 [1, 2] : vector<1x8x4xf32> to vector<1xf32>
    %307 = vector.shape_cast %306 : vector<1xf32> to vector<1x1x1xf32>
    %308 = vector.extract %307[0, 0, 0] : f32 from vector<1x1x1xf32>
    %309 = arith.addf %204, %308 : f32
    %c3 = arith.constant 3 : index
    %310 = memref.load %arg0[%c3] : memref<5xf32, #tpu.memory_space<smem>>
    %c16_108 = arith.constant 16 : index
    %c0_109 = arith.constant 0 : index
    %311 = vector.load %arg8[%c16_108, %c0_109] : memref<40x4xf32, #tpu.memory_space<vmem>>, vector<8x4xf32>
    %c24 = arith.constant 24 : index
    %c0_110 = arith.constant 0 : index
    %312 = vector.load %arg9[%c24, %c0_110] : memref<40x4xf32, #tpu.memory_space<vmem>>, vector<8x4xf32>
    %c24_111 = arith.constant 24 : index
    %c0_112 = arith.constant 0 : index
    %313 = vector.load %arg10[%c24_111, %c0_112] : memref<40x4xf32, #tpu.memory_space<vmem>>, vector<8x4xf32>
    %c24_113 = arith.constant 24 : index
    %c0_114 = arith.constant 0 : index
    %314 = vector.load %arg2[%c24_113, %c0_114] : memref<40x4xf32, #tpu.memory_space<vmem>>, vector<8x4xf32>
    %c16_115 = arith.constant 16 : index
    %c0_116 = arith.constant 0 : index
    %315 = vector.load %arg11[%c16_115, %c0_116] : memref<32x32xf32, #tpu.memory_space<vmem>>, vector<8x32xf32>
    %316 = vector.extract_strided_slice %285 {offsets = [0, 0], sizes = [8, 1], strides = [1, 1]} : vector<8x4xf32> to vector<8x1xf32>
    %317 = vector.broadcast %316 : vector<8x1xf32> to vector<8x32xf32>
    %318 = vector.broadcast %86 : vector<1x32xf32> to vector<8x32xf32>
    %319 = arith.mulf %317, %318 : vector<8x32xf32>
    %320 = arith.addf %315, %319 : vector<8x32xf32>
    %321 = vector.extract_strided_slice %285 {offsets = [0, 1], sizes = [8, 1], strides = [1, 1]} : vector<8x4xf32> to vector<8x1xf32>
    %322 = vector.broadcast %321 : vector<8x1xf32> to vector<8x32xf32>
    %323 = vector.broadcast %87 : vector<1x32xf32> to vector<8x32xf32>
    %324 = arith.mulf %322, %323 : vector<8x32xf32>
    %325 = arith.addf %320, %324 : vector<8x32xf32>
    %326 = vector.extract_strided_slice %285 {offsets = [0, 2], sizes = [8, 1], strides = [1, 1]} : vector<8x4xf32> to vector<8x1xf32>
    %327 = vector.broadcast %326 : vector<8x1xf32> to vector<8x32xf32>
    %328 = vector.broadcast %88 : vector<1x32xf32> to vector<8x32xf32>
    %329 = arith.mulf %327, %328 : vector<8x32xf32>
    %330 = arith.addf %325, %329 : vector<8x32xf32>
    %331 = vector.extract_strided_slice %285 {offsets = [0, 3], sizes = [8, 1], strides = [1, 1]} : vector<8x4xf32> to vector<8x1xf32>
    %332 = vector.broadcast %331 : vector<8x1xf32> to vector<8x32xf32>
    %333 = vector.broadcast %89 : vector<1x32xf32> to vector<8x32xf32>
    %334 = arith.mulf %332, %333 : vector<8x32xf32>
    %335 = arith.addf %330, %334 : vector<8x32xf32>
    %cst_117 = arith.constant 0.000000e+00 : f32
    %336 = vector.broadcast %cst_117 : f32 to vector<8x32xf32>
    %337 = arith.maximumf %335, %336 : vector<8x32xf32>
    %cst_118 = arith.constant dense<0.000000e+00> : vector<8x4xf32>
    %338 = tpu.matmul %337, %90, %cst_118 {dimension_numbers = #tpu.dot_dimension_numbers<[1], [0], [0], [1], [0, 0, 1, 1], [], []>} : vector<8x32xf32>, vector<32x4xf32>, vector<8x4xf32> -> vector<8x4xf32>
    %339 = vector.broadcast %91 : vector<1x4xf32> to vector<8x4xf32>
    %340 = arith.addf %338, %339 : vector<8x4xf32>
    %cst_119 = arith.constant dense<0.000000e+00> : vector<8x4xf32>
    %341 = tpu.matmul %337, %92, %cst_119 {dimension_numbers = #tpu.dot_dimension_numbers<[1], [0], [0], [1], [0, 0, 1, 1], [], []>} : vector<8x32xf32>, vector<32x4xf32>, vector<8x4xf32> -> vector<8x4xf32>
    %342 = vector.broadcast %93 : vector<1x4xf32> to vector<8x4xf32>
    %343 = arith.addf %341, %342 : vector<8x4xf32>
    %cst_120 = arith.constant 0.000000e+00 : f32
    %344 = vector.broadcast %cst_120 : f32 to vector<8x4xf32>
    %345 = arith.maximumf %343, %344 : vector<8x4xf32>
    %346 = vector.broadcast %cst_120 : f32 to vector<8x4xf32>
    %347 = arith.subf %343, %346 : vector<8x4xf32>
    %348 = arith.cmpf one, %347, %347 : vector<8x4xf32>
    %349 = vector.broadcast %cst_120 : f32 to vector<8x4xf32>
    %350 = arith.addf %343, %349 : vector<8x4xf32>
    %351 = math.absf %347 : vector<8x4xf32>
    %cst_121 = arith.constant 0.000000e+00 : f32
    %352 = vector.broadcast %cst_121 : f32 to vector<8x4xf32>
    %353 = arith.subf %352, %351 : vector<8x4xf32>
    %354 = math.exp %353 : vector<8x4xf32>
    %355 = math.log1p %354 : vector<8x4xf32>
    %356 = arith.addf %345, %355 : vector<8x4xf32>
    %357 = arith.select %348, %350, %356 : vector<8x4xi1>, vector<8x4xf32>
    %cst_122 = arith.constant 9.99999974E-5 : f32
    %358 = vector.broadcast %cst_122 : f32 to vector<8x4xf32>
    %359 = arith.addf %357, %358 : vector<8x4xf32>
    %360 = math.log %359 : vector<8x4xf32>
    %cst_123 = arith.constant 0.000000e+00 : f32
    %361 = vector.broadcast %cst_123 : f32 to vector<8x4xf32>
    %362 = arith.subf %361, %360 : vector<8x4xf32>
    %cst_124 = arith.constant dense<0.000000e+00> : vector<8x4xf32>
    %363 = tpu.matmul %337, %94, %cst_124 {dimension_numbers = #tpu.dot_dimension_numbers<[1], [0], [0], [1], [0, 0, 1, 1], [], []>} : vector<8x32xf32>, vector<32x4xf32>, vector<8x4xf32> -> vector<8x4xf32>
    %364 = vector.broadcast %95 : vector<1x4xf32> to vector<8x4xf32>
    %365 = arith.addf %363, %364 : vector<8x4xf32>
    %cst_125 = arith.constant 0.000000e+00 : f32
    %366 = vector.broadcast %cst_125 : f32 to vector<8x4xf32>
    %367 = arith.maximumf %365, %366 : vector<8x4xf32>
    %368 = vector.broadcast %cst_125 : f32 to vector<8x4xf32>
    %369 = arith.subf %365, %368 : vector<8x4xf32>
    %370 = arith.cmpf one, %369, %369 : vector<8x4xf32>
    %371 = vector.broadcast %cst_125 : f32 to vector<8x4xf32>
    %372 = arith.addf %365, %371 : vector<8x4xf32>
    %373 = math.absf %369 : vector<8x4xf32>
    %cst_126 = arith.constant 0.000000e+00 : f32
    %374 = vector.broadcast %cst_126 : f32 to vector<8x4xf32>
    %375 = arith.subf %374, %373 : vector<8x4xf32>
    %376 = math.exp %375 : vector<8x4xf32>
    %377 = math.log1p %376 : vector<8x4xf32>
    %378 = arith.addf %367, %377 : vector<8x4xf32>
    %379 = arith.select %370, %372, %378 : vector<8x4xi1>, vector<8x4xf32>
    %cst_127 = arith.constant 9.99999974E-5 : f32
    %380 = vector.broadcast %cst_127 : f32 to vector<8x4xf32>
    %381 = arith.addf %379, %380 : vector<8x4xf32>
    %382 = math.log %381 : vector<8x4xf32>
    %383 = arith.mulf %340, %311 : vector<8x4xf32>
    %384 = arith.mulf %362, %285 : vector<8x4xf32>
    %385 = arith.addf %383, %384 : vector<8x4xf32>
    %386 = arith.mulf %382, %314 : vector<8x4xf32>
    %387 = arith.addf %385, %386 : vector<8x4xf32>
    %388 = vector.broadcast %310 : f32 to vector<8x4xf32>
    %389 = arith.mulf %388, %387 : vector<8x4xf32>
    %390 = arith.addf %285, %389 : vector<8x4xf32>
    %391 = vector.broadcast %310 : f32 to vector<8x4xf32>
    %392 = arith.mulf %391, %390 : vector<8x4xf32>
    %393 = arith.addf %311, %392 : vector<8x4xf32>
    %cst_128 = arith.constant 1.000000e+00 : f32
    %394 = vector.broadcast %cst_128 : f32 to vector<8x4xf32>
    %395 = arith.divf %394, %313 : vector<8x4xf32>
    %396 = math.log %395 : vector<8x4xf32>
    %397 = arith.mulf %313, %313 : vector<8x4xf32>
    %398 = arith.subf %312, %393 : vector<8x4xf32>
    %399 = arith.mulf %398, %398 : vector<8x4xf32>
    %400 = arith.addf %397, %399 : vector<8x4xf32>
    %cst_129 = arith.constant 2.000000e+00 : f32
    %401 = vector.broadcast %cst_129 : f32 to vector<8x4xf32>
    %402 = arith.divf %400, %401 : vector<8x4xf32>
    %403 = arith.addf %396, %402 : vector<8x4xf32>
    %cst_130 = arith.constant 5.000000e-01 : f32
    %404 = vector.broadcast %cst_130 : f32 to vector<8x4xf32>
    %405 = arith.subf %403, %404 : vector<8x4xf32>
    %cst_131 = arith.constant 0.000000e+00 : f32
    %406 = vector.shape_cast %98 : vector<8x1xi1> to vector<8x1xi1>
    %407 = vector.broadcast %406 : vector<8x1xi1> to vector<8x4xi1>
    %408 = vector.broadcast %cst_131 : f32 to vector<8x4xf32>
    %409 = arith.select %407, %405, %408 : vector<8x4xi1>, vector<8x4xf32>
    %410 = vector.shape_cast %409 : vector<8x4xf32> to vector<1x8x4xf32>
    %cst_132 = arith.constant dense<0.000000e+00> : vector<1xf32>
    %411 = vector.multi_reduction <add>, %410, %cst_132 [1, 2] : vector<1x8x4xf32> to vector<1xf32>
    %412 = vector.shape_cast %411 : vector<1xf32> to vector<1x1x1xf32>
    %413 = vector.extract %412[0, 0, 0] : f32 from vector<1x1x1xf32>
    %414 = arith.addf %309, %413 : f32
    %c4 = arith.constant 4 : index
    %415 = memref.load %arg0[%c4] : memref<5xf32, #tpu.memory_space<smem>>
    %c24_133 = arith.constant 24 : index
    %c0_134 = arith.constant 0 : index
    %416 = vector.load %arg8[%c24_133, %c0_134] : memref<40x4xf32, #tpu.memory_space<vmem>>, vector<8x4xf32>
    %c32 = arith.constant 32 : index
    %c0_135 = arith.constant 0 : index
    %417 = vector.load %arg9[%c32, %c0_135] : memref<40x4xf32, #tpu.memory_space<vmem>>, vector<8x4xf32>
    %c32_136 = arith.constant 32 : index
    %c0_137 = arith.constant 0 : index
    %418 = vector.load %arg10[%c32_136, %c0_137] : memref<40x4xf32, #tpu.memory_space<vmem>>, vector<8x4xf32>
    %c32_138 = arith.constant 32 : index
    %c0_139 = arith.constant 0 : index
    %419 = vector.load %arg2[%c32_138, %c0_139] : memref<40x4xf32, #tpu.memory_space<vmem>>, vector<8x4xf32>
    %c24_140 = arith.constant 24 : index
    %c0_141 = arith.constant 0 : index
    %420 = vector.load %arg11[%c24_140, %c0_141] : memref<32x32xf32, #tpu.memory_space<vmem>>, vector<8x32xf32>
    %421 = vector.extract_strided_slice %390 {offsets = [0, 0], sizes = [8, 1], strides = [1, 1]} : vector<8x4xf32> to vector<8x1xf32>
    %422 = vector.broadcast %421 : vector<8x1xf32> to vector<8x32xf32>
    %423 = vector.broadcast %86 : vector<1x32xf32> to vector<8x32xf32>
    %424 = arith.mulf %422, %423 : vector<8x32xf32>
    %425 = arith.addf %420, %424 : vector<8x32xf32>
    %426 = vector.extract_strided_slice %390 {offsets = [0, 1], sizes = [8, 1], strides = [1, 1]} : vector<8x4xf32> to vector<8x1xf32>
    %427 = vector.broadcast %426 : vector<8x1xf32> to vector<8x32xf32>
    %428 = vector.broadcast %87 : vector<1x32xf32> to vector<8x32xf32>
    %429 = arith.mulf %427, %428 : vector<8x32xf32>
    %430 = arith.addf %425, %429 : vector<8x32xf32>
    %431 = vector.extract_strided_slice %390 {offsets = [0, 2], sizes = [8, 1], strides = [1, 1]} : vector<8x4xf32> to vector<8x1xf32>
    %432 = vector.broadcast %431 : vector<8x1xf32> to vector<8x32xf32>
    %433 = vector.broadcast %88 : vector<1x32xf32> to vector<8x32xf32>
    %434 = arith.mulf %432, %433 : vector<8x32xf32>
    %435 = arith.addf %430, %434 : vector<8x32xf32>
    %436 = vector.extract_strided_slice %390 {offsets = [0, 3], sizes = [8, 1], strides = [1, 1]} : vector<8x4xf32> to vector<8x1xf32>
    %437 = vector.broadcast %436 : vector<8x1xf32> to vector<8x32xf32>
    %438 = vector.broadcast %89 : vector<1x32xf32> to vector<8x32xf32>
    %439 = arith.mulf %437, %438 : vector<8x32xf32>
    %440 = arith.addf %435, %439 : vector<8x32xf32>
    %cst_142 = arith.constant 0.000000e+00 : f32
    %441 = vector.broadcast %cst_142 : f32 to vector<8x32xf32>
    %442 = arith.maximumf %440, %441 : vector<8x32xf32>
    %cst_143 = arith.constant dense<0.000000e+00> : vector<8x4xf32>
    %443 = tpu.matmul %442, %90, %cst_143 {dimension_numbers = #tpu.dot_dimension_numbers<[1], [0], [0], [1], [0, 0, 1, 1], [], []>} : vector<8x32xf32>, vector<32x4xf32>, vector<8x4xf32> -> vector<8x4xf32>
    %444 = vector.broadcast %91 : vector<1x4xf32> to vector<8x4xf32>
    %445 = arith.addf %443, %444 : vector<8x4xf32>
    %cst_144 = arith.constant dense<0.000000e+00> : vector<8x4xf32>
    %446 = tpu.matmul %442, %92, %cst_144 {dimension_numbers = #tpu.dot_dimension_numbers<[1], [0], [0], [1], [0, 0, 1, 1], [], []>} : vector<8x32xf32>, vector<32x4xf32>, vector<8x4xf32> -> vector<8x4xf32>
    %447 = vector.broadcast %93 : vector<1x4xf32> to vector<8x4xf32>
    %448 = arith.addf %446, %447 : vector<8x4xf32>
    %cst_145 = arith.constant 0.000000e+00 : f32
    %449 = vector.broadcast %cst_145 : f32 to vector<8x4xf32>
    %450 = arith.maximumf %448, %449 : vector<8x4xf32>
    %451 = vector.broadcast %cst_145 : f32 to vector<8x4xf32>
    %452 = arith.subf %448, %451 : vector<8x4xf32>
    %453 = arith.cmpf one, %452, %452 : vector<8x4xf32>
    %454 = vector.broadcast %cst_145 : f32 to vector<8x4xf32>
    %455 = arith.addf %448, %454 : vector<8x4xf32>
    %456 = math.absf %452 : vector<8x4xf32>
    %cst_146 = arith.constant 0.000000e+00 : f32
    %457 = vector.broadcast %cst_146 : f32 to vector<8x4xf32>
    %458 = arith.subf %457, %456 : vector<8x4xf32>
    %459 = math.exp %458 : vector<8x4xf32>
    %460 = math.log1p %459 : vector<8x4xf32>
    %461 = arith.addf %450, %460 : vector<8x4xf32>
    %462 = arith.select %453, %455, %461 : vector<8x4xi1>, vector<8x4xf32>
    %cst_147 = arith.constant 9.99999974E-5 : f32
    %463 = vector.broadcast %cst_147 : f32 to vector<8x4xf32>
    %464 = arith.addf %462, %463 : vector<8x4xf32>
    %465 = math.log %464 : vector<8x4xf32>
    %cst_148 = arith.constant 0.000000e+00 : f32
    %466 = vector.broadcast %cst_148 : f32 to vector<8x4xf32>
    %467 = arith.subf %466, %465 : vector<8x4xf32>
    %cst_149 = arith.constant dense<0.000000e+00> : vector<8x4xf32>
    %468 = tpu.matmul %442, %94, %cst_149 {dimension_numbers = #tpu.dot_dimension_numbers<[1], [0], [0], [1], [0, 0, 1, 1], [], []>} : vector<8x32xf32>, vector<32x4xf32>, vector<8x4xf32> -> vector<8x4xf32>
    %469 = vector.broadcast %95 : vector<1x4xf32> to vector<8x4xf32>
    %470 = arith.addf %468, %469 : vector<8x4xf32>
    %cst_150 = arith.constant 0.000000e+00 : f32
    %471 = vector.broadcast %cst_150 : f32 to vector<8x4xf32>
    %472 = arith.maximumf %470, %471 : vector<8x4xf32>
    %473 = vector.broadcast %cst_150 : f32 to vector<8x4xf32>
    %474 = arith.subf %470, %473 : vector<8x4xf32>
    %475 = arith.cmpf one, %474, %474 : vector<8x4xf32>
    %476 = vector.broadcast %cst_150 : f32 to vector<8x4xf32>
    %477 = arith.addf %470, %476 : vector<8x4xf32>
    %478 = math.absf %474 : vector<8x4xf32>
    %cst_151 = arith.constant 0.000000e+00 : f32
    %479 = vector.broadcast %cst_151 : f32 to vector<8x4xf32>
    %480 = arith.subf %479, %478 : vector<8x4xf32>
    %481 = math.exp %480 : vector<8x4xf32>
    %482 = math.log1p %481 : vector<8x4xf32>
    %483 = arith.addf %472, %482 : vector<8x4xf32>
    %484 = arith.select %475, %477, %483 : vector<8x4xi1>, vector<8x4xf32>
    %cst_152 = arith.constant 9.99999974E-5 : f32
    %485 = vector.broadcast %cst_152 : f32 to vector<8x4xf32>
    %486 = arith.addf %484, %485 : vector<8x4xf32>
    %487 = math.log %486 : vector<8x4xf32>
    %488 = arith.mulf %445, %416 : vector<8x4xf32>
    %489 = arith.mulf %467, %390 : vector<8x4xf32>
    %490 = arith.addf %488, %489 : vector<8x4xf32>
    %491 = arith.mulf %487, %419 : vector<8x4xf32>
    %492 = arith.addf %490, %491 : vector<8x4xf32>
    %493 = vector.broadcast %415 : f32 to vector<8x4xf32>
    %494 = arith.mulf %493, %492 : vector<8x4xf32>
    %495 = arith.addf %390, %494 : vector<8x4xf32>
    %496 = vector.broadcast %415 : f32 to vector<8x4xf32>
    %497 = arith.mulf %496, %495 : vector<8x4xf32>
    %498 = arith.addf %416, %497 : vector<8x4xf32>
    %cst_153 = arith.constant 1.000000e+00 : f32
    %499 = vector.broadcast %cst_153 : f32 to vector<8x4xf32>
    %500 = arith.divf %499, %418 : vector<8x4xf32>
    %501 = math.log %500 : vector<8x4xf32>
    %502 = arith.mulf %418, %418 : vector<8x4xf32>
    %503 = arith.subf %417, %498 : vector<8x4xf32>
    %504 = arith.mulf %503, %503 : vector<8x4xf32>
    %505 = arith.addf %502, %504 : vector<8x4xf32>
    %cst_154 = arith.constant 2.000000e+00 : f32
    %506 = vector.broadcast %cst_154 : f32 to vector<8x4xf32>
    %507 = arith.divf %505, %506 : vector<8x4xf32>
    %508 = arith.addf %501, %507 : vector<8x4xf32>
    %cst_155 = arith.constant 5.000000e-01 : f32
    %509 = vector.broadcast %cst_155 : f32 to vector<8x4xf32>
    %510 = arith.subf %508, %509 : vector<8x4xf32>
    %cst_156 = arith.constant 0.000000e+00 : f32
    %511 = vector.shape_cast %98 : vector<8x1xi1> to vector<8x1xi1>
    %512 = vector.broadcast %511 : vector<8x1xi1> to vector<8x4xi1>
    %513 = vector.broadcast %cst_156 : f32 to vector<8x4xf32>
    %514 = arith.select %512, %510, %513 : vector<8x4xi1>, vector<8x4xf32>
    %515 = vector.shape_cast %514 : vector<8x4xf32> to vector<1x8x4xf32>
    %cst_157 = arith.constant dense<0.000000e+00> : vector<1xf32>
    %516 = vector.multi_reduction <add>, %515, %cst_157 [1, 2] : vector<1x8x4xf32> to vector<1xf32>
    %517 = vector.shape_cast %516 : vector<1xf32> to vector<1x1x1xf32>
    %518 = vector.extract %517[0, 0, 0] : f32 from vector<1x1x1xf32>
    %519 = arith.addf %414, %518 : f32
    %cst_158 = arith.constant 1.000000e-01 : f32
    %520 = arith.mulf %72, %cst_158 : f32
    %cst_159 = arith.constant 1.000000e-01 : f32
    %521 = arith.mulf %519, %cst_159 : f32
    %522 = arith.subf %520, %521 : f32
    %c0_160 = arith.constant 0 : index
    %523 = memref.load %arg7[%c0_160] : memref<3xf32, #tpu.memory_space<smem>>
    memref.store %522, %arg7[%c0_160] : memref<3xf32, #tpu.memory_space<smem>>
    %c1_161 = arith.constant 1 : index
    %524 = memref.load %arg7[%c1_161] : memref<3xf32, #tpu.memory_space<smem>>
    memref.store %520, %arg7[%c1_161] : memref<3xf32, #tpu.memory_space<smem>>
    %c2_162 = arith.constant 2 : index
    %525 = memref.load %arg7[%c2_162] : memref<3xf32, #tpu.memory_space<smem>>
    memref.store %521, %arg7[%c2_162] : memref<3xf32, #tpu.memory_space<smem>>
    return
  }
}

</mosaic_0001>

<llo_original>
// kernel: tpu_custom_call.1
$region0: #{tpu_custom_call.1}
  #allocation0 [shape = 'u32[]', space=smem, size = 0x4, offset = 0x4, fixed_abs, tag = 'smem constant byte address 0x4 - core index']
  #allocation1 [shape = 'u32[144,128]{1,0:T(1,128)}', space=vmem, size = 0x12000, scoped, tag = 'internal scratch']
  #allocation2 [shape = 'f32[40,4]{1,0:T(8,128)}', space=vmem, size = 0x5000, scoped, tag = 'scratch operand']
  #allocation3 [shape = 'f32[40,4]{1,0:T(8,128)}', space=vmem, size = 0x5000, scoped, tag = 'scratch operand']
  #allocation4 [shape = 'f32[40,4]{1,0:T(8,128)}', space=vmem, size = 0x5000, scoped, tag = 'scratch operand']
  #allocation5 [shape = 'f32[32,32]{1,0:T(8,128)}', space=vmem, size = 0x4000, scoped, tag = 'scratch operand']
  %s0 = inlined_call_operand.vmem [shape: f32[5], index: 0, kind: input, shape index: {}]
  %s1 = inlined_call_operand.vmem [shape: f32[40,768], index: 1, kind: input, shape index: {}]
  %s2 = inlined_call_operand.vmem [shape: f32[40,4], index: 2, kind: input, shape index: {}]
  %s3 = inlined_call_operand.vmem [shape: f32[40,4], index: 3, kind: input, shape index: {}]
  %s4 = inlined_call_operand.vmem [shape: f32[768,64], index: 4, kind: input, shape index: {}]
  %s5 = inlined_call_operand.vmem [shape: f32[72,768], index: 5, kind: input, shape index: {}]
  %s6 = inlined_call_operand.vmem [shape: f32[320,64], index: 6, kind: input, shape index: {}]
  %s7 = inlined_call_operand.hbm [shape: f32[3], index: 7, kind: output, shape index: {}]
  %s8 = sld [smem:[#allocation0]]
  $region42: #{tpu_custom_call.1} parent=0
    _
  %s10 = ssub.s32 1, %s8
  %s11 = scalar_select 0, %s10, %s8
  $region1: #{tpu_custom_call.1} parent=0
    #allocation6 [shape = 'u8[512]{0}', space=smem, size = 0x200, scoped, tag = 'input window, operand 0, single buffered']
    #allocation7 [shape = 's32[1]{0}', space=sflag, size = 0x4, scoped, tag = 'scoped memory for tpu_custom_call.1']
    #allocation8 [shape = 's32[1]{0}', space=sflag, size = 0x4, scoped, tag = 'scoped memory for tpu_custom_call.1']
    #allocation9 [shape = 'u8[512]{0}', space=smem, size = 0x200, scoped, tag = 'output window, operand 0, single buffered']
    %12 = vsyncpa [#allocation8], 0
    %13 = vsyncpa [#allocation7], 0
    // Predicated region
    $region2: #{tpu_custom_call.1} parent=1 // pred_check
      _
    $region3: #{tpu_custom_call.1} parent=1 // pred_check_branch
      %15 = sbr.rel (0) target = $region5
    $region4: #{tpu_custom_call.1} parent=1 // pred_region
      %s17 = ssub.s32 16, 16
      %18 = vsyncadd [#allocation8], %s17
      %s20 = sshll.u32 %s0, 4
      %s21 = int_to_ptr.vmem [resolvable:$true] %s20
      %23 = dma.vmem_to_smem %s21, 16, [#allocation6], [#allocation8]
    $region5: #{tpu_custom_call.1} parent=1 // pred_fallthru
      _
    // Predicated region
    $region6: #{tpu_custom_call.1} parent=1 // pred_check
      _
    $region7: #{tpu_custom_call.1} parent=1 // pred_check_branch
      %25 = sbr.rel (0) target = $region9
    $region8: #{tpu_custom_call.1} parent=1 // pred_region
      _
    $region9: #{tpu_custom_call.1} parent=1 // pred_fallthru
      _
    // Predicated region
    $region10: #{tpu_custom_call.1} parent=1 // pred_check
      _
    $region11: #{tpu_custom_call.1} parent=1 // pred_check_branch
      %27 = sbr.rel (0) target = $region13
    $region12: #{tpu_custom_call.1} parent=1 // pred_region
      _
    $region13: #{tpu_custom_call.1} parent=1 // pred_fallthru
      _
    // Predicated region
    $region14: #{tpu_custom_call.1} parent=1 // pred_check
      _
    $region15: #{tpu_custom_call.1} parent=1 // pred_check_branch
      %29 = sbr.rel (0) target = $region17
    $region16: #{tpu_custom_call.1} parent=1 // pred_region
      _
    $region17: #{tpu_custom_call.1} parent=1 // pred_fallthru
      _
    // Predicated region
    $region18: #{tpu_custom_call.1} parent=1 // pred_check
      _
    $region19: #{tpu_custom_call.1} parent=1 // pred_check_branch
      %31 = sbr.rel (0) target = $region21
    $region20: #{tpu_custom_call.1} parent=1 // pred_region
      _
    $region21: #{tpu_custom_call.1} parent=1 // pred_fallthru
      _
    // Predicated region
    $region22: #{tpu_custom_call.1} parent=1 // pred_check
      _
    $region23: #{tpu_custom_call.1} parent=1 // pred_check_branch
      %33 = sbr.rel (0) target = $region25
    $region24: #{tpu_custom_call.1} parent=1 // pred_region
      _
    $region25: #{tpu_custom_call.1} parent=1 // pred_fallthru
      _
    // Predicated region
    $region26: #{tpu_custom_call.1} parent=1 // pred_check
      _
    $region27: #{tpu_custom_call.1} parent=1 // pred_check_branch
      %35 = sbr.rel (0) target = $region29
    $region28: #{tpu_custom_call.1} parent=1 // pred_region
      _
    $region29: #{tpu_custom_call.1} parent=1 // pred_fallthru
      _
    // Predicated region
    $region30: #{tpu_custom_call.1} parent=1 // pred_check
      _
    $region31: #{tpu_custom_call.1} parent=1 // pred_check_branch
      %37 = sbr.rel (0) target = $region33
    $region32: #{tpu_custom_call.1} parent=1 // pred_region
      %38 = dma.done [#allocation8], 16
    $region33: #{tpu_custom_call.1} parent=1 // pred_fallthru
      _
    %39 = sfence
    %v40 = vld [vmem:[%s1] sm:$0xff]
    %v41 = vld [vmem:[%s1 + $0x8] sm:$0xff]
    %v42 = vld [vmem:[%s1 + $0x10] sm:$0xff]
    %v43 = vld [vmem:[%s1 + $0x18] sm:$0xff]
    %v44 = vld [vmem:[%s1 + $0x20] sm:$0xff]
    %v45 = vld [vmem:[%s1 + $0x28] sm:$0xff]
    %v46 = vld [vmem:[%s1 + $0x30] sm:$0xff]
    %v47 = vld [vmem:[%s1 + $0x38] sm:$0xff]
    %v48 = vld [vmem:[%s1 + $0x40] sm:$0xff]
    %v49 = vld [vmem:[%s1 + $0x48] sm:$0xff]
    %v50 = vld [vmem:[%s1 + $0x50] sm:$0xff]
    %v51 = vld [vmem:[%s1 + $0x58] sm:$0xff]
    %v52 = vld [vmem:[%s1 + $0x60] sm:$0xff]
    %v53 = vld [vmem:[%s1 + $0x68] sm:$0xff]
    %v54 = vld [vmem:[%s1 + $0x70] sm:$0xff]
    %v55 = vld [vmem:[%s1 + $0x78] sm:$0xff]
    %v56 = vld [vmem:[%s1 + $0x80] sm:$0xff]
    %v57 = vld [vmem:[%s1 + $0x88] sm:$0xff]
    %v58 = vld [vmem:[%s1 + $0x90] sm:$0xff]
    %v59 = vld [vmem:[%s1 + $0x98] sm:$0xff]
    %v60 = vld [vmem:[%s1 + $0xa0] sm:$0xff]
    %v61 = vld [vmem:[%s1 + $0xa8] sm:$0xff]
    %v62 = vld [vmem:[%s1 + $0xb0] sm:$0xff]
    %v63 = vld [vmem:[%s1 + $0xb8] sm:$0xff]
    %v64 = vld [vmem:[%s1 + $0xc0] sm:$0xff]
    %v65 = vld [vmem:[%s1 + $0xc8] sm:$0xff]
    %v66 = vld [vmem:[%s1 + $0xd0] sm:$0xff]
    %v67 = vld [vmem:[%s1 + $0xd8] sm:$0xff]
    %v68 = vld [vmem:[%s1 + $0xe0] sm:$0xff]
    %v69 = vld [vmem:[%s1 + $0xe8] sm:$0xff]
    %v70 = vld [vmem:[%s4] sm:$0xff]
    %v71 = vld [vmem:[%s4 + $0x8] sm:$0xff]
    %v72 = vld [vmem:[%s4 + $0x10] sm:$0xff]
    %v73 = vld [vmem:[%s4 + $0x18] sm:$0xff]
    %v74 = vld [vmem:[%s4 + $0x20] sm:$0xff]
    %v75 = vld [vmem:[%s4 + $0x28] sm:$0xff]
    %v76 = vld [vmem:[%s4 + $0x30] sm:$0xff]
    %v77 = vld [vmem:[%s4 + $0x38] sm:$0xff]
    %v78 = vld [vmem:[%s4 + $0x40] sm:$0xff]
    %v79 = vld [vmem:[%s4 + $0x48] sm:$0xff]
    %v80 = vld [vmem:[%s4 + $0x50] sm:$0xff]
    %v81 = vld [vmem:[%s4 + $0x58] sm:$0xff]
    %v82 = vld [vmem:[%s4 + $0x60] sm:$0xff]
    %v83 = vld [vmem:[%s4 + $0x68] sm:$0xff]
    %v84 = vld [vmem:[%s4 + $0x70] sm:$0xff]
    %v85 = vld [vmem:[%s4 + $0x78] sm:$0xff]
    %v86 = vld [vmem:[%s4 + $0x80] sm:$0xff]
    %v87 = vld [vmem:[%s4 + $0x88] sm:$0xff]
    %v88 = vld [vmem:[%s4 + $0x90] sm:$0xff]
    %v89 = vld [vmem:[%s4 + $0x98] sm:$0xff]
    %v90 = vld [vmem:[%s4 + $0xa0] sm:$0xff]
    %v91 = vld [vmem:[%s4 + $0xa8] sm:$0xff]
    %v92 = vld [vmem:[%s4 + $0xb0] sm:$0xff]
    %v93 = vld [vmem:[%s4 + $0xb8] sm:$0xff]
    %v94 = vld [vmem:[%s4 + $0xc0] sm:$0xff]
    %v95 = vld [vmem:[%s4 + $0xc8] sm:$0xff]
    %v96 = vld [vmem:[%s4 + $0xd0] sm:$0xff]
    %v97 = vld [vmem:[%s4 + $0xd8] sm:$0xff]
    %v98 = vld [vmem:[%s4 + $0xe0] sm:$0xff]
    %v99 = vld [vmem:[%s4 + $0xe8] sm:$0xff]
    %v100 = vld [vmem:[%s4 + $0xf0] sm:$0xff]
    %v101 = vld [vmem:[%s4 + $0xf8] sm:$0xff]
    %v102 = vld [vmem:[%s4 + $0x100] sm:$0xff]
    %v103 = vld [vmem:[%s4 + $0x108] sm:$0xff]
    %v104 = vld [vmem:[%s4 + $0x110] sm:$0xff]
    %v105 = vld [vmem:[%s4 + $0x118] sm:$0xff]
    %v106 = vld [vmem:[%s4 + $0x120] sm:$0xff]
    %v107 = vld [vmem:[%s4 + $0x128] sm:$0xff]
    %v108 = vld [vmem:[%s4 + $0x130] sm:$0xff]
    %v109 = vld [vmem:[%s4 + $0x138] sm:$0xff]
    %v110 = vld [vmem:[%s4 + $0x140] sm:$0xff]
    %v111 = vld [vmem:[%s4 + $0x148] sm:$0xff]
    %v112 = vld [vmem:[%s4 + $0x150] sm:$0xff]
    %v113 = vld [vmem:[%s4 + $0x158] sm:$0xff]
    %v114 = vld [vmem:[%s4 + $0x160] sm:$0xff]
    %v115 = vld [vmem:[%s4 + $0x168] sm:$0xff]
    %v116 = vld [vmem:[%s4 + $0x170] sm:$0xff]
    %v117 = vld [vmem:[%s4 + $0x178] sm:$0xff]
    %v118 = vld [vmem:[%s4 + $0x180] sm:$0xff]
    %v119 = vld [vmem:[%s4 + $0x188] sm:$0xff]
    %v120 = vld [vmem:[%s4 + $0x190] sm:$0xff]
    %v121 = vld [vmem:[%s4 + $0x198] sm:$0xff]
    %v122 = vld [vmem:[%s4 + $0x1a0] sm:$0xff]
    %v123 = vld [vmem:[%s4 + $0x1a8] sm:$0xff]
    %v124 = vld [vmem:[%s4 + $0x1b0] sm:$0xff]
    %v125 = vld [vmem:[%s4 + $0x1b8] sm:$0xff]
    %v126 = vld [vmem:[%s4 + $0x1c0] sm:$0xff]
    %v127 = vld [vmem:[%s4 + $0x1c8] sm:$0xff]
    %v128 = vld [vmem:[%s4 + $0x1d0] sm:$0xff]
    %v129 = vld [vmem:[%s4 + $0x1d8] sm:$0xff]
    %v130 = vld [vmem:[%s4 + $0x1e0] sm:$0xff]
    %v131 = vld [vmem:[%s4 + $0x1e8] sm:$0xff]
    %v132 = vld [vmem:[%s4 + $0x1f0] sm:$0xff]
    %v133 = vld [vmem:[%s4 + $0x1f8] sm:$0xff]
    %v134 = vld [vmem:[%s4 + $0x200] sm:$0xff]
    %v135 = vld [vmem:[%s4 + $0x208] sm:$0xff]
    %v136 = vld [vmem:[%s4 + $0x210] sm:$0xff]
    %v137 = vld [vmem:[%s4 + $0x218] sm:$0xff]
    %v138 = vld [vmem:[%s4 + $0x220] sm:$0xff]
    %v139 = vld [vmem:[%s4 + $0x228] sm:$0xff]
    %v140 = vld [vmem:[%s4 + $0x230] sm:$0xff]
    %v141 = vld [vmem:[%s4 + $0x238] sm:$0xff]
    %v142 = vld [vmem:[%s4 + $0x240] sm:$0xff]
    %v143 = vld [vmem:[%s4 + $0x248] sm:$0xff]
    %v144 = vld [vmem:[%s4 + $0x250] sm:$0xff]
    %v145 = vld [vmem:[%s4 + $0x258] sm:$0xff]
    %v146 = vld [vmem:[%s4 + $0x260] sm:$0xff]
    %v147 = vld [vmem:[%s4 + $0x268] sm:$0xff]
    %v148 = vld [vmem:[%s4 + $0x270] sm:$0xff]
    %v149 = vld [vmem:[%s4 + $0x278] sm:$0xff]
    %v150 = vld [vmem:[%s4 + $0x280] sm:$0xff]
    %v151 = vld [vmem:[%s4 + $0x288] sm:$0xff]
    %v152 = vld [vmem:[%s4 + $0x290] sm:$0xff]
    %v153 = vld [vmem:[%s4 + $0x298] sm:$0xff]
    %v154 = vld [vmem:[%s4 + $0x2a0] sm:$0xff]
    %v155 = vld [vmem:[%s4 + $0x2a8] sm:$0xff]
    %v156 = vld [vmem:[%s4 + $0x2b0] sm:$0xff]
    %v157 = vld [vmem:[%s4 + $0x2b8] sm:$0xff]
    %v158 = vld [vmem:[%s4 + $0x2c0] sm:$0xff]
    %v159 = vld [vmem:[%s4 + $0x2c8] sm:$0xff]
    %v160 = vld [vmem:[%s4 + $0x2d0] sm:$0xff]
    %v161 = vld [vmem:[%s4 + $0x2d8] sm:$0xff]
    %v162 = vld [vmem:[%s4 + $0x2e0] sm:$0xff]
    %v163 = vld [vmem:[%s4 + $0x2e8] sm:$0xff]
    %v164 = vld [vmem:[%s4 + $0x2f0] sm:$0xff]
    %v165 = vld [vmem:[%s4 + $0x2f8] sm:$0xff]
    %v166 = vld [vmem:[%s6] sm:$0x1]
    %v167 = vlaneseq
    %v168 = vshrl.u32 %v167, 7
    %v169 = vsub.s32 0, %v168
    %v170 = vrot.slane %v166, %v169
    %171 = vmatprep.subr.mxu0 0.0
    %172 = vmatpush1.msra.mxu0 %v85
    %173 = vmatprep.subr.mxu0 0.0
    %174 = vmatpush1.msra.mxu0 %v84
    %175 = vmatprep.subr.mxu0 0.0
    %176 = vmatpush1.msra.mxu0 %v83
    %177 = vmatprep.subr.mxu0 0.0
    %178 = vmatpush1.msra.mxu0 %v82
    %179 = vmatprep.subr.mxu0 0.0
    %180 = vmatpush1.msra.mxu0 %v81
    %181 = vmatprep.subr.mxu0 0.0
    %182 = vmatpush1.msra.mxu0 %v80
    %183 = vmatprep.subr.mxu0 0.0
    %184 = vmatpush1.msra.mxu0 %v79
    %185 = vmatprep.subr.mxu0 0.0
    %186 = vmatpush1.msra.mxu0 %v78
    %187 = vmatprep.subr.mxu0 0.0
    %188 = vmatpush1.msra.mxu0 %v77
    %189 = vmatprep.subr.mxu0 0.0
    %190 = vmatpush1.msra.mxu0 %v76
    %191 = vmatprep.subr.mxu0 0.0
    %192 = vmatpush1.msra.mxu0 %v75
    %193 = vmatprep.subr.mxu0 0.0
    %194 = vmatpush1.msra.mxu0 %v74
    %195 = vmatprep.subr.mxu0 0.0
    %196 = vmatpush1.msra.mxu0 %v73
    %197 = vmatprep.subr.mxu0 0.0
    %198 = vmatpush1.msra.mxu0 %v72
    %199 = vmatprep.subr.mxu0 0.0
    %200 = vmatpush1.msra.mxu0 %v71
    %201 = vmatprep.subr.mxu0 0.0
    %202 = vmatpush1.msra.mxu0 %v70
    %203 = vmatprep.subr.mxu0 0.0
    %204 = vmatpush2.msra.mxu0 %v101
    %205 = vmatprep.subr.mxu0 0.0
    %206 = vmatpush2.msra.mxu0 %v100
    %207 = vmatprep.subr.mxu0 0.0
    %208 = vmatpush2.msra.mxu0 %v99
    %209 = vmatprep.subr.mxu0 0.0
    %210 = vmatpush2.msra.mxu0 %v98
    %211 = vmatprep.subr.mxu0 0.0
    %212 = vmatpush2.msra.mxu0 %v97
    %213 = vmatprep.subr.mxu0 0.0
    %214 = vmatpush2.msra.mxu0 %v96
    %215 = vmatprep.subr.mxu0 0.0
    %216 = vmatpush2.msra.mxu0 %v95
    %217 = vmatprep.subr.mxu0 0.0
    %218 = vmatpush2.msra.mxu0 %v94
    %219 = vmatprep.subr.mxu0 0.0
    %220 = vmatpush2.msra.mxu0 %v93
    %221 = vmatprep.subr.mxu0 0.0
    %222 = vmatpush2.msra.mxu0 %v92
    %223 = vmatprep.subr.mxu0 0.0
    %224 = vmatpush2.msra.mxu0 %v91
    %225 = vmatprep.subr.mxu0 0.0
    %226 = vmatpush2.msra.mxu0 %v90
    %227 = vmatprep.subr.mxu0 0.0
    %228 = vmatpush2.msra.mxu0 %v89
    %229 = vmatprep.subr.mxu0 0.0
    %230 = vmatpush2.msra.mxu0 %v88
    %231 = vmatprep.subr.mxu0 0.0
    %232 = vmatpush2.msra.mxu0 %v87
    %233 = vmatprep.subr.mxu0 0.0
    %234 = vmatpush2.msra.mxu0 %v86
    %235 = vmatprep.mubr.f32.mxu0 %v41
    %236 = vmatmul.mubr.f32.gmra.mxu0 %v40
    %v237 = vpop.f32.mrf.mxu0
    %v238 = vadd.f32 %v170, %v237
    %v239 = vpop.f32.mrf.mxu0
    %240 = vmatprep.mubr.f32.mxu0 %v47
    %241 = vmatmul.mubr.f32.gmra.mxu0 %v46
    %v242 = vpop.f32.mrf.mxu0
    %v243 = vadd.f32 %v170, %v242
    %v244 = vpop.f32.mrf.mxu0
    %245 = vmatprep.mubr.f32.mxu0 %v53
    %246 = vmatmul.mubr.f32.gmra.mxu0 %v52
    %v247 = vpop.f32.mrf.mxu0
    %v248 = vadd.f32 %v170, %v247
    %v249 = vpop.f32.mrf.mxu0
    %250 = vmatprep.mubr.f32.mxu0 %v59
    %251 = vmatmul.mubr.f32.gmra.mxu0 %v58
    %v252 = vpop.f32.mrf.mxu0
    %v253 = vadd.f32 %v170, %v252
    %v254 = vpop.f32.mrf.mxu0
    %255 = vmatprep.mubr.f32.mxu0 %v65
    %256 = vmatmul.mubr.f32.gmra.mxu0 %v64
    %v257 = vpop.f32.mrf.mxu0
    %v258 = vadd.f32 %v170, %v257
    %v259 = vpop.f32.mrf.mxu0
    %260 = vdwg.mxu0
    %261 = vmatprep.subr.mxu0 0.0
    %262 = vmatpush1.msra.mxu0 %v117
    %263 = vmatprep.subr.mxu0 0.0
    %264 = vmatpush1.msra.mxu0 %v116
    %265 = vmatprep.subr.mxu0 0.0
    %266 = vmatpush1.msra.mxu0 %v115
    %267 = vmatprep.subr.mxu0 0.0
    %268 = vmatpush1.msra.mxu0 %v114
    %269 = vmatprep.subr.mxu0 0.0
    %270 = vmatpush1.msra.mxu0 %v113
    %271 = vmatprep.subr.mxu0 0.0
    %272 = vmatpush1.msra.mxu0 %v112
    %273 = vmatprep.subr.mxu0 0.0
    %274 = vmatpush1.msra.mxu0 %v111
    %275 = vmatprep.subr.mxu0 0.0
    %276 = vmatpush1.msra.mxu0 %v110
    %277 = vmatprep.subr.mxu0 0.0
    %278 = vmatpush1.msra.mxu0 %v109
    %279 = vmatprep.subr.mxu0 0.0
    %280 = vmatpush1.msra.mxu0 %v108
    %281 = vmatprep.subr.mxu0 0.0
    %282 = vmatpush1.msra.mxu0 %v107
    %283 = vmatprep.subr.mxu0 0.0
    %284 = vmatpush1.msra.mxu0 %v106
    %285 = vmatprep.subr.mxu0 0.0
    %286 = vmatpush1.msra.mxu0 %v105
    %287 = vmatprep.subr.mxu0 0.0
    %288 = vmatpush1.msra.mxu0 %v104
    %289 = vmatprep.subr.mxu0 0.0
    %290 = vmatpush1.msra.mxu0 %v103
    %291 = vmatprep.subr.mxu0 0.0
    %292 = vmatpush1.msra.mxu0 %v102
    %293 = vmatprep.subr.mxu0 0.0
    %294 = vmatpush2.msra.mxu0 %v133
    %295 = vmatprep.subr.mxu0 0.0
    %296 = vmatpush2.msra.mxu0 %v132
    %297 = vmatprep.subr.mxu0 0.0
    %298 = vmatpush2.msra.mxu0 %v131
    %299 = vmatprep.subr.mxu0 0.0
    %300 = vmatpush2.msra.mxu0 %v130
    %301 = vmatprep.subr.mxu0 0.0
    %302 = vmatpush2.msra.mxu0 %v129
    %303 = vmatprep.subr.mxu0 0.0
    %304 = vmatpush2.msra.mxu0 %v128
    %305 = vmatprep.subr.mxu0 0.0
    %306 = vmatpush2.msra.mxu0 %v127
    %307 = vmatprep.subr.mxu0 0.0
    %308 = vmatpush2.msra.mxu0 %v126
    %309 = vmatprep.subr.mxu0 0.0
    %310 = vmatpush2.msra.mxu0 %v125
    %311 = vmatprep.subr.mxu0 0.0
    %312 = vmatpush2.msra.mxu0 %v124
    %313 = vmatprep.subr.mxu0 0.0
    %314 = vmatpush2.msra.mxu0 %v123
    %315 = vmatprep.subr.mxu0 0.0
    %316 = vmatpush2.msra.mxu0 %v122
    %317 = vmatprep.subr.mxu0 0.0
    %318 = vmatpush2.msra.mxu0 %v121
    %319 = vmatprep.subr.mxu0 0.0
    %320 = vmatpush2.msra.mxu0 %v120
    %321 = vmatprep.subr.mxu0 0.0
    %322 = vmatpush2.msra.mxu0 %v119
    %323 = vmatprep.subr.mxu0 0.0
    %324 = vmatpush2.msra.mxu0 %v118
    %325 = vmatprep.mubr.f32.mxu0 %v43
    %326 = vmatmul.mubr.f32.gmra.mxu0 %v42
    %v327 = vpop.f32.mrf.mxu0
    %v328 = vadd.f32 %v238, %v327
    %v329 = vpop.f32.mrf.mxu0
    %330 = vmatprep.mubr.f32.mxu0 %v49
    %331 = vmatmul.mubr.f32.gmra.mxu0 %v48
    %v332 = vpop.f32.mrf.mxu0
    %v333 = vadd.f32 %v243, %v332
    %v334 = vpop.f32.mrf.mxu0
    %335 = vmatprep.mubr.f32.mxu0 %v55
    %336 = vmatmul.mubr.f32.gmra.mxu0 %v54
    %v337 = vpop.f32.mrf.mxu0
    %v338 = vadd.f32 %v248, %v337
    %v339 = vpop.f32.mrf.mxu0
    %340 = vmatprep.mubr.f32.mxu0 %v61
    %341 = vmatmul.mubr.f32.gmra.mxu0 %v60
    %v342 = vpop.f32.mrf.mxu0
    %v343 = vadd.f32 %v253, %v342
    %v344 = vpop.f32.mrf.mxu0
    %345 = vmatprep.mubr.f32.mxu0 %v67
    %346 = vmatmul.mubr.f32.gmra.mxu0 %v66
    %v347 = vpop.f32.mrf.mxu0
    %v348 = vadd.f32 %v258, %v347
    %v349 = vpop.f32.mrf.mxu0
    %350 = vdwg.mxu0
    %351 = vmatprep.subr.mxu0 0.0
    %352 = vmatpush1.msra.mxu0 %v149
    %353 = vmatprep.subr.mxu0 0.0
    %354 = vmatpush1.msra.mxu0 %v148
    %355 = vmatprep.subr.mxu0 0.0
    %356 = vmatpush1.msra.mxu0 %v147
    %357 = vmatprep.subr.mxu0 0.0
    %358 = vmatpush1.msra.mxu0 %v146
    %359 = vmatprep.subr.mxu0 0.0
    %360 = vmatpush1.msra.mxu0 %v145
    %361 = vmatprep.subr.mxu0 0.0
    %362 = vmatpush1.msra.mxu0 %v144
    %363 = vmatprep.subr.mxu0 0.0
    %364 = vmatpush1.msra.mxu0 %v143
    %365 = vmatprep.subr.mxu0 0.0
    %366 = vmatpush1.msra.mxu0 %v142
    %367 = vmatprep.subr.mxu0 0.0
    %368 = vmatpush1.msra.mxu0 %v141
    %369 = vmatprep.subr.mxu0 0.0
    %370 = vmatpush1.msra.mxu0 %v140
    %371 = vmatprep.subr.mxu0 0.0
    %372 = vmatpush1.msra.mxu0 %v139
    %373 = vmatprep.subr.mxu0 0.0
    %374 = vmatpush1.msra.mxu0 %v138
    %375 = vmatprep.subr.mxu0 0.0
    %376 = vmatpush1.msra.mxu0 %v137
    %377 = vmatprep.subr.mxu0 0.0
    %378 = vmatpush1.msra.mxu0 %v136
    %379 = vmatprep.subr.mxu0 0.0
    %380 = vmatpush1.msra.mxu0 %v135
    %381 = vmatprep.subr.mxu0 0.0
    %382 = vmatpush1.msra.mxu0 %v134
    %383 = vmatprep.subr.mxu0 0.0
    %384 = vmatpush2.msra.mxu0 %v165
    %385 = vmatprep.subr.mxu0 0.0
    %386 = vmatpush2.msra.mxu0 %v164
    %387 = vmatprep.subr.mxu0 0.0
    %388 = vmatpush2.msra.mxu0 %v163
    %389 = vmatprep.subr.mxu0 0.0
    %390 = vmatpush2.msra.mxu0 %v162
    %391 = vmatprep.subr.mxu0 0.0
    %392 = vmatpush2.msra.mxu0 %v161
    %393 = vmatprep.subr.mxu0 0.0
    %394 = vmatpush2.msra.mxu0 %v160
    %395 = vmatprep.subr.mxu0 0.0
    %396 = vmatpush2.msra.mxu0 %v159
    %397 = vmatprep.subr.mxu0 0.0
    %398 = vmatpush2.msra.mxu0 %v158
    %399 = vmatprep.subr.mxu0 0.0
    %400 = vmatpush2.msra.mxu0 %v157
    %401 = vmatprep.subr.mxu0 0.0
    %402 = vmatpush2.msra.mxu0 %v156
    %403 = vmatprep.subr.mxu0 0.0
    %404 = vmatpush2.msra.mxu0 %v155
    %405 = vmatprep.subr.mxu0 0.0
    %406 = vmatpush2.msra.mxu0 %v154
    %407 = vmatprep.subr.mxu0 0.0
    %408 = vmatpush2.msra.mxu0 %v153
    %409 = vmatprep.subr.mxu0 0.0
    %410 = vmatpush2.msra.mxu0 %v152
    %411 = vmatprep.subr.mxu0 0.0
    %412 = vmatpush2.msra.mxu0 %v151
    %413 = vmatprep.subr.mxu0 0.0
    %414 = vmatpush2.msra.mxu0 %v150
    %415 = vmatprep.mubr.f32.mxu0 %v45
    %416 = vmatmul.mubr.f32.gmra.mxu0 %v44
    %v417 = vpop.f32.mrf.mxu0
    %v418 = vadd.f32 %v328, %v417
    %v419 = vpop.f32.mrf.mxu0
    %420 = vmatprep.mubr.f32.mxu0 %v51
    %421 = vmatmul.mubr.f32.gmra.mxu0 %v50
    %v422 = vpop.f32.mrf.mxu0
    %v423 = vadd.f32 %v333, %v422
    %v424 = vpop.f32.mrf.mxu0
    %425 = vmatprep.mubr.f32.mxu0 %v57
    %426 = vmatmul.mubr.f32.gmra.mxu0 %v56
    %v427 = vpop.f32.mrf.mxu0
    %v428 = vadd.f32 %v338, %v427
    %v429 = vpop.f32.mrf.mxu0
    %430 = vmatprep.mubr.f32.mxu0 %v63
    %431 = vmatmul.mubr.f32.gmra.mxu0 %v62
    %v432 = vpop.f32.mrf.mxu0
    %v433 = vadd.f32 %v343, %v432
    %v434 = vpop.f32.mrf.mxu0
    %435 = vmatprep.mubr.f32.mxu0 %v69
    %436 = vmatmul.mubr.f32.gmra.mxu0 %v68
    %v437 = vpop.f32.mrf.mxu0
    %v438 = vadd.f32 %v348, %v437
    %v439 = vpop.f32.mrf.mxu0
    %440 = vdwg.mxu0
    %v441 = vmax.f32 %v418, 0.0
    %v442 = vmax.f32 %v423, 0.0
    %v443 = vmax.f32 %v428, 0.0
    %v444 = vmax.f32 %v433, 0.0
    %v445 = vmax.f32 %v438, 0.0
    %v446 = vld [vmem:[%s6 + $0x8] sm:$0xff]
    %v447 = vld [vmem:[%s6 + $0x10] sm:$0xff]
    %v448 = vld [vmem:[%s6 + $0x18] sm:$0xff]
    %v449 = vld [vmem:[%s6 + $0x20] sm:$0xff]
    %v450 = vld [vmem:[%s6 + $0x28] sm:$0xff]
    %v451 = vld [vmem:[%s6 + $0x30] sm:$0xff]
    %v452 = vld [vmem:[%s6 + $0x38] sm:$0xff]
    %v453 = vld [vmem:[%s6 + $0x40] sm:$0xff]
    %v454 = vld [vmem:[%s6 + $0x48] sm:$0x1]
    %v455 = vlaneseq
    %v456 = vshrl.u32 %v455, 7
    %v457 = vsub.s32 0, %v456
    %v458 = vrot.slane %v454, %v457
    %vm459 = vcmask 523264
    %v461 = vsel %vm459, %v441, 0
    %v464 = vsel %vm459, %v442, 0
    %v467 = vsel %vm459, %v443, 0
    %v470 = vsel %vm459, %v444, 0
    %v473 = vsel %vm459, %v445, 0
    %475 = vmatprep.subr.mxu0 0.0
    %476 = vmatpush1.msra.mxu0 0.0
    %477 = vmatprep.subr.mxu0 0.0
    %478 = vmatpush1.msra.mxu0 0.0
    %479 = vmatprep.subr.mxu0 0.0
    %480 = vmatpush1.msra.mxu0 0.0
    %481 = vmatprep.subr.mxu0 0.0
    %482 = vmatpush1.msra.mxu0 0.0
    %483 = vmatprep.subr.mxu0 0.0
    %484 = vmatpush1.msra.mxu0 0.0
    %485 = vmatprep.subr.mxu0 0.0
    %486 = vmatpush1.msra.mxu0 0.0
    %487 = vmatprep.subr.mxu0 0.0
    %488 = vmatpush1.msra.mxu0 0.0
    %489 = vmatprep.subr.mxu0 0.0
    %490 = vmatpush1.msra.mxu0 0.0
    %491 = vmatprep.subr.mxu0 0.0
    %492 = vmatpush1.msra.mxu0 %v453
    %493 = vmatprep.subr.mxu0 0.0
    %494 = vmatpush1.msra.mxu0 %v452
    %495 = vmatprep.subr.mxu0 0.0
    %496 = vmatpush1.msra.mxu0 %v451
    %497 = vmatprep.subr.mxu0 0.0
    %498 = vmatpush1.msra.mxu0 %v450
    %499 = vmatprep.subr.mxu0 0.0
    %500 = vmatpush1.msra.mxu0 %v449
    %501 = vmatprep.subr.mxu0 0.0
    %502 = vmatpush1.msra.mxu0 %v448
    %503 = vmatprep.subr.mxu0 0.0
    %504 = vmatpush1.msra.mxu0 %v447
    %505 = vmatprep.subr.mxu0 0.0
    %506 = vmatpush1.msra.mxu0 %v446
    %507 = vmatprep.subr.mxu0 0.0
    %508 = vmatpush2.msra.mxu0 0.0
    %509 = vmatprep.subr.mxu0 0.0
    %510 = vmatpush2.msra.mxu0 0.0
    %511 = vmatprep.subr.mxu0 0.0
    %512 = vmatpush2.msra.mxu0 0.0
    %513 = vmatprep.subr.mxu0 0.0
    %514 = vmatpush2.msra.mxu0 0.0
    %515 = vmatprep.subr.mxu0 0.0
    %516 = vmatpush2.msra.mxu0 0.0
    %517 = vmatprep.subr.mxu0 0.0
    %518 = vmatpush2.msra.mxu0 0.0
    %519 = vmatprep.subr.mxu0 0.0
    %520 = vmatpush2.msra.mxu0 0.0
    %521 = vmatprep.subr.mxu0 0.0
    %522 = vmatpush2.msra.mxu0 0.0
    %523 = vmatprep.subr.mxu0 0.0
    %524 = vmatpush2.msra.mxu0 0.0
    %525 = vmatprep.subr.mxu0 0.0
    %526 = vmatpush2.msra.mxu0 0.0
    %527 = vmatprep.subr.mxu0 0.0
    %528 = vmatpush2.msra.mxu0 0.0
    %529 = vmatprep.subr.mxu0 0.0
    %530 = vmatpush2.msra.mxu0 0.0
    %531 = vmatprep.subr.mxu0 0.0
    %532 = vmatpush2.msra.mxu0 0.0
    %533 = vmatprep.subr.mxu0 0.0
    %534 = vmatpush2.msra.mxu0 0.0
    %535 = vmatprep.subr.mxu0 0.0
    %536 = vmatpush2.msra.mxu0 0.0
    %537 = vmatprep.subr.mxu0 0.0
    %538 = vmatpush2.msra.mxu0 0.0
    %539 = vmatprep.mubr.f32.mxu0 0.0
    %540 = vmatmul.mubr.f32.gmra.mxu0 %v461
    %v541 = vpop.f32.mrf.mxu0
    %v542 = vadd.f32 %v458, %v541
    %v543 = vpop.f32.mrf.mxu0
    %544 = vmatprep.mubr.f32.mxu0 0.0
    %545 = vmatmul.mubr.f32.gmra.mxu0 %v464
    %v546 = vpop.f32.mrf.mxu0
    %v547 = vadd.f32 %v458, %v546
    %v548 = vpop.f32.mrf.mxu0
    %549 = vmatprep.mubr.f32.mxu0 0.0
    %550 = vmatmul.mubr.f32.gmra.mxu0 %v467
    %v551 = vpop.f32.mrf.mxu0
    %v552 = vadd.f32 %v458, %v551
    %v553 = vpop.f32.mrf.mxu0
    %554 = vmatprep.mubr.f32.mxu0 0.0
    %555 = vmatmul.mubr.f32.gmra.mxu0 %v470
    %v556 = vpop.f32.mrf.mxu0
    %v557 = vadd.f32 %v458, %v556
    %v558 = vpop.f32.mrf.mxu0
    %559 = vmatprep.mubr.f32.mxu0 0.0
    %560 = vmatmul.mubr.f32.gmra.mxu0 %v473
    %v561 = vpop.f32.mrf.mxu0
    %v562 = vadd.f32 %v458, %v561
    %v563 = vpop.f32.mrf.mxu0
    %564 = vdwg.mxu0
    %v565 = vld [vmem:[%s6 + $0x50] sm:$0xff]
    %v566 = vld [vmem:[%s6 + $0x58] sm:$0xff]
    %v567 = vld [vmem:[%s6 + $0x60] sm:$0xff]
    %v568 = vld [vmem:[%s6 + $0x68] sm:$0xff]
    %v569 = vld [vmem:[%s6 + $0x70] sm:$0xff]
    %v570 = vld [vmem:[%s6 + $0x78] sm:$0xff]
    %v571 = vld [vmem:[%s6 + $0x80] sm:$0xff]
    %v572 = vld [vmem:[%s6 + $0x88] sm:$0xff]
    %v573 = vld [vmem:[%s6 + $0x90] sm:$0x1]
    %v574 = vlaneseq
    %v575 = vshrl.u32 %v574, 7
    %v576 = vsub.s32 0, %v575
    %v577 = vrot.slane %v573, %v576
    %578 = vmatprep.subr.mxu0 0.0
    %579 = vmatpush1.msra.mxu0 0.0
    %580 = vmatprep.subr.mxu0 0.0
    %581 = vmatpush1.msra.mxu0 0.0
    %582 = vmatprep.subr.mxu0 0.0
    %583 = vmatpush1.msra.mxu0 0.0
    %584 = vmatprep.subr.mxu0 0.0
    %585 = vmatpush1.msra.mxu0 0.0
    %586 = vmatprep.subr.mxu0 0.0
    %587 = vmatpush1.msra.mxu0 0.0
    %588 = vmatprep.subr.mxu0 0.0
    %589 = vmatpush1.msra.mxu0 0.0
    %590 = vmatprep.subr.mxu0 0.0
    %591 = vmatpush1.msra.mxu0 0.0
    %592 = vmatprep.subr.mxu0 0.0
    %593 = vmatpush1.msra.mxu0 0.0
    %594 = vmatprep.subr.mxu0 0.0
    %595 = vmatpush1.msra.mxu0 %v572
    %596 = vmatprep.subr.mxu0 0.0
    %597 = vmatpush1.msra.mxu0 %v571
    %598 = vmatprep.subr.mxu0 0.0
    %599 = vmatpush1.msra.mxu0 %v570
    %600 = vmatprep.subr.mxu0 0.0
    %601 = vmatpush1.msra.mxu0 %v569
    %602 = vmatprep.subr.mxu0 0.0
    %603 = vmatpush1.msra.mxu0 %v568
    %604 = vmatprep.subr.mxu0 0.0
    %605 = vmatpush1.msra.mxu0 %v567
    %606 = vmatprep.subr.mxu0 0.0
    %607 = vmatpush1.msra.mxu0 %v566
    %608 = vmatprep.subr.mxu0 0.0
    %609 = vmatpush1.msra.mxu0 %v565
    %610 = vmatprep.subr.mxu0 0.0
    %611 = vmatpush2.msra.mxu0 0.0
    %612 = vmatprep.subr.mxu0 0.0
    %613 = vmatpush2.msra.mxu0 0.0
    %614 = vmatprep.subr.mxu0 0.0
    %615 = vmatpush2.msra.mxu0 0.0
    %616 = vmatprep.subr.mxu0 0.0
    %617 = vmatpush2.msra.mxu0 0.0
    %618 = vmatprep.subr.mxu0 0.0
    %619 = vmatpush2.msra.mxu0 0.0
    %620 = vmatprep.subr.mxu0 0.0
    %621 = vmatpush2.msra.mxu0 0.0
    %622 = vmatprep.subr.mxu0 0.0
    %623 = vmatpush2.msra.mxu0 0.0
    %624 = vmatprep.subr.mxu0 0.0
    %625 = vmatpush2.msra.mxu0 0.0
    %626 = vmatprep.subr.mxu0 0.0
    %627 = vmatpush2.msra.mxu0 0.0
    %628 = vmatprep.subr.mxu0 0.0
    %629 = vmatpush2.msra.mxu0 0.0
    %630 = vmatprep.subr.mxu0 0.0
    %631 = vmatpush2.msra.mxu0 0.0
    %632 = vmatprep.subr.mxu0 0.0
    %633 = vmatpush2.msra.mxu0 0.0
    %634 = vmatprep.subr.mxu0 0.0
    %635 = vmatpush2.msra.mxu0 0.0
    %636 = vmatprep.subr.mxu0 0.0
    %637 = vmatpush2.msra.mxu0 0.0
    %638 = vmatprep.subr.mxu0 0.0
    %639 = vmatpush2.msra.mxu0 0.0
    %640 = vmatprep.subr.mxu0 0.0
    %641 = vmatpush2.msra.mxu0 0.0
    %642 = vmatprep.mubr.f32.mxu0 0.0
    %643 = vmatmul.mubr.f32.gmra.mxu0 %v461
    %v644 = vpop.f32.mrf.mxu0
    %v645 = vadd.f32 %v577, %v644
    %v646 = vpop.f32.mrf.mxu0
    %647 = vmatprep.mubr.f32.mxu0 0.0
    %648 = vmatmul.mubr.f32.gmra.mxu0 %v464
    %v649 = vpop.f32.mrf.mxu0
    %v650 = vadd.f32 %v577, %v649
    %v651 = vpop.f32.mrf.mxu0
    %652 = vmatprep.mubr.f32.mxu0 0.0
    %653 = vmatmul.mubr.f32.gmra.mxu0 %v467
    %v654 = vpop.f32.mrf.mxu0
    %v655 = vadd.f32 %v577, %v654
    %v656 = vpop.f32.mrf.mxu0
    %657 = vmatprep.mubr.f32.mxu0 0.0
    %658 = vmatmul.mubr.f32.gmra.mxu0 %v470
    %v659 = vpop.f32.mrf.mxu0
    %v660 = vadd.f32 %v577, %v659
    %v661 = vpop.f32.mrf.mxu0
    %662 = vmatprep.mubr.f32.mxu0 0.0
    %663 = vmatmul.mubr.f32.gmra.mxu0 %v473
    %v664 = vpop.f32.mrf.mxu0
    %v665 = vadd.f32 %v577, %v664
    %v666 = vpop.f32.mrf.mxu0
    %667 = vdwg.mxu0
    %v668 = vmax.f32 %v645, 0.0
    %v669 = vmax.f32 %v650, 0.0
    %v670 = vmax.f32 %v655, 0.0
    %v671 = vmax.f32 %v660, 0.0
    %v672 = vmax.f32 %v665, 0.0
    %vm673 = vcmp.ne.f32.partialorder %v645, %v645
    %vm674 = vcmp.ne.f32.partialorder %v650, %v650
    %vm675 = vcmp.ne.f32.partialorder %v655, %v655
    %vm676 = vcmp.ne.f32.partialorder %v660, %v660
    %vm677 = vcmp.ne.f32.partialorder %v665, %v665
    %v678 = vadd.f32 %v645, 0.0
    %v679 = vadd.f32 %v650, 0.0
    %v680 = vadd.f32 %v655, 0.0
    %v681 = vadd.f32 %v660, 0.0
    %v682 = vadd.f32 %v665, 0.0
    %v683 = vand.u32 2147483647, %v645
    %v684 = vand.u32 2147483647, %v650
    %v685 = vand.u32 2147483647, %v655
    %v686 = vand.u32 2147483647, %v660
    %v687 = vand.u32 2147483647, %v665
    %v688 = vsub.f32 0.0, %v683
    %v689 = vsub.f32 0.0, %v684
    %v690 = vsub.f32 0.0, %v685
    %v691 = vsub.f32 0.0, %v686
    %v692 = vsub.f32 0.0, %v687
    %v693 = vmul.f32 %v688, 1.442695
    %v694 = vpow.pop %v693
    %v695 = vmul.f32 %v689, 1.442695
    %v696 = vpow.pop %v695
    %v697 = vmul.f32 %v690, 1.442695
    %v698 = vpow.pop %v697
    %v699 = vmul.f32 %v691, 1.442695
    %v700 = vpow.pop %v699
    %v701 = vmul.f32 %v692, 1.442695
    %v702 = vpow.pop %v701
    %v703 = vadd.f32 %v694, 1.0
    %v704 = vlog2.pop %v703
    %v705 = vmul.f32 %v704, 0.6931472
    %v706 = vmul.f32 -0.5, %v694
    %v707 = vadd.f32 %v706, 1.0
    %v708 = vmul.f32 %v707, %v694
    %v709 = vand.u32 2147483647, %v694
    %vm710 = vcmp.lt.f32.partialorder %v709, 0.0004427343
    %v711 = vsel %vm710, %v708, %v705
    %v712 = vadd.f32 %v696, 1.0
    %v713 = vlog2.pop %v712
    %v714 = vmul.f32 %v713, 0.6931472
    %v715 = vmul.f32 -0.5, %v696
    %v716 = vadd.f32 %v715, 1.0
    %v717 = vmul.f32 %v716, %v696
    %v718 = vand.u32 2147483647, %v696
    %vm719 = vcmp.lt.f32.partialorder %v718, 0.0004427343
    %v720 = vsel %vm719, %v717, %v714
    %v721 = vadd.f32 %v698, 1.0
    %v722 = vlog2.pop %v721
    %v723 = vmul.f32 %v722, 0.6931472
    %v724 = vmul.f32 -0.5, %v698
    %v725 = vadd.f32 %v724, 1.0
    %v726 = vmul.f32 %v725, %v698
    %v727 = vand.u32 2147483647, %v698
    %vm728 = vcmp.lt.f32.partialorder %v727, 0.0004427343
    %v729 = vsel %vm728, %v726, %v723
    %v730 = vadd.f32 %v700, 1.0
    %v731 = vlog2.pop %v730
    %v732 = vmul.f32 %v731, 0.6931472
    %v733 = vmul.f32 -0.5, %v700
    %v734 = vadd.f32 %v733, 1.0
    %v735 = vmul.f32 %v734, %v700
    %v736 = vand.u32 2147483647, %v700
    %vm737 = vcmp.lt.f32.partialorder %v736, 0.0004427343
    %v738 = vsel %vm737, %v735, %v732
    %v739 = vadd.f32 %v702, 1.0
    %v740 = vlog2.pop %v739
    %v741 = vmul.f32 %v740, 0.6931472
    %v742 = vmul.f32 -0.5, %v702
    %v743 = vadd.f32 %v742, 1.0
    %v744 = vmul.f32 %v743, %v702
    %v745 = vand.u32 2147483647, %v702
    %vm746 = vcmp.lt.f32.partialorder %v745, 0.0004427343
    %v747 = vsel %vm746, %v744, %v741
    %v748 = vadd.f32 %v668, %v711
    %v749 = vadd.f32 %v669, %v720
    %v750 = vadd.f32 %v670, %v729
    %v751 = vadd.f32 %v671, %v738
    %v752 = vadd.f32 %v672, %v747
    %v753 = vsel %vm673, %v678, %v748
    %v754 = vsel %vm674, %v679, %v749
    %v755 = vsel %vm675, %v680, %v750
    %v756 = vsel %vm676, %v681, %v751
    %v757 = vsel %vm677, %v682, %v752
    %v758 = vadd.f32 %v753, 0.0001
    %v759 = vadd.f32 %v754, 0.0001
    %v760 = vadd.f32 %v755, 0.0001
    %v761 = vadd.f32 %v756, 0.0001
    %v762 = vadd.f32 %v757, 0.0001
    %v763 = vld [vmem:[%s3] sm:$0xff]
    %v764 = vld [vmem:[%s3 + $0x8] sm:$0xff]
    %v765 = vld [vmem:[%s3 + $0x10] sm:$0xff]
    %v766 = vld [vmem:[%s3 + $0x18] sm:$0xff]
    %v767 = vld [vmem:[%s3 + $0x20] sm:$0xff]
    %v768 = vmul.f32 %v758, %v763
    %v769 = vmul.f32 %v759, %v764
    %v770 = vmul.f32 %v760, %v765
    %v771 = vmul.f32 %v761, %v766
    %v772 = vmul.f32 %v762, %v767
    %v773 = vadd.f32 %v542, %v768
    %v774 = vadd.f32 %v547, %v769
    %v775 = vadd.f32 %v552, %v770
    %v776 = vadd.f32 %v557, %v771
    %v777 = vadd.f32 %v562, %v772
    %vm778 = vcmask 31744
    %779 = vst.msk [vmem:[#allocation2] sm:$0xff] %vm778, %v773
    %780 = vst.msk [vmem:[#allocation2 + $0x8] sm:$0xff] %vm778, %v774
    %781 = vst.msk [vmem:[#allocation2 + $0x10] sm:$0xff] %vm778, %v775
    %782 = vst.msk [vmem:[#allocation2 + $0x18] sm:$0xff] %vm778, %v776
    %783 = vst.msk [vmem:[#allocation2 + $0x20] sm:$0xff] %vm778, %v777
    %784 = vst.msk [vmem:[#allocation3] sm:$0xff] %vm778, %v542
    %785 = vst.msk [vmem:[#allocation3 + $0x8] sm:$0xff] %vm778, %v547
    %786 = vst.msk [vmem:[#allocation3 + $0x10] sm:$0xff] %vm778, %v552
    %787 = vst.msk [vmem:[#allocation3 + $0x18] sm:$0xff] %vm778, %v557
    %788 = vst.msk [vmem:[#allocation3 + $0x20] sm:$0xff] %vm778, %v562
    %789 = vst.msk [vmem:[#allocation4] sm:$0xff] %vm778, %v758
    %790 = vst.msk [vmem:[#allocation4 + $0x8] sm:$0xff] %vm778, %v759
    %791 = vst.msk [vmem:[#allocation4 + $0x10] sm:$0xff] %vm778, %v760
    %792 = vst.msk [vmem:[#allocation4 + $0x18] sm:$0xff] %vm778, %v761
    %793 = vst.msk [vmem:[#allocation4 + $0x20] sm:$0xff] %vm778, %v762
    %v794 = vld [vmem:[%s6 + $0x98] sm:$0xf]
    %v795 = vld [vmem:[%s6 + $0xa0] sm:$0x1]
    %v796 = vlaneseq
    %v797 = vshrl.u32 %v796, 7
    %v798 = vsub.s32 0, %v797
    %v799 = vrot.slane %v795, %v798
    %v801 = vsel %vm778, %v774, 0
    %v804 = vsel %vm778, %v775, 0
    %v807 = vsel %vm778, %v776, 0
    %v810 = vsel %vm778, %v777, 0
    %vm812 = vcmask 1043456
    %v814 = vsel %vm812, %v794, 0
    %816 = vmatprep.subr.mxu0 0.0
    %817 = vmatpush1.msra.mxu0 0.0
    %818 = vmatprep.subr.mxu0 0.0
    %819 = vmatpush1.msra.mxu0 0.0
    %820 = vmatprep.subr.mxu0 0.0
    %821 = vmatpush1.msra.mxu0 0.0
    %822 = vmatprep.subr.mxu0 0.0
    %823 = vmatpush1.msra.mxu0 0.0
    %824 = vmatprep.subr.mxu0 0.0
    %825 = vmatpush1.msra.mxu0 0.0
    %826 = vmatprep.subr.mxu0 0.0
    %827 = vmatpush1.msra.mxu0 0.0
    %828 = vmatprep.subr.mxu0 0.0
    %829 = vmatpush1.msra.mxu0 0.0
    %830 = vmatprep.subr.mxu0 0.0
    %831 = vmatpush1.msra.mxu0 0.0
    %832 = vmatprep.subr.mxu0 0.0
    %833 = vmatpush1.msra.mxu0 0.0
    %834 = vmatprep.subr.mxu0 0.0
    %835 = vmatpush1.msra.mxu0 0.0
    %836 = vmatprep.subr.mxu0 0.0
    %837 = vmatpush1.msra.mxu0 0.0
    %838 = vmatprep.subr.mxu0 0.0
    %839 = vmatpush1.msra.mxu0 0.0
    %840 = vmatprep.subr.mxu0 0.0
    %841 = vmatpush1.msra.mxu0 0.0
    %842 = vmatprep.subr.mxu0 0.0
    %843 = vmatpush1.msra.mxu0 0.0
    %844 = vmatprep.subr.mxu0 0.0
    %845 = vmatpush1.msra.mxu0 0.0
    %846 = vmatprep.subr.mxu0 0.0
    %847 = vmatpush1.msra.mxu0 %v814
    %848 = vmatprep.subr.mxu0 0.0
    %849 = vmatpush2.msra.mxu0 0.0
    %850 = vmatprep.subr.mxu0 0.0
    %851 = vmatpush2.msra.mxu0 0.0
    %852 = vmatprep.subr.mxu0 0.0
    %853 = vmatpush2.msra.mxu0 0.0
    %854 = vmatprep.subr.mxu0 0.0
    %855 = vmatpush2.msra.mxu0 0.0
    %856 = vmatprep.subr.mxu0 0.0
    %857 = vmatpush2.msra.mxu0 0.0
    %858 = vmatprep.subr.mxu0 0.0
    %859 = vmatpush2.msra.mxu0 0.0
    %860 = vmatprep.subr.mxu0 0.0
    %861 = vmatpush2.msra.mxu0 0.0
    %862 = vmatprep.subr.mxu0 0.0
    %863 = vmatpush2.msra.mxu0 0.0
    %864 = vmatprep.subr.mxu0 0.0
    %865 = vmatpush2.msra.mxu0 0.0
    %866 = vmatprep.subr.mxu0 0.0
    %867 = vmatpush2.msra.mxu0 0.0
    %868 = vmatprep.subr.mxu0 0.0
    %869 = vmatpush2.msra.mxu0 0.0
    %870 = vmatprep.subr.mxu0 0.0
    %871 = vmatpush2.msra.mxu0 0.0
    %872 = vmatprep.subr.mxu0 0.0
    %873 = vmatpush2.msra.mxu0 0.0
    %874 = vmatprep.subr.mxu0 0.0
    %875 = vmatpush2.msra.mxu0 0.0
    %876 = vmatprep.subr.mxu0 0.0
    %877 = vmatpush2.msra.mxu0 0.0
    %878 = vmatprep.subr.mxu0 0.0
    %879 = vmatpush2.msra.mxu0 0.0
    %880 = vmatprep.mubr.f32.mxu0 0.0
    %881 = vmatmul.mubr.f32.gmra.mxu0 %v801
    %v882 = vpop.f32.mrf.mxu0
    %v883 = vadd.f32 %v799, %v882
    %v884 = vpop.f32.mrf.mxu0
    %885 = vmatprep.mubr.f32.mxu0 0.0
    %886 = vmatmul.mubr.f32.gmra.mxu0 %v804
    %v887 = vpop.f32.mrf.mxu0
    %v888 = vadd.f32 %v799, %v887
    %v889 = vpop.f32.mrf.mxu0
    %890 = vmatprep.mubr.f32.mxu0 0.0
    %891 = vmatmul.mubr.f32.gmra.mxu0 %v807
    %v892 = vpop.f32.mrf.mxu0
    %v893 = vadd.f32 %v799, %v892
    %v894 = vpop.f32.mrf.mxu0
    %895 = vmatprep.mubr.f32.mxu0 0.0
    %896 = vmatmul.mubr.f32.gmra.mxu0 %v810
    %v897 = vpop.f32.mrf.mxu0
    %v898 = vadd.f32 %v799, %v897
    %v899 = vpop.f32.mrf.mxu0
    %900 = vdwg.mxu0
    %v901 = vmax.f32 %v883, 0.0
    %v902 = vmax.f32 %v888, 0.0
    %v903 = vmax.f32 %v893, 0.0
    %v904 = vmax.f32 %v898, 0.0
    %v905 = vld [vmem:[%s5] sm:$0xff]
    %v906 = vld [vmem:[%s5 + $0x8] sm:$0xff]
    %v907 = vld [vmem:[%s5 + $0x10] sm:$0xff]
    %v908 = vld [vmem:[%s5 + $0x18] sm:$0xff]
    %v909 = vld [vmem:[%s5 + $0x20] sm:$0xff]
    %v910 = vld [vmem:[%s5 + $0x28] sm:$0xff]
    %v911 = vld [vmem:[%s5 + $0x30] sm:$0xff]
    %v912 = vld [vmem:[%s5 + $0x38] sm:$0xff]
    %v913 = vld [vmem:[%s5 + $0x40] sm:$0xff]
    %v914 = vld [vmem:[%s5 + $0x48] sm:$0xff]
    %v915 = vld [vmem:[%s5 + $0x50] sm:$0xff]
    %v916 = vld [vmem:[%s5 + $0x58] sm:$0xff]
    %v917 = vld [vmem:[%s5 + $0x60] sm:$0xff]
    %v918 = vld [vmem:[%s5 + $0x68] sm:$0xff]
    %v919 = vld [vmem:[%s5 + $0x70] sm:$0xff]
    %v920 = vld [vmem:[%s5 + $0x78] sm:$0xff]
    %v921 = vld [vmem:[%s5 + $0x80] sm:$0xff]
    %v922 = vld [vmem:[%s5 + $0x88] sm:$0xff]
    %v923 = vld [vmem:[%s5 + $0x90] sm:$0xff]
    %v924 = vld [vmem:[%s5 + $0x98] sm:$0xff]
    %v925 = vld [vmem:[%s5 + $0xa0] sm:$0xff]
    %v926 = vld [vmem:[%s5 + $0xa8] sm:$0xff]
    %v927 = vld [vmem:[%s5 + $0xb0] sm:$0xff]
    %v928 = vld [vmem:[%s5 + $0xb8] sm:$0xff]
    %v929 = vld [vmem:[%s5 + $0xc0] sm:$0xff]
    %v930 = vld [vmem:[%s5 + $0xc8] sm:$0xff]
    %v931 = vld [vmem:[%s5 + $0xd0] sm:$0xff]
    %v932 = vld [vmem:[%s5 + $0xd8] sm:$0xff]
    %v933 = vld [vmem:[%s5 + $0xe0] sm:$0xff]
    %v934 = vld [vmem:[%s5 + $0xe8] sm:$0xff]
    %v935 = vld [vmem:[%s5 + $0xf0] sm:$0xff]
    %v936 = vld [vmem:[%s5 + $0xf8] sm:$0xff]
    %v937 = vld [vmem:[%s5 + $0x100] sm:$0xff]
    %v938 = vld [vmem:[%s5 + $0x108] sm:$0xff]
    %v939 = vld [vmem:[%s5 + $0x110] sm:$0xff]
    %v940 = vld [vmem:[%s5 + $0x118] sm:$0xff]
    %v941 = vld [vmem:[%s5 + $0x120] sm:$0xff]
    %v942 = vld [vmem:[%s5 + $0x128] sm:$0xff]
    %v943 = vld [vmem:[%s5 + $0x130] sm:$0xff]
    %v944 = vld [vmem:[%s5 + $0x138] sm:$0xff]
    %v945 = vld [vmem:[%s5 + $0x140] sm:$0xff]
    %v946 = vld [vmem:[%s5 + $0x148] sm:$0xff]
    %v947 = vld [vmem:[%s5 + $0x150] sm:$0xff]
    %v948 = vld [vmem:[%s5 + $0x158] sm:$0xff]
    %v949 = vld [vmem:[%s5 + $0x160] sm:$0xff]
    %v950 = vld [vmem:[%s5 + $0x168] sm:$0xff]
    %v951 = vld [vmem:[%s5 + $0x170] sm:$0xff]
    %v952 = vld [vmem:[%s5 + $0x178] sm:$0xff]
    %s953 = scalar_lea.vmem %s5, 384
    %v954 = vld [vmem:[%s953] ss:$8 sm:$0xf]
    %v955 = vld [vmem:[%s953] ss:$8 sm:$0x30]
    %v956 = vor.u32 %v954, %v955
    %v958 = vlaneseq
    %v959 = vshrl.u32 %v958, 7
    %v960 = vsub.s32 0, %v959
    %v961 = vrot.slane %v956, %v960
    %v962 = vlaneseq
    %v963 = vshrl.u32 %v962, 7
    %v964 = vsub.s32 1, %v963
    %v965 = vrot.slane %v956, %v964
    %v966 = vlaneseq
    %v967 = vshrl.u32 %v966, 7
    %v968 = vsub.s32 2, %v967
    %v969 = vrot.slane %v956, %v968
    %v970 = vlaneseq
    %v971 = vshrl.u32 %v970, 7
    %v972 = vsub.s32 3, %v971
    %v973 = vrot.slane %v956, %v972
    %v974 = vlaneseq
    %v975 = vshrl.u32 %v974, 7
    %v976 = vsub.s32 4, %v975
    %v977 = vrot.slane %v956, %v976
    %v978 = vlaneseq
    %v979 = vshrl.u32 %v978, 7
    %v980 = vsub.s32 5, %v979
    %v981 = vrot.slane %v956, %v980
    %v989 = vsel %vm459, %v901, 0
    %v992 = vsel %vm459, %v902, 0
    %v995 = vsel %vm459, %v903, 0
    %v998 = vsel %vm459, %v904, 0
    %1000 = vmatprep.subr.mxu0 0.0
    %1001 = vmatpush1.msra.mxu0 0.0
    %1002 = vmatprep.subr.mxu0 0.0
    %1003 = vmatpush1.msra.mxu0 0.0
    %1004 = vmatprep.subr.mxu0 0.0
    %1005 = vmatpush1.msra.mxu0 0.0
    %1006 = vmatprep.subr.mxu0 0.0
    %1007 = vmatpush1.msra.mxu0 0.0
    %1008 = vmatprep.subr.mxu0 0.0
    %1009 = vmatpush1.msra.mxu0 0.0
    %1010 = vmatprep.subr.mxu0 0.0
    %1011 = vmatpush1.msra.mxu0 0.0
    %1012 = vmatprep.subr.mxu0 0.0
    %1013 = vmatpush1.msra.mxu0 0.0
    %1014 = vmatprep.subr.mxu0 0.0
    %1015 = vmatpush1.msra.mxu0 0.0
    %1016 = vmatprep.subr.mxu0 %v948
    %1017 = vmatpush1.msra.mxu0 %v947
    %1018 = vmatprep.subr.mxu0 %v942
    %1019 = vmatpush1.msra.mxu0 %v941
    %1020 = vmatprep.subr.mxu0 %v936
    %1021 = vmatpush1.msra.mxu0 %v935
    %1022 = vmatprep.subr.mxu0 %v930
    %1023 = vmatpush1.msra.mxu0 %v929
    %1024 = vmatprep.subr.mxu0 %v924
    %1025 = vmatpush1.msra.mxu0 %v923
    %1026 = vmatprep.subr.mxu0 %v918
    %1027 = vmatpush1.msra.mxu0 %v917
    %1028 = vmatprep.subr.mxu0 %v912
    %1029 = vmatpush1.msra.mxu0 %v911
    %1030 = vmatprep.subr.mxu0 %v906
    %1031 = vmatpush1.msra.mxu0 %v905
    %1032 = vmatprep.subr.mxu0 0.0
    %1033 = vmatpush2.msra.mxu0 0.0
    %1034 = vmatprep.subr.mxu0 0.0
    %1035 = vmatpush2.msra.mxu0 0.0
    %1036 = vmatprep.subr.mxu0 0.0
    %1037 = vmatpush2.msra.mxu0 0.0
    %1038 = vmatprep.subr.mxu0 0.0
    %1039 = vmatpush2.msra.mxu0 0.0
    %1040 = vmatprep.subr.mxu0 0.0
    %1041 = vmatpush2.msra.mxu0 0.0
    %1042 = vmatprep.subr.mxu0 0.0
    %1043 = vmatpush2.msra.mxu0 0.0
    %1044 = vmatprep.subr.mxu0 0.0
    %1045 = vmatpush2.msra.mxu0 0.0
    %1046 = vmatprep.subr.mxu0 0.0
    %1047 = vmatpush2.msra.mxu0 0.0
    %1048 = vmatprep.subr.mxu0 0.0
    %1049 = vmatpush2.msra.mxu0 0.0
    %1050 = vmatprep.subr.mxu0 0.0
    %1051 = vmatpush2.msra.mxu0 0.0
    %1052 = vmatprep.subr.mxu0 0.0
    %1053 = vmatpush2.msra.mxu0 0.0
    %1054 = vmatprep.subr.mxu0 0.0
    %1055 = vmatpush2.msra.mxu0 0.0
    %1056 = vmatprep.subr.mxu0 0.0
    %1057 = vmatpush2.msra.mxu0 0.0
    %1058 = vmatprep.subr.mxu0 0.0
    %1059 = vmatpush2.msra.mxu0 0.0
    %1060 = vmatprep.subr.mxu0 0.0
    %1061 = vmatpush2.msra.mxu0 0.0
    %1062 = vmatprep.subr.mxu0 0.0
    %1063 = vmatpush2.msra.mxu0 0.0
    %1064 = vmatprep.mubr.f32.mxu0 0.0
    %1065 = vmatmul.mubr.f32.gmra.mxu0 %v989
    %v1066 = vpop.f32.mrf.mxu0
    %v1067 = vadd.f32 %v961, %v1066
    %v1068 = vpop.f32.mrf.mxu0
    %v1069 = vadd.f32 %v965, %v1068
    %1070 = vmatprep.mubr.f32.mxu0 0.0
    %1071 = vmatmul.mubr.f32.gmra.mxu0 %v992
    %v1072 = vpop.f32.mrf.mxu0
    %v1073 = vadd.f32 %v961, %v1072
    %v1074 = vpop.f32.mrf.mxu0
    %v1075 = vadd.f32 %v965, %v1074
    %1076 = vmatprep.mubr.f32.mxu0 0.0
    %1077 = vmatmul.mubr.f32.gmra.mxu0 %v995
    %v1078 = vpop.f32.mrf.mxu0
    %v1079 = vadd.f32 %v961, %v1078
    %v1080 = vpop.f32.mrf.mxu0
    %v1081 = vadd.f32 %v965, %v1080
    %1082 = vmatprep.mubr.f32.mxu0 0.0
    %1083 = vmatmul.mubr.f32.gmra.mxu0 %v998
    %v1084 = vpop.f32.mrf.mxu0
    %v1085 = vadd.f32 %v961, %v1084
    %v1086 = vpop.f32.mrf.mxu0
    %v1087 = vadd.f32 %v965, %v1086
    %1088 = vdwg.mxu0
    %1089 = vmatprep.subr.mxu0 0.0
    %1090 = vmatpush1.msra.mxu0 0.0
    %1091 = vmatprep.subr.mxu0 0.0
    %1092 = vmatpush1.msra.mxu0 0.0
    %1093 = vmatprep.subr.mxu0 0.0
    %1094 = vmatpush1.msra.mxu0 0.0
    %1095 = vmatprep.subr.mxu0 0.0
    %1096 = vmatpush1.msra.mxu0 0.0
    %1097 = vmatprep.subr.mxu0 0.0
    %1098 = vmatpush1.msra.mxu0 0.0
    %1099 = vmatprep.subr.mxu0 0.0
    %1100 = vmatpush1.msra.mxu0 0.0
    %1101 = vmatprep.subr.mxu0 0.0
    %1102 = vmatpush1.msra.mxu0 0.0
    %1103 = vmatprep.subr.mxu0 0.0
    %1104 = vmatpush1.msra.mxu0 0.0
    %1105 = vmatprep.subr.mxu0 %v950
    %1106 = vmatpush1.msra.mxu0 %v949
    %1107 = vmatprep.subr.mxu0 %v944
    %1108 = vmatpush1.msra.mxu0 %v943
    %1109 = vmatprep.subr.mxu0 %v938
    %1110 = vmatpush1.msra.mxu0 %v937
    %1111 = vmatprep.subr.mxu0 %v932
    %1112 = vmatpush1.msra.mxu0 %v931
    %1113 = vmatprep.subr.mxu0 %v926
    %1114 = vmatpush1.msra.mxu0 %v925
    %1115 = vmatprep.subr.mxu0 %v920
    %1116 = vmatpush1.msra.mxu0 %v919
    %1117 = vmatprep.subr.mxu0 %v914
    %1118 = vmatpush1.msra.mxu0 %v913
    %1119 = vmatprep.subr.mxu0 %v908
    %1120 = vmatpush1.msra.mxu0 %v907
    %1121 = vmatprep.subr.mxu0 0.0
    %1122 = vmatpush2.msra.mxu0 0.0
    %1123 = vmatprep.subr.mxu0 0.0
    %1124 = vmatpush2.msra.mxu0 0.0
    %1125 = vmatprep.subr.mxu0 0.0
    %1126 = vmatpush2.msra.mxu0 0.0
    %1127 = vmatprep.subr.mxu0 0.0
    %1128 = vmatpush2.msra.mxu0 0.0
    %1129 = vmatprep.subr.mxu0 0.0
    %1130 = vmatpush2.msra.mxu0 0.0
    %1131 = vmatprep.subr.mxu0 0.0
    %1132 = vmatpush2.msra.mxu0 0.0
    %1133 = vmatprep.subr.mxu0 0.0
    %1134 = vmatpush2.msra.mxu0 0.0
    %1135 = vmatprep.subr.mxu0 0.0
    %1136 = vmatpush2.msra.mxu0 0.0
    %1137 = vmatprep.subr.mxu0 0.0
    %1138 = vmatpush2.msra.mxu0 0.0
    %1139 = vmatprep.subr.mxu0 0.0
    %1140 = vmatpush2.msra.mxu0 0.0
    %1141 = vmatprep.subr.mxu0 0.0
    %1142 = vmatpush2.msra.mxu0 0.0
    %1143 = vmatprep.subr.mxu0 0.0
    %1144 = vmatpush2.msra.mxu0 0.0
    %1145 = vmatprep.subr.mxu0 0.0
    %1146 = vmatpush2.msra.mxu0 0.0
    %1147 = vmatprep.subr.mxu0 0.0
    %1148 = vmatpush2.msra.mxu0 0.0
    %1149 = vmatprep.subr.mxu0 0.0
    %1150 = vmatpush2.msra.mxu0 0.0
    %1151 = vmatprep.subr.mxu0 0.0
    %1152 = vmatpush2.msra.mxu0 0.0
    %1153 = vmatprep.mubr.f32.mxu0 0.0
    %1154 = vmatmul.mubr.f32.gmra.mxu0 %v989
    %v1155 = vpop.f32.mrf.mxu0
    %v1156 = vadd.f32 %v969, %v1155
    %v1157 = vpop.f32.mrf.mxu0
    %v1158 = vadd.f32 %v973, %v1157
    %1159 = vmatprep.mubr.f32.mxu0 0.0
    %1160 = vmatmul.mubr.f32.gmra.mxu0 %v992
    %v1161 = vpop.f32.mrf.mxu0
    %v1162 = vadd.f32 %v969, %v1161
    %v1163 = vpop.f32.mrf.mxu0
    %v1164 = vadd.f32 %v973, %v1163
    %1165 = vmatprep.mubr.f32.mxu0 0.0
    %1166 = vmatmul.mubr.f32.gmra.mxu0 %v995
    %v1167 = vpop.f32.mrf.mxu0
    %v1168 = vadd.f32 %v969, %v1167
    %v1169 = vpop.f32.mrf.mxu0
    %v1170 = vadd.f32 %v973, %v1169
    %1171 = vmatprep.mubr.f32.mxu0 0.0
    %1172 = vmatmul.mubr.f32.gmra.mxu0 %v998
    %v1173 = vpop.f32.mrf.mxu0
    %v1174 = vadd.f32 %v969, %v1173
    %v1175 = vpop.f32.mrf.mxu0
    %v1176 = vadd.f32 %v973, %v1175
    %1177 = vdwg.mxu0
    %1178 = vmatprep.subr.mxu0 0.0
    %1179 = vmatpush1.msra.mxu0 0.0
    %1180 = vmatprep.subr.mxu0 0.0
    %1181 = vmatpush1.msra.mxu0 0.0
    %1182 = vmatprep.subr.mxu0 0.0
    %1183 = vmatpush1.msra.mxu0 0.0
    %1184 = vmatprep.subr.mxu0 0.0
    %1185 = vmatpush1.msra.mxu0 0.0
    %1186 = vmatprep.subr.mxu0 0.0
    %1187 = vmatpush1.msra.mxu0 0.0
    %1188 = vmatprep.subr.mxu0 0.0
    %1189 = vmatpush1.msra.mxu0 0.0
    %1190 = vmatprep.subr.mxu0 0.0
    %1191 = vmatpush1.msra.mxu0 0.0
    %1192 = vmatprep.subr.mxu0 0.0
    %1193 = vmatpush1.msra.mxu0 0.0
    %1194 = vmatprep.subr.mxu0 %v952
    %1195 = vmatpush1.msra.mxu0 %v951
    %1196 = vmatprep.subr.mxu0 %v946
    %1197 = vmatpush1.msra.mxu0 %v945
    %1198 = vmatprep.subr.mxu0 %v940
    %1199 = vmatpush1.msra.mxu0 %v939
    %1200 = vmatprep.subr.mxu0 %v934
    %1201 = vmatpush1.msra.mxu0 %v933
    %1202 = vmatprep.subr.mxu0 %v928
    %1203 = vmatpush1.msra.mxu0 %v927
    %1204 = vmatprep.subr.mxu0 %v922
    %1205 = vmatpush1.msra.mxu0 %v921
    %1206 = vmatprep.subr.mxu0 %v916
    %1207 = vmatpush1.msra.mxu0 %v915
    %1208 = vmatprep.subr.mxu0 %v910
    %1209 = vmatpush1.msra.mxu0 %v909
    %1210 = vmatprep.subr.mxu0 0.0
    %1211 = vmatpush2.msra.mxu0 0.0
    %1212 = vmatprep.subr.mxu0 0.0
    %1213 = vmatpush2.msra.mxu0 0.0
    %1214 = vmatprep.subr.mxu0 0.0
    %1215 = vmatpush2.msra.mxu0 0.0
    %1216 = vmatprep.subr.mxu0 0.0
    %1217 = vmatpush2.msra.mxu0 0.0
    %1218 = vmatprep.subr.mxu0 0.0
    %1219 = vmatpush2.msra.mxu0 0.0
    %1220 = vmatprep.subr.mxu0 0.0
    %1221 = vmatpush2.msra.mxu0 0.0
    %1222 = vmatprep.subr.mxu0 0.0
    %1223 = vmatpush2.msra.mxu0 0.0
    %1224 = vmatprep.subr.mxu0 0.0
    %1225 = vmatpush2.msra.mxu0 0.0
    %1226 = vmatprep.subr.mxu0 0.0
    %1227 = vmatpush2.msra.mxu0 0.0
    %1228 = vmatprep.subr.mxu0 0.0
    %1229 = vmatpush2.msra.mxu0 0.0
    %1230 = vmatprep.subr.mxu0 0.0
    %1231 = vmatpush2.msra.mxu0 0.0
    %1232 = vmatprep.subr.mxu0 0.0
    %1233 = vmatpush2.msra.mxu0 0.0
    %1234 = vmatprep.subr.mxu0 0.0
    %1235 = vmatpush2.msra.mxu0 0.0
    %1236 = vmatprep.subr.mxu0 0.0
    %1237 = vmatpush2.msra.mxu0 0.0
    %1238 = vmatprep.subr.mxu0 0.0
    %1239 = vmatpush2.msra.mxu0 0.0
    %1240 = vmatprep.subr.mxu0 0.0
    %1241 = vmatpush2.msra.mxu0 0.0
    %1242 = vmatprep.mubr.f32.mxu0 0.0
    %1243 = vmatmul.mubr.f32.gmra.mxu0 %v989
    %v1244 = vpop.f32.mrf.mxu0
    %v1245 = vadd.f32 %v977, %v1244
    %v1246 = vpop.f32.mrf.mxu0
    %v1247 = vadd.f32 %v981, %v1246
    %1248 = vmatprep.mubr.f32.mxu0 0.0
    %1249 = vmatmul.mubr.f32.gmra.mxu0 %v992
    %v1250 = vpop.f32.mrf.mxu0
    %v1251 = vadd.f32 %v977, %v1250
    %v1252 = vpop.f32.mrf.mxu0
    %v1253 = vadd.f32 %v981, %v1252
    %1254 = vmatprep.mubr.f32.mxu0 0.0
    %1255 = vmatmul.mubr.f32.gmra.mxu0 %v995
    %v1256 = vpop.f32.mrf.mxu0
    %v1257 = vadd.f32 %v977, %v1256
    %v1258 = vpop.f32.mrf.mxu0
    %v1259 = vadd.f32 %v981, %v1258
    %1260 = vmatprep.mubr.f32.mxu0 0.0
    %1261 = vmatmul.mubr.f32.gmra.mxu0 %v998
    %v1262 = vpop.f32.mrf.mxu0
    %v1263 = vadd.f32 %v977, %v1262
    %v1264 = vpop.f32.mrf.mxu0
    %v1265 = vadd.f32 %v981, %v1264
    %1266 = vdwg.mxu0
    %v1267 = vld [vmem:[%s1 + $0x30] sm:$0xff]
    %v1268 = vld [vmem:[%s1 + $0x38] sm:$0xff]
    %v1269 = vld [vmem:[%s1 + $0x40] sm:$0xff]
    %v1270 = vld [vmem:[%s1 + $0x48] sm:$0xff]
    %v1271 = vld [vmem:[%s1 + $0x50] sm:$0xff]
    %v1272 = vld [vmem:[%s1 + $0x58] sm:$0xff]
    %v1273 = vld [vmem:[%s1 + $0x60] sm:$0xff]
    %v1274 = vld [vmem:[%s1 + $0x68] sm:$0xff]
    %v1275 = vld [vmem:[%s1 + $0x70] sm:$0xff]
    %v1276 = vld [vmem:[%s1 + $0x78] sm:$0xff]
    %v1277 = vld [vmem:[%s1 + $0x80] sm:$0xff]
    %v1278 = vld [vmem:[%s1 + $0x88] sm:$0xff]
    %v1279 = vld [vmem:[%s1 + $0x90] sm:$0xff]
    %v1280 = vld [vmem:[%s1 + $0x98] sm:$0xff]
    %v1281 = vld [vmem:[%s1 + $0xa0] sm:$0xff]
    %v1282 = vld [vmem:[%s1 + $0xa8] sm:$0xff]
    %v1283 = vld [vmem:[%s1 + $0xb0] sm:$0xff]
    %v1284 = vld [vmem:[%s1 + $0xb8] sm:$0xff]
    %v1285 = vld [vmem:[%s1 + $0xc0] sm:$0xff]
    %v1286 = vld [vmem:[%s1 + $0xc8] sm:$0xff]
    %v1287 = vld [vmem:[%s1 + $0xd0] sm:$0xff]
    %v1288 = vld [vmem:[%s1 + $0xd8] sm:$0xff]
    %v1289 = vld [vmem:[%s1 + $0xe0] sm:$0xff]
    %v1290 = vld [vmem:[%s1 + $0xe8] sm:$0xff]
    %v1291 = vsub.f32 %v1267, %v1067
    %v1292 = vsub.f32 %v1268, %v1069
    %v1293 = vsub.f32 %v1269, %v1156
    %v1294 = vsub.f32 %v1270, %v1158
    %v1295 = vsub.f32 %v1271, %v1245
    %v1296 = vsub.f32 %v1272, %v1247
    %v1297 = vsub.f32 %v1273, %v1073
    %v1298 = vsub.f32 %v1274, %v1075
    %v1299 = vsub.f32 %v1275, %v1162
    %v1300 = vsub.f32 %v1276, %v1164
    %v1301 = vsub.f32 %v1277, %v1251
    %v1302 = vsub.f32 %v1278, %v1253
    %v1303 = vsub.f32 %v1279, %v1079
    %v1304 = vsub.f32 %v1280, %v1081
    %v1305 = vsub.f32 %v1281, %v1168
    %v1306 = vsub.f32 %v1282, %v1170
    %v1307 = vsub.f32 %v1283, %v1257
    %v1308 = vsub.f32 %v1284, %v1259
    %v1309 = vsub.f32 %v1285, %v1085
    %v1310 = vsub.f32 %v1286, %v1087
    %v1311 = vsub.f32 %v1287, %v1174
    %v1312 = vsub.f32 %v1288, %v1176
    %v1313 = vsub.f32 %v1289, %v1263
    %v1314 = vsub.f32 %v1290, %v1265
    %v1315 = vmul.f32 %v1291, %v1291
    %v1316 = vmul.f32 %v1292, %v1292
    %v1317 = vmul.f32 %v1293, %v1293
    %v1318 = vmul.f32 %v1294, %v1294
    %v1319 = vmul.f32 %v1295, %v1295
    %v1320 = vmul.f32 %v1296, %v1296
    %v1321 = vmul.f32 %v1297, %v1297
    %v1322 = vmul.f32 %v1298, %v1298
    %v1323 = vmul.f32 %v1299, %v1299
    %v1324 = vmul.f32 %v1300, %v1300
    %v1325 = vmul.f32 %v1301, %v1301
    %v1326 = vmul.f32 %v1302, %v1302
    %v1327 = vmul.f32 %v1303, %v1303
    %v1328 = vmul.f32 %v1304, %v1304
    %v1329 = vmul.f32 %v1305, %v1305
    %v1330 = vmul.f32 %v1306, %v1306
    %v1331 = vmul.f32 %v1307, %v1307
    %v1332 = vmul.f32 %v1308, %v1308
    %v1333 = vmul.f32 %v1309, %v1309
    %v1334 = vmul.f32 %v1310, %v1310
    %v1335 = vmul.f32 %v1311, %v1311
    %v1336 = vmul.f32 %v1312, %v1312
    %v1337 = vmul.f32 %v1313, %v1313
    %v1338 = vmul.f32 %v1314, %v1314
    %v1339 = vadd.f32 %v1315, %v1316
    %v1340 = vadd.f32 %v1339, %v1317
    %v1341 = vadd.f32 %v1340, %v1318
    %v1342 = vadd.f32 %v1341, %v1319
    %v1343 = vadd.f32 %v1342, %v1320
    %1344 = vadd.xlane.f32.xlu0 %v1343
    %v1345 = vpop.xlane.xlu0 %1344
    %v1346 = vadd.f32 %v1321, %v1322
    %v1347 = vadd.f32 %v1346, %v1323
    %v1348 = vadd.f32 %v1347, %v1324
    %v1349 = vadd.f32 %v1348, %v1325
    %v1350 = vadd.f32 %v1349, %v1326
    %1351 = vadd.xlane.f32.xlu0 %v1350
    %v1352 = vpop.xlane.xlu0 %1351
    %v1353 = vadd.f32 %v1327, %v1328
    %v1354 = vadd.f32 %v1353, %v1329
    %v1355 = vadd.f32 %v1354, %v1330
    %v1356 = vadd.f32 %v1355, %v1331
    %v1357 = vadd.f32 %v1356, %v1332
    %1358 = vadd.xlane.f32.xlu0 %v1357
    %v1359 = vpop.xlane.xlu0 %1358
    %v1360 = vadd.f32 %v1333, %v1334
    %v1361 = vadd.f32 %v1360, %v1335
    %v1362 = vadd.f32 %v1361, %v1336
    %v1363 = vadd.f32 %v1362, %v1337
    %v1364 = vadd.f32 %v1363, %v1338
    %1365 = vadd.xlane.f32.xlu0 %v1364
    %v1366 = vpop.xlane.xlu0 %1365
    %v1367 = vadd.f32 %v1345, 1411.4896
    %v1368 = vadd.f32 %v1352, 1411.4896
    %v1369 = vadd.f32 %v1359, 1411.4896
    %v1370 = vadd.f32 %v1366, 1411.4896
    %v1371 = vmul.f32 %v1367, -0.5
    %v1372 = vmul.f32 %v1368, -0.5
    %v1373 = vmul.f32 %v1369, -0.5
    %v1374 = vmul.f32 %v1370, -0.5
    %v1375 = vlaneseq
    %v1376 = vshrl.u32 %v1375, 7
    %v1377 = vadd.s32 %v1376, 8
    %v1378 = vadd.s32 %v1376, 16
    %v1379 = vadd.s32 %v1376, 24
    %v1380 = vand.u32 %v1376, 7
    %v1381 = vand.u32 %v1377, 7
    %v1382 = vand.u32 %v1378, 7
    %v1383 = vand.u32 %v1379, 7
    %vm1384 = vcmp.lt.s32.totalorder %v1380, 2
    %vm1385 = vcmp.lt.s32.totalorder %v1381, 2
    %vm1386 = vcmp.lt.s32.totalorder %v1382, 2
    %vm1387 = vcmp.lt.s32.totalorder %v1383, 2
    %v1388 = vsel %vm1384, %v1371, 0.0
    %v1389 = vsel %vm1385, %v1372, 0.0
    %v1390 = vsel %vm1386, %v1373, 0.0
    %v1391 = vsel %vm1387, %v1374, 0.0
    %vm1392 = vcmask 7168
    %v1393 = vsel %vm1392, %v1388, 0.0
    %v1394 = vsel %vm1392, %v1389, 0.0
    %v1395 = vadd.f32 %v1393, %v1394
    %v1396 = vsel %vm1392, %v1390, 0.0
    %v1397 = vadd.f32 %v1395, %v1396
    %v1398 = vsel %vm1392, %v1391, 0.0
    %v1399 = vadd.f32 %v1397, %v1398
    %1400 = vadd.xlane.f32.xlu0 %v1399
    %v1401 = vpop.xlane.xlu0 %1400
    %v1402 = vrot.slane %v1401, 4
    %v1403 = vadd.f32 %v1401, %v1402
    %v1404 = vrot.slane %v1403, 2
    %v1405 = vadd.f32 %v1403, %v1404
    %v1406 = vrot.slane %v1405, 1
    %v1407 = vadd.f32 %v1405, %v1406
    %s1408 = vtos %v1407
    %v1409 = vld [vmem:[%s6 + $0xa8] sm:$0xf]
    %v1411 = vsel %vm778, %v773, 0
    %v1414 = vsel %vm812, %v1409, 0
    %1416 = vmatprep.subr.mxu0 0.0
    %1417 = vmatpush1.msra.mxu0 0.0
    %1418 = vmatprep.subr.mxu0 0.0
    %1419 = vmatpush1.msra.mxu0 0.0
    %1420 = vmatprep.subr.mxu0 0.0
    %1421 = vmatpush1.msra.mxu0 0.0
    %1422 = vmatprep.subr.mxu0 0.0
    %1423 = vmatpush1.msra.mxu0 0.0
    %1424 = vmatprep.subr.mxu0 0.0
    %1425 = vmatpush1.msra.mxu0 0.0
    %1426 = vmatprep.subr.mxu0 0.0
    %1427 = vmatpush1.msra.mxu0 0.0
    %1428 = vmatprep.subr.mxu0 0.0
    %1429 = vmatpush1.msra.mxu0 0.0
    %1430 = vmatprep.subr.mxu0 0.0
    %1431 = vmatpush1.msra.mxu0 0.0
    %1432 = vmatprep.subr.mxu0 0.0
    %1433 = vmatpush1.msra.mxu0 0.0
    %1434 = vmatprep.subr.mxu0 0.0
    %1435 = vmatpush1.msra.mxu0 0.0
    %1436 = vmatprep.subr.mxu0 0.0
    %1437 = vmatpush1.msra.mxu0 0.0
    %1438 = vmatprep.subr.mxu0 0.0
    %1439 = vmatpush1.msra.mxu0 0.0
    %1440 = vmatprep.subr.mxu0 0.0
    %1441 = vmatpush1.msra.mxu0 0.0
    %1442 = vmatprep.subr.mxu0 0.0
    %1443 = vmatpush1.msra.mxu0 0.0
    %1444 = vmatprep.subr.mxu0 0.0
    %1445 = vmatpush1.msra.mxu0 0.0
    %1446 = vmatprep.subr.mxu0 0.0
    %1447 = vmatpush1.msra.mxu0 %v1414
    %1448 = vmatprep.subr.mxu0 0.0
    %1449 = vmatpush2.msra.mxu0 0.0
    %1450 = vmatprep.subr.mxu0 0.0
    %1451 = vmatpush2.msra.mxu0 0.0
    %1452 = vmatprep.subr.mxu0 0.0
    %1453 = vmatpush2.msra.mxu0 0.0
    %1454 = vmatprep.subr.mxu0 0.0
    %1455 = vmatpush2.msra.mxu0 0.0
    %1456 = vmatprep.subr.mxu0 0.0
    %1457 = vmatpush2.msra.mxu0 0.0
    %1458 = vmatprep.subr.mxu0 0.0
    %1459 = vmatpush2.msra.mxu0 0.0
    %1460 = vmatprep.subr.mxu0 0.0
    %1461 = vmatpush2.msra.mxu0 0.0
    %1462 = vmatprep.subr.mxu0 0.0
    %1463 = vmatpush2.msra.mxu0 0.0
    %1464 = vmatprep.subr.mxu0 0.0
    %1465 = vmatpush2.msra.mxu0 0.0
    %1466 = vmatprep.subr.mxu0 0.0
    %1467 = vmatpush2.msra.mxu0 0.0
    %1468 = vmatprep.subr.mxu0 0.0
    %1469 = vmatpush2.msra.mxu0 0.0
    %1470 = vmatprep.subr.mxu0 0.0
    %1471 = vmatpush2.msra.mxu0 0.0
    %1472 = vmatprep.subr.mxu0 0.0
    %1473 = vmatpush2.msra.mxu0 0.0
    %1474 = vmatprep.subr.mxu0 0.0
    %1475 = vmatpush2.msra.mxu0 0.0
    %1476 = vmatprep.subr.mxu0 0.0
    %1477 = vmatpush2.msra.mxu0 0.0
    %1478 = vmatprep.subr.mxu0 0.0
    %1479 = vmatpush2.msra.mxu0 0.0
    %1480 = vmatprep.mubr.f32.mxu0 0.0
    %1481 = vmatmul.mubr.f32.gmra.mxu0 %v1411
    %v1482 = vpop.f32.mrf.mxu0
    %v1483 = vadd.f32 0.0, %v1482
    %v1484 = vpop.f32.mrf.mxu0
    %1485 = vmatprep.mubr.f32.mxu0 0.0
    %1486 = vmatmul.mubr.f32.gmra.mxu0 %v801
    %v1487 = vpop.f32.mrf.mxu0
    %v1488 = vadd.f32 0.0, %v1487
    %v1489 = vpop.f32.mrf.mxu0
    %1490 = vmatprep.mubr.f32.mxu0 0.0
    %1491 = vmatmul.mubr.f32.gmra.mxu0 %v804
    %v1492 = vpop.f32.mrf.mxu0
    %v1493 = vadd.f32 0.0, %v1492
    %v1494 = vpop.f32.mrf.mxu0
    %1495 = vmatprep.mubr.f32.mxu0 0.0
    %1496 = vmatmul.mubr.f32.gmra.mxu0 %v807
    %v1497 = vpop.f32.mrf.mxu0
    %v1498 = vadd.f32 0.0, %v1497
    %v1499 = vpop.f32.mrf.mxu0
    %1500 = vmatprep.mubr.f32.mxu0 0.0
    %1501 = vmatmul.mubr.f32.gmra.mxu0 %v810
    %v1502 = vpop.f32.mrf.mxu0
    %v1503 = vpop.f32.mrf.mxu0
    %1504 = vdwg.mxu0
    %v1505 = vld [vmem:[%s2] sm:$0xff]
    %v1506 = vld [vmem:[%s2 + $0x8] sm:$0xff]
    %v1507 = vld [vmem:[%s2 + $0x10] sm:$0xff]
    %v1508 = vld [vmem:[%s2 + $0x18] sm:$0xff]
    %v1509 = vld [vmem:[%s2 + $0x20] sm:$0xff]
    %v1510 = vld [vmem:[%s6 + $0xb8] sm:$0xf]
    %v1512 = vsel %vm778, %v1505, 0
    %v1515 = vsel %vm778, %v1506, 0
    %v1518 = vsel %vm778, %v1507, 0
    %v1521 = vsel %vm778, %v1508, 0
    %v1524 = vsel %vm778, %v1509, 0
    %v1527 = vsel %vm812, %v1510, 0
    %1529 = vmatprep.subr.mxu0 0.0
    %1530 = vmatpush1.msra.mxu0 0.0
    %1531 = vmatprep.subr.mxu0 0.0
    %1532 = vmatpush1.msra.mxu0 0.0
    %1533 = vmatprep.subr.mxu0 0.0
    %1534 = vmatpush1.msra.mxu0 0.0
    %1535 = vmatprep.subr.mxu0 0.0
    %1536 = vmatpush1.msra.mxu0 0.0
    %1537 = vmatprep.subr.mxu0 0.0
    %1538 = vmatpush1.msra.mxu0 0.0
    %1539 = vmatprep.subr.mxu0 0.0
    %1540 = vmatpush1.msra.mxu0 0.0
    %1541 = vmatprep.subr.mxu0 0.0
    %1542 = vmatpush1.msra.mxu0 0.0
    %1543 = vmatprep.subr.mxu0 0.0
    %1544 = vmatpush1.msra.mxu0 0.0
    %1545 = vmatprep.subr.mxu0 0.0
    %1546 = vmatpush1.msra.mxu0 0.0
    %1547 = vmatprep.subr.mxu0 0.0
    %1548 = vmatpush1.msra.mxu0 0.0
    %1549 = vmatprep.subr.mxu0 0.0
    %1550 = vmatpush1.msra.mxu0 0.0
    %1551 = vmatprep.subr.mxu0 0.0
    %1552 = vmatpush1.msra.mxu0 0.0
    %1553 = vmatprep.subr.mxu0 0.0
    %1554 = vmatpush1.msra.mxu0 0.0
    %1555 = vmatprep.subr.mxu0 0.0
    %1556 = vmatpush1.msra.mxu0 0.0
    %1557 = vmatprep.subr.mxu0 0.0
    %1558 = vmatpush1.msra.mxu0 0.0
    %1559 = vmatprep.subr.mxu0 0.0
    %1560 = vmatpush1.msra.mxu0 %v1527
    %1561 = vmatprep.subr.mxu0 0.0
    %1562 = vmatpush2.msra.mxu0 0.0
    %1563 = vmatprep.subr.mxu0 0.0
    %1564 = vmatpush2.msra.mxu0 0.0
    %1565 = vmatprep.subr.mxu0 0.0
    %1566 = vmatpush2.msra.mxu0 0.0
    %1567 = vmatprep.subr.mxu0 0.0
    %1568 = vmatpush2.msra.mxu0 0.0
    %1569 = vmatprep.subr.mxu0 0.0
    %1570 = vmatpush2.msra.mxu0 0.0
    %1571 = vmatprep.subr.mxu0 0.0
    %1572 = vmatpush2.msra.mxu0 0.0
    %1573 = vmatprep.subr.mxu0 0.0
    %1574 = vmatpush2.msra.mxu0 0.0
    %1575 = vmatprep.subr.mxu0 0.0
    %1576 = vmatpush2.msra.mxu0 0.0
    %1577 = vmatprep.subr.mxu0 0.0
    %1578 = vmatpush2.msra.mxu0 0.0
    %1579 = vmatprep.subr.mxu0 0.0
    %1580 = vmatpush2.msra.mxu0 0.0
    %1581 = vmatprep.subr.mxu0 0.0
    %1582 = vmatpush2.msra.mxu0 0.0
    %1583 = vmatprep.subr.mxu0 0.0
    %1584 = vmatpush2.msra.mxu0 0.0
    %1585 = vmatprep.subr.mxu0 0.0
    %1586 = vmatpush2.msra.mxu0 0.0
    %1587 = vmatprep.subr.mxu0 0.0
    %1588 = vmatpush2.msra.mxu0 0.0
    %1589 = vmatprep.subr.mxu0 0.0
    %1590 = vmatpush2.msra.mxu0 0.0
    %1591 = vmatprep.subr.mxu0 0.0
    %1592 = vmatpush2.msra.mxu0 0.0
    %1593 = vmatprep.mubr.f32.mxu0 0.0
    %1594 = vmatmul.mubr.f32.gmra.mxu0 %v1512
    %v1595 = vpop.f32.mrf.mxu0
    %v1596 = vpop.f32.mrf.mxu0
    %1597 = vmatprep.mubr.f32.mxu0 0.0
    %1598 = vmatmul.mubr.f32.gmra.mxu0 %v1515
    %v1599 = vpop.f32.mrf.mxu0
    %v1600 = vadd.f32 0.0, %v1599
    %v1601 = vpop.f32.mrf.mxu0
    %1602 = vmatprep.mubr.f32.mxu0 0.0
    %1603 = vmatmul.mubr.f32.gmra.mxu0 %v1518
    %v1604 = vpop.f32.mrf.mxu0
    %v1605 = vadd.f32 0.0, %v1604
    %v1606 = vpop.f32.mrf.mxu0
    %1607 = vmatprep.mubr.f32.mxu0 0.0
    %1608 = vmatmul.mubr.f32.gmra.mxu0 %v1521
    %v1609 = vpop.f32.mrf.mxu0
    %v1610 = vadd.f32 0.0, %v1609
    %v1611 = vpop.f32.mrf.mxu0
    %1612 = vmatprep.mubr.f32.mxu0 0.0
    %1613 = vmatmul.mubr.f32.gmra.mxu0 %v1524
    %v1614 = vpop.f32.mrf.mxu0
    %v1615 = vadd.f32 0.0, %v1614
    %v1616 = vpop.f32.mrf.mxu0
    %1617 = vdwg.mxu0
    %v1618 = vadd.f32 %v1483, %v1600
    %v1619 = vadd.f32 %v1488, %v1605
    %v1620 = vadd.f32 %v1493, %v1610
    %v1621 = vadd.f32 %v1498, %v1615
    %v1622 = vld [vmem:[%s6 + $0xc0] sm:$0x1]
    %v1623 = vlaneseq
    %v1624 = vshrl.u32 %v1623, 7
    %v1625 = vsub.s32 0, %v1624
    %v1626 = vrot.slane %v1622, %v1625
    %v1627 = vadd.f32 %v1618, %v1626
    %v1628 = vadd.f32 %v1619, %v1626
    %v1629 = vadd.f32 %v1620, %v1626
    %v1630 = vadd.f32 %v1621, %v1626
    %vm1631 = vcmask 261120
    %1632 = vst.msk [vmem:[#allocation5] sm:$0xff] %vm1631, %v1627
    %1633 = vst.msk [vmem:[#allocation5 + $0x8] sm:$0xff] %vm1631, %v1628
    %1634 = vst.msk [vmem:[#allocation5 + $0x10] sm:$0xff] %vm1631, %v1629
    %1635 = vst.msk [vmem:[#allocation5 + $0x18] sm:$0xff] %vm1631, %v1630
    %v1636 = vld [vmem:[%s6 + $0xb0] sm:$0xf]
    %v1637 = vld [vmem:[%s6 + $0xc8] sm:$0xff]
    %v1638 = vld [vmem:[%s6 + $0xd0] sm:$0xff]
    %v1639 = vld [vmem:[%s6 + $0xd8] sm:$0xff]
    %v1640 = vld [vmem:[%s6 + $0xe0] sm:$0xff]
    %v1641 = vld [vmem:[%s6 + $0xe8] sm:$0x1]
    %v1642 = vld [vmem:[%s6 + $0xf0] sm:$0xff]
    %v1643 = vld [vmem:[%s6 + $0xf8] sm:$0xff]
    %v1644 = vld [vmem:[%s6 + $0x100] sm:$0xff]
    %v1645 = vld [vmem:[%s6 + $0x108] sm:$0xff]
    %v1646 = vld [vmem:[%s6 + $0x110] sm:$0x1]
    %v1647 = vld [vmem:[%s6 + $0x118] sm:$0xff]
    %v1648 = vld [vmem:[%s6 + $0x120] sm:$0xff]
    %v1649 = vld [vmem:[%s6 + $0x128] sm:$0xff]
    %v1650 = vld [vmem:[%s6 + $0x130] sm:$0xff]
    %v1651 = vld [vmem:[%s6 + $0x138] sm:$0x1]
    %vm1652 = vcmp.lt.s32.totalorder %v1376, 2
    %s1653 = sld [smem:[#allocation6 + $0x1]]
    %v1654 = vld [vmem:[#allocation2] sm:$0xff]
    %v1655 = vld [vmem:[#allocation3 + $0x8] sm:$0xff]
    %v1656 = vld [vmem:[#allocation4 + $0x8] sm:$0xff]
    %v1657 = vld [vmem:[%s2 + $0x8] sm:$0xff]
    %v1658 = vld [vmem:[#allocation5] sm:$0xff]
    %v1659 = vlaneseq
    %v1660 = vshrl.u32 %v1659, 7
    %v1661 = vsub.s32 0, %v1660
    %v1662 = vrot.slane %v1636, %v1661
    %v1663 = vmul.f32 %v1662, 0.0
    %v1664 = vadd.f32 %v1658, %v1663
    %v1665 = vlaneseq
    %v1666 = vshrl.u32 %v1665, 7
    %v1667 = vsub.s32 1, %v1666
    %v1668 = vrot.slane %v1636, %v1667
    %v1669 = vmul.f32 %v1668, 0.0
    %v1670 = vadd.f32 %v1664, %v1669
    %v1671 = vlaneseq
    %v1672 = vshrl.u32 %v1671, 7
    %v1673 = vsub.s32 2, %v1672
    %v1674 = vrot.slane %v1636, %v1673
    %v1675 = vmul.f32 %v1674, 0.0
    %v1676 = vadd.f32 %v1670, %v1675
    %v1677 = vlaneseq
    %v1678 = vshrl.u32 %v1677, 7
    %v1679 = vsub.s32 3, %v1678
    %v1680 = vrot.slane %v1636, %v1679
    %v1681 = vmul.f32 %v1680, 0.0
    %v1682 = vadd.f32 %v1676, %v1681
    %v1683 = vmax.f32 %v1682, 0.0
    %v1684 = vlaneseq
    %v1685 = vshrl.u32 %v1684, 7
    %v1686 = vsub.s32 0, %v1685
    %v1687 = vrot.slane %v1641, %v1686
    %v1689 = vsel %vm1631, %v1683, 0
    %1691 = vmatprep.subr.mxu0 0.0
    %1692 = vmatpush1.msra.mxu0 0.0
    %1693 = vmatprep.subr.mxu0 0.0
    %1694 = vmatpush1.msra.mxu0 0.0
    %1695 = vmatprep.subr.mxu0 0.0
    %1696 = vmatpush1.msra.mxu0 0.0
    %1697 = vmatprep.subr.mxu0 0.0
    %1698 = vmatpush1.msra.mxu0 0.0
    %1699 = vmatprep.subr.mxu0 0.0
    %1700 = vmatpush1.msra.mxu0 0.0
    %1701 = vmatprep.subr.mxu0 0.0
    %1702 = vmatpush1.msra.mxu0 0.0
    %1703 = vmatprep.subr.mxu0 0.0
    %1704 = vmatpush1.msra.mxu0 0.0
    %1705 = vmatprep.subr.mxu0 0.0
    %1706 = vmatpush1.msra.mxu0 0.0
    %1707 = vmatprep.subr.mxu0 0.0
    %1708 = vmatpush1.msra.mxu0 0.0
    %1709 = vmatprep.subr.mxu0 0.0
    %1710 = vmatpush1.msra.mxu0 0.0
    %1711 = vmatprep.subr.mxu0 0.0
    %1712 = vmatpush1.msra.mxu0 0.0
    %1713 = vmatprep.subr.mxu0 0.0
    %1714 = vmatpush1.msra.mxu0 0.0
    %1715 = vmatprep.subr.mxu0 0.0
    %1716 = vmatpush1.msra.mxu0 %v1640
    %1717 = vmatprep.subr.mxu0 0.0
    %1718 = vmatpush1.msra.mxu0 %v1639
    %1719 = vmatprep.subr.mxu0 0.0
    %1720 = vmatpush1.msra.mxu0 %v1638
    %1721 = vmatprep.subr.mxu0 0.0
    %1722 = vmatpush1.msra.mxu0 %v1637
    %1723 = vmatprep.subr.mxu0 0.0
    %1724 = vmatpush2.msra.mxu0 0.0
    %1725 = vmatprep.subr.mxu0 0.0
    %1726 = vmatpush2.msra.mxu0 0.0
    %1727 = vmatprep.subr.mxu0 0.0
    %1728 = vmatpush2.msra.mxu0 0.0
    %1729 = vmatprep.subr.mxu0 0.0
    %1730 = vmatpush2.msra.mxu0 0.0
    %1731 = vmatprep.subr.mxu0 0.0
    %1732 = vmatpush2.msra.mxu0 0.0
    %1733 = vmatprep.subr.mxu0 0.0
    %1734 = vmatpush2.msra.mxu0 0.0
    %1735 = vmatprep.subr.mxu0 0.0
    %1736 = vmatpush2.msra.mxu0 0.0
    %1737 = vmatprep.subr.mxu0 0.0
    %1738 = vmatpush2.msra.mxu0 0.0
    %1739 = vmatprep.subr.mxu0 0.0
    %1740 = vmatpush2.msra.mxu0 0.0
    %1741 = vmatprep.subr.mxu0 0.0
    %1742 = vmatpush2.msra.mxu0 0.0
    %1743 = vmatprep.subr.mxu0 0.0
    %1744 = vmatpush2.msra.mxu0 0.0
    %1745 = vmatprep.subr.mxu0 0.0
    %1746 = vmatpush2.msra.mxu0 0.0
    %1747 = vmatprep.subr.mxu0 0.0
    %1748 = vmatpush2.msra.mxu0 0.0
    %1749 = vmatprep.subr.mxu0 0.0
    %1750 = vmatpush2.msra.mxu0 0.0
    %1751 = vmatprep.subr.mxu0 0.0
    %1752 = vmatpush2.msra.mxu0 0.0
    %1753 = vmatprep.subr.mxu0 0.0
    %1754 = vmatpush2.msra.mxu0 0.0
    %1755 = vmatprep.mubr.f32.mxu0 0.0
    %1756 = vmatmul.mubr.f32.gmra.mxu0 %v1689
    %v1757 = vpop.f32.mrf.mxu0
    %v1758 = vadd.f32 %v1687, %v1757
    %v1759 = vpop.f32.mrf.mxu0
    %1760 = vdwg.mxu0
    %v1761 = vlaneseq
    %v1762 = vshrl.u32 %v1761, 7
    %v1763 = vsub.s32 0, %v1762
    %v1764 = vrot.slane %v1646, %v1763
    %1765 = vmatprep.subr.mxu0 0.0
    %1766 = vmatpush1.msra.mxu0 0.0
    %1767 = vmatprep.subr.mxu0 0.0
    %1768 = vmatpush1.msra.mxu0 0.0
    %1769 = vmatprep.subr.mxu0 0.0
    %1770 = vmatpush1.msra.mxu0 0.0
    %1771 = vmatprep.subr.mxu0 0.0
    %1772 = vmatpush1.msra.mxu0 0.0
    %1773 = vmatprep.subr.mxu0 0.0
    %1774 = vmatpush1.msra.mxu0 0.0
    %1775 = vmatprep.subr.mxu0 0.0
    %1776 = vmatpush1.msra.mxu0 0.0
    %1777 = vmatprep.subr.mxu0 0.0
    %1778 = vmatpush1.msra.mxu0 0.0
    %1779 = vmatprep.subr.mxu0 0.0
    %1780 = vmatpush1.msra.mxu0 0.0
    %1781 = vmatprep.subr.mxu0 0.0
    %1782 = vmatpush1.msra.mxu0 0.0
    %1783 = vmatprep.subr.mxu0 0.0
    %1784 = vmatpush1.msra.mxu0 0.0
    %1785 = vmatprep.subr.mxu0 0.0
    %1786 = vmatpush1.msra.mxu0 0.0
    %1787 = vmatprep.subr.mxu0 0.0
    %1788 = vmatpush1.msra.mxu0 0.0
    %1789 = vmatprep.subr.mxu0 0.0
    %1790 = vmatpush1.msra.mxu0 %v1645
    %1791 = vmatprep.subr.mxu0 0.0
    %1792 = vmatpush1.msra.mxu0 %v1644
    %1793 = vmatprep.subr.mxu0 0.0
    %1794 = vmatpush1.msra.mxu0 %v1643
    %1795 = vmatprep.subr.mxu0 0.0
    %1796 = vmatpush1.msra.mxu0 %v1642
    %1797 = vmatprep.subr.mxu0 0.0
    %1798 = vmatpush2.msra.mxu0 0.0
    %1799 = vmatprep.subr.mxu0 0.0
    %1800 = vmatpush2.msra.mxu0 0.0
    %1801 = vmatprep.subr.mxu0 0.0
    %1802 = vmatpush2.msra.mxu0 0.0
    %1803 = vmatprep.subr.mxu0 0.0
    %1804 = vmatpush2.msra.mxu0 0.0
    %1805 = vmatprep.subr.mxu0 0.0
    %1806 = vmatpush2.msra.mxu0 0.0
    %1807 = vmatprep.subr.mxu0 0.0
    %1808 = vmatpush2.msra.mxu0 0.0
    %1809 = vmatprep.subr.mxu0 0.0
    %1810 = vmatpush2.msra.mxu0 0.0
    %1811 = vmatprep.subr.mxu0 0.0
    %1812 = vmatpush2.msra.mxu0 0.0
    %1813 = vmatprep.subr.mxu0 0.0
    %1814 = vmatpush2.msra.mxu0 0.0
    %1815 = vmatprep.subr.mxu0 0.0
    %1816 = vmatpush2.msra.mxu0 0.0
    %1817 = vmatprep.subr.mxu0 0.0
    %1818 = vmatpush2.msra.mxu0 0.0
    %1819 = vmatprep.subr.mxu0 0.0
    %1820 = vmatpush2.msra.mxu0 0.0
    %1821 = vmatprep.subr.mxu0 0.0
    %1822 = vmatpush2.msra.mxu0 0.0
    %1823 = vmatprep.subr.mxu0 0.0
    %1824 = vmatpush2.msra.mxu0 0.0
    %1825 = vmatprep.subr.mxu0 0.0
    %1826 = vmatpush2.msra.mxu0 0.0
    %1827 = vmatprep.subr.mxu0 0.0
    %1828 = vmatpush2.msra.mxu0 0.0
    %1829 = vmatprep.mubr.f32.mxu0 0.0
    %1830 = vmatmul.mubr.f32.gmra.mxu0 %v1689
    %v1831 = vpop.f32.mrf.mxu0
    %v1832 = vadd.f32 %v1764, %v1831
    %v1833 = vpop.f32.mrf.mxu0
    %1834 = vdwg.mxu0
    %v1835 = vmax.f32 %v1832, 0.0
    %vm1836 = vcmp.ne.f32.partialorder %v1832, %v1832
    %v1837 = vadd.f32 %v1832, 0.0
    %v1838 = vand.u32 2147483647, %v1832
    %v1839 = vsub.f32 0.0, %v1838
    %v1840 = vmul.f32 %v1839, 1.442695
    %v1841 = vpow.pop %v1840
    %v1842 = vadd.f32 %v1841, 1.0
    %v1843 = vlog2.pop %v1842
    %v1844 = vmul.f32 %v1843, 0.6931472
    %v1845 = vmul.f32 -0.5, %v1841
    %v1846 = vadd.f32 %v1845, 1.0
    %v1847 = vmul.f32 %v1846, %v1841
    %v1848 = vand.u32 2147483647, %v1841
    %vm1849 = vcmp.lt.f32.partialorder %v1848, 0.0004427343
    %v1850 = vsel %vm1849, %v1847, %v1844
    %v1851 = vadd.f32 %v1835, %v1850
    %v1852 = vsel %vm1836, %v1837, %v1851
    %v1853 = vadd.f32 %v1852, 0.0001
    %v1854 = vlog2.pop %v1853
    %v1855 = vmul.f32 %v1854, 0.6931472
    %v1856 = vsub.f32 0.0, %v1855
    %v1857 = vlaneseq
    %v1858 = vshrl.u32 %v1857, 7
    %v1859 = vsub.s32 0, %v1858
    %v1860 = vrot.slane %v1651, %v1859
    %1861 = vmatprep.subr.mxu0 0.0
    %1862 = vmatpush1.msra.mxu0 0.0
    %1863 = vmatprep.subr.mxu0 0.0
    %1864 = vmatpush1.msra.mxu0 0.0
    %1865 = vmatprep.subr.mxu0 0.0
    %1866 = vmatpush1.msra.mxu0 0.0
    %1867 = vmatprep.subr.mxu0 0.0
    %1868 = vmatpush1.msra.mxu0 0.0
    %1869 = vmatprep.subr.mxu0 0.0
    %1870 = vmatpush1.msra.mxu0 0.0
    %1871 = vmatprep.subr.mxu0 0.0
    %1872 = vmatpush1.msra.mxu0 0.0
    %1873 = vmatprep.subr.mxu0 0.0
    %1874 = vmatpush1.msra.mxu0 0.0
    %1875 = vmatprep.subr.mxu0 0.0
    %1876 = vmatpush1.msra.mxu0 0.0
    %1877 = vmatprep.subr.mxu0 0.0
    %1878 = vmatpush1.msra.mxu0 0.0
    %1879 = vmatprep.subr.mxu0 0.0
    %1880 = vmatpush1.msra.mxu0 0.0
    %1881 = vmatprep.subr.mxu0 0.0
    %1882 = vmatpush1.msra.mxu0 0.0
    %1883 = vmatprep.subr.mxu0 0.0
    %1884 = vmatpush1.msra.mxu0 0.0
    %1885 = vmatprep.subr.mxu0 0.0
    %1886 = vmatpush1.msra.mxu0 %v1650
    %1887 = vmatprep.subr.mxu0 0.0
    %1888 = vmatpush1.msra.mxu0 %v1649
    %1889 = vmatprep.subr.mxu0 0.0
    %1890 = vmatpush1.msra.mxu0 %v1648
    %1891 = vmatprep.subr.mxu0 0.0
    %1892 = vmatpush1.msra.mxu0 %v1647
    %1893 = vmatprep.subr.mxu0 0.0
    %1894 = vmatpush2.msra.mxu0 0.0
    %1895 = vmatprep.subr.mxu0 0.0
    %1896 = vmatpush2.msra.mxu0 0.0
    %1897 = vmatprep.subr.mxu0 0.0
    %1898 = vmatpush2.msra.mxu0 0.0
    %1899 = vmatprep.subr.mxu0 0.0
    %1900 = vmatpush2.msra.mxu0 0.0
    %1901 = vmatprep.subr.mxu0 0.0
    %1902 = vmatpush2.msra.mxu0 0.0
    %1903 = vmatprep.subr.mxu0 0.0
    %1904 = vmatpush2.msra.mxu0 0.0
    %1905 = vmatprep.subr.mxu0 0.0
    %1906 = vmatpush2.msra.mxu0 0.0
    %1907 = vmatprep.subr.mxu0 0.0
    %1908 = vmatpush2.msra.mxu0 0.0
    %1909 = vmatprep.subr.mxu0 0.0
    %1910 = vmatpush2.msra.mxu0 0.0
    %1911 = vmatprep.subr.mxu0 0.0
    %1912 = vmatpush2.msra.mxu0 0.0
    %1913 = vmatprep.subr.mxu0 0.0
    %1914 = vmatpush2.msra.mxu0 0.0
    %1915 = vmatprep.subr.mxu0 0.0
    %1916 = vmatpush2.msra.mxu0 0.0
    %1917 = vmatprep.subr.mxu0 0.0
    %1918 = vmatpush2.msra.mxu0 0.0
    %1919 = vmatprep.subr.mxu0 0.0
    %1920 = vmatpush2.msra.mxu0 0.0
    %1921 = vmatprep.subr.mxu0 0.0
    %1922 = vmatpush2.msra.mxu0 0.0
    %1923 = vmatprep.subr.mxu0 0.0
    %1924 = vmatpush2.msra.mxu0 0.0
    %1925 = vmatprep.mubr.f32.mxu0 0.0
    %1926 = vmatmul.mubr.f32.gmra.mxu0 %v1689
    %v1927 = vpop.f32.mrf.mxu0
    %v1928 = vadd.f32 %v1860, %v1927
    %v1929 = vpop.f32.mrf.mxu0
    %1930 = vdwg.mxu0
    %v1931 = vmax.f32 %v1928, 0.0
    %vm1932 = vcmp.ne.f32.partialorder %v1928, %v1928
    %v1933 = vadd.f32 %v1928, 0.0
    %v1934 = vand.u32 2147483647, %v1928
    %v1935 = vsub.f32 0.0, %v1934
    %v1936 = vmul.f32 %v1935, 1.442695
    %v1937 = vpow.pop %v1936
    %v1938 = vadd.f32 %v1937, 1.0
    %v1939 = vlog2.pop %v1938
    %v1940 = vmul.f32 %v1939, 0.6931472
    %v1941 = vmul.f32 -0.5, %v1937
    %v1942 = vadd.f32 %v1941, 1.0
    %v1943 = vmul.f32 %v1942, %v1937
    %v1944 = vand.u32 2147483647, %v1937
    %vm1945 = vcmp.lt.f32.partialorder %v1944, 0.0004427343
    %v1946 = vsel %vm1945, %v1943, %v1940
    %v1947 = vadd.f32 %v1931, %v1946
    %v1948 = vsel %vm1932, %v1933, %v1947
    %v1949 = vadd.f32 %v1948, 0.0001
    %v1950 = vlog2.pop %v1949
    %v1951 = vmul.f32 %v1950, 0.6931472
    %v1952 = vmul.f32 %v1758, %v1654
    %v1953 = vmul.f32 %v1856, 0.0
    %v1954 = vadd.f32 %v1952, %v1953
    %v1955 = vmul.f32 %v1951, %v1657
    %v1956 = vadd.f32 %v1954, %v1955
    %v1957 = vstv %s1653
    %v1958 = vmul.f32 %v1957, %v1956
    %v1959 = vadd.f32 %v1958, 0.0
    %v1960 = vmul.f32 %v1957, %v1959
    %v1961 = vadd.f32 %v1654, %v1960
    %v1962 = vrcp.pop %v1656
    %v1963 = vmul.f32 1.0, %v1962
    %v1964 = vlog2.pop %v1963
    %v1965 = vmul.f32 %v1964, 0.6931472
    %v1966 = vmul.f32 %v1656, %v1656
    %v1967 = vsub.f32 %v1655, %v1961
    %v1968 = vmul.f32 %v1967, %v1967
    %v1969 = vadd.f32 %v1966, %v1968
    %v1970 = vrcp.pop 2.0
    %v1971 = vmul.f32 %v1969, %v1970
    %v1972 = vadd.f32 %v1965, %v1971
    %v1973 = vsub.f32 %v1972, 0.5
    %v1974 = vsel %vm1652, 1, 0
    %vm1975 = vcmp.eq.s32.totalorder %v1974, 1
    %v1976 = vsel %vm1975, %v1973, 0.0
    %v1977 = vsel %vm778, %v1976, 0.0
    %1978 = vadd.xlane.f32.xlu0 %v1977
    %v1979 = vpop.xlane.xlu0 %1978
    %v1980 = vrot.slane %v1979, 4
    %v1981 = vadd.f32 %v1979, %v1980
    %v1982 = vrot.slane %v1981, 2
    %v1983 = vadd.f32 %v1981, %v1982
    %v1984 = vrot.slane %v1983, 1
    %v1985 = vadd.f32 %v1983, %v1984
    %s1986 = vtos %v1985
    %s1987 = sadd.f32 %s1986, 0.0
    %s1988 = sld [smem:[#allocation6 + $0x2]]
    %v1989 = vld [vmem:[#allocation2 + $0x8] sm:$0xff]
    %v1990 = vld [vmem:[#allocation3 + $0x10] sm:$0xff]
    %v1991 = vld [vmem:[#allocation4 + $0x10] sm:$0xff]
    %v1992 = vld [vmem:[%s2 + $0x10] sm:$0xff]
    %v1993 = vld [vmem:[#allocation5 + $0x8] sm:$0xff]
    %1995 = vset.pattern.permute.xlu0 0
    %1996 = vperm.xlu0 %1995, %v1959
    %v1997 = vpop.permute.xlu0 %1996
    %v1999 = vmul.f32 %v1997, %v1662
    %v2000 = vadd.f32 %v1993, %v1999
    %2001 = vset.pattern.permute.xlu0 1
    %2002 = vperm.xlu0 %2001, %v1959
    %v2003 = vpop.permute.xlu0 %2002
    %v2005 = vmul.f32 %v2003, %v1668
    %v2006 = vadd.f32 %v2000, %v2005
    %2007 = vset.pattern.permute.xlu0 2
    %2008 = vperm.xlu0 %2007, %v1959
    %v2009 = vpop.permute.xlu0 %2008
    %v2011 = vmul.f32 %v2009, %v1674
    %v2012 = vadd.f32 %v2006, %v2011
    %2013 = vset.pattern.permute.xlu0 3
    %2014 = vperm.xlu0 %2013, %v1959
    %v2015 = vpop.permute.xlu0 %2014
    %v2017 = vmul.f32 %v2015, %v1680
    %v2018 = vadd.f32 %v2012, %v2017
    %v2019 = vmax.f32 %v2018, 0.0
    %v2021 = vsel %vm1631, %v2019, 0
    %2023 = vmatprep.subr.mxu0 0.0
    %2024 = vmatpush1.msra.mxu0 0.0
    %2025 = vmatprep.subr.mxu0 0.0
    %2026 = vmatpush1.msra.mxu0 0.0
    %2027 = vmatprep.subr.mxu0 0.0
    %2028 = vmatpush1.msra.mxu0 0.0
    %2029 = vmatprep.subr.mxu0 0.0
    %2030 = vmatpush1.msra.mxu0 0.0
    %2031 = vmatprep.subr.mxu0 0.0
    %2032 = vmatpush1.msra.mxu0 0.0
    %2033 = vmatprep.subr.mxu0 0.0
    %2034 = vmatpush1.msra.mxu0 0.0
    %2035 = vmatprep.subr.mxu0 0.0
    %2036 = vmatpush1.msra.mxu0 0.0
    %2037 = vmatprep.subr.mxu0 0.0
    %2038 = vmatpush1.msra.mxu0 0.0
    %2039 = vmatprep.subr.mxu0 0.0
    %2040 = vmatpush1.msra.mxu0 0.0
    %2041 = vmatprep.subr.mxu0 0.0
    %2042 = vmatpush1.msra.mxu0 0.0
    %2043 = vmatprep.subr.mxu0 0.0
    %2044 = vmatpush1.msra.mxu0 0.0
    %2045 = vmatprep.subr.mxu0 0.0
    %2046 = vmatpush1.msra.mxu0 0.0
    %2047 = vmatprep.subr.mxu0 0.0
    %2048 = vmatpush1.msra.mxu0 %v1640
    %2049 = vmatprep.subr.mxu0 0.0
    %2050 = vmatpush1.msra.mxu0 %v1639
    %2051 = vmatprep.subr.mxu0 0.0
    %2052 = vmatpush1.msra.mxu0 %v1638
    %2053 = vmatprep.subr.mxu0 0.0
    %2054 = vmatpush1.msra.mxu0 %v1637
    %2055 = vmatprep.subr.mxu0 0.0
    %2056 = vmatpush2.msra.mxu0 0.0
    %2057 = vmatprep.subr.mxu0 0.0
    %2058 = vmatpush2.msra.mxu0 0.0
    %2059 = vmatprep.subr.mxu0 0.0
    %2060 = vmatpush2.msra.mxu0 0.0
    %2061 = vmatprep.subr.mxu0 0.0
    %2062 = vmatpush2.msra.mxu0 0.0
    %2063 = vmatprep.subr.mxu0 0.0
    %2064 = vmatpush2.msra.mxu0 0.0
    %2065 = vmatprep.subr.mxu0 0.0
    %2066 = vmatpush2.msra.mxu0 0.0
    %2067 = vmatprep.subr.mxu0 0.0
    %2068 = vmatpush2.msra.mxu0 0.0
    %2069 = vmatprep.subr.mxu0 0.0
    %2070 = vmatpush2.msra.mxu0 0.0
    %2071 = vmatprep.subr.mxu0 0.0
    %2072 = vmatpush2.msra.mxu0 0.0
    %2073 = vmatprep.subr.mxu0 0.0
    %2074 = vmatpush2.msra.mxu0 0.0
    %2075 = vmatprep.subr.mxu0 0.0
    %2076 = vmatpush2.msra.mxu0 0.0
    %2077 = vmatprep.subr.mxu0 0.0
    %2078 = vmatpush2.msra.mxu0 0.0
    %2079 = vmatprep.subr.mxu0 0.0
    %2080 = vmatpush2.msra.mxu0 0.0
    %2081 = vmatprep.subr.mxu0 0.0
    %2082 = vmatpush2.msra.mxu0 0.0
    %2083 = vmatprep.subr.mxu0 0.0
    %2084 = vmatpush2.msra.mxu0 0.0
    %2085 = vmatprep.subr.mxu0 0.0
    %2086 = vmatpush2.msra.mxu0 0.0
    %2087 = vmatprep.mubr.f32.mxu0 0.0
    %2088 = vmatmul.mubr.f32.gmra.mxu0 %v2021
    %v2089 = vpop.f32.mrf.mxu0
    %v2090 = vadd.f32 %v1687, %v2089
    %v2091 = vpop.f32.mrf.mxu0
    %2092 = vdwg.mxu0
    %2093 = vmatprep.subr.mxu0 0.0
    %2094 = vmatpush1.msra.mxu0 0.0
    %2095 = vmatprep.subr.mxu0 0.0
    %2096 = vmatpush1.msra.mxu0 0.0
    %2097 = vmatprep.subr.mxu0 0.0
    %2098 = vmatpush1.msra.mxu0 0.0
    %2099 = vmatprep.subr.mxu0 0.0
    %2100 = vmatpush1.msra.mxu0 0.0
    %2101 = vmatprep.subr.mxu0 0.0
    %2102 = vmatpush1.msra.mxu0 0.0
    %2103 = vmatprep.subr.mxu0 0.0
    %2104 = vmatpush1.msra.mxu0 0.0
    %2105 = vmatprep.subr.mxu0 0.0
    %2106 = vmatpush1.msra.mxu0 0.0
    %2107 = vmatprep.subr.mxu0 0.0
    %2108 = vmatpush1.msra.mxu0 0.0
    %2109 = vmatprep.subr.mxu0 0.0
    %2110 = vmatpush1.msra.mxu0 0.0
    %2111 = vmatprep.subr.mxu0 0.0
    %2112 = vmatpush1.msra.mxu0 0.0
    %2113 = vmatprep.subr.mxu0 0.0
    %2114 = vmatpush1.msra.mxu0 0.0
    %2115 = vmatprep.subr.mxu0 0.0
    %2116 = vmatpush1.msra.mxu0 0.0
    %2117 = vmatprep.subr.mxu0 0.0
    %2118 = vmatpush1.msra.mxu0 %v1645
    %2119 = vmatprep.subr.mxu0 0.0
    %2120 = vmatpush1.msra.mxu0 %v1644
    %2121 = vmatprep.subr.mxu0 0.0
    %2122 = vmatpush1.msra.mxu0 %v1643
    %2123 = vmatprep.subr.mxu0 0.0
    %2124 = vmatpush1.msra.mxu0 %v1642
    %2125 = vmatprep.subr.mxu0 0.0
    %2126 = vmatpush2.msra.mxu0 0.0
    %2127 = vmatprep.subr.mxu0 0.0
    %2128 = vmatpush2.msra.mxu0 0.0
    %2129 = vmatprep.subr.mxu0 0.0
    %2130 = vmatpush2.msra.mxu0 0.0
    %2131 = vmatprep.subr.mxu0 0.0
    %2132 = vmatpush2.msra.mxu0 0.0
    %2133 = vmatprep.subr.mxu0 0.0
    %2134 = vmatpush2.msra.mxu0 0.0
    %2135 = vmatprep.subr.mxu0 0.0
    %2136 = vmatpush2.msra.mxu0 0.0
    %2137 = vmatprep.subr.mxu0 0.0
    %2138 = vmatpush2.msra.mxu0 0.0
    %2139 = vmatprep.subr.mxu0 0.0
    %2140 = vmatpush2.msra.mxu0 0.0
    %2141 = vmatprep.subr.mxu0 0.0
    %2142 = vmatpush2.msra.mxu0 0.0
    %2143 = vmatprep.subr.mxu0 0.0
    %2144 = vmatpush2.msra.mxu0 0.0
    %2145 = vmatprep.subr.mxu0 0.0
    %2146 = vmatpush2.msra.mxu0 0.0
    %2147 = vmatprep.subr.mxu0 0.0
    %2148 = vmatpush2.msra.mxu0 0.0
    %2149 = vmatprep.subr.mxu0 0.0
    %2150 = vmatpush2.msra.mxu0 0.0
    %2151 = vmatprep.subr.mxu0 0.0
    %2152 = vmatpush2.msra.mxu0 0.0
    %2153 = vmatprep.subr.mxu0 0.0
    %2154 = vmatpush2.msra.mxu0 0.0
    %2155 = vmatprep.subr.mxu0 0.0
    %2156 = vmatpush2.msra.mxu0 0.0
    %2157 = vmatprep.mubr.f32.mxu0 0.0
    %2158 = vmatmul.mubr.f32.gmra.mxu0 %v2021
    %v2159 = vpop.f32.mrf.mxu0
    %v2160 = vadd.f32 %v1764, %v2159
    %v2161 = vpop.f32.mrf.mxu0
    %2162 = vdwg.mxu0
    %v2163 = vmax.f32 %v2160, 0.0
    %vm2164 = vcmp.ne.f32.partialorder %v2160, %v2160
    %v2165 = vadd.f32 %v2160, 0.0
    %v2166 = vand.u32 2147483647, %v2160
    %v2167 = vsub.f32 0.0, %v2166
    %v2168 = vmul.f32 %v2167, 1.442695
    %v2169 = vpow.pop %v2168
    %v2170 = vadd.f32 %v2169, 1.0
    %v2171 = vlog2.pop %v2170
    %v2172 = vmul.f32 %v2171, 0.6931472
    %v2173 = vmul.f32 -0.5, %v2169
    %v2174 = vadd.f32 %v2173, 1.0
    %v2175 = vmul.f32 %v2174, %v2169
    %v2176 = vand.u32 2147483647, %v2169
    %vm2177 = vcmp.lt.f32.partialorder %v2176, 0.0004427343
    %v2178 = vsel %vm2177, %v2175, %v2172
    %v2179 = vadd.f32 %v2163, %v2178
    %v2180 = vsel %vm2164, %v2165, %v2179
    %v2181 = vadd.f32 %v2180, 0.0001
    %v2182 = vlog2.pop %v2181
    %v2183 = vmul.f32 %v2182, 0.6931472
    %v2184 = vsub.f32 0.0, %v2183
    %2185 = vmatprep.subr.mxu0 0.0
    %2186 = vmatpush1.msra.mxu0 0.0
    %2187 = vmatprep.subr.mxu0 0.0
    %2188 = vmatpush1.msra.mxu0 0.0
    %2189 = vmatprep.subr.mxu0 0.0
    %2190 = vmatpush1.msra.mxu0 0.0
    %2191 = vmatprep.subr.mxu0 0.0
    %2192 = vmatpush1.msra.mxu0 0.0
    %2193 = vmatprep.subr.mxu0 0.0
    %2194 = vmatpush1.msra.mxu0 0.0
    %2195 = vmatprep.subr.mxu0 0.0
    %2196 = vmatpush1.msra.mxu0 0.0
    %2197 = vmatprep.subr.mxu0 0.0
    %2198 = vmatpush1.msra.mxu0 0.0
    %2199 = vmatprep.subr.mxu0 0.0
    %2200 = vmatpush1.msra.mxu0 0.0
    %2201 = vmatprep.subr.mxu0 0.0
    %2202 = vmatpush1.msra.mxu0 0.0
    %2203 = vmatprep.subr.mxu0 0.0
    %2204 = vmatpush1.msra.mxu0 0.0
    %2205 = vmatprep.subr.mxu0 0.0
    %2206 = vmatpush1.msra.mxu0 0.0
    %2207 = vmatprep.subr.mxu0 0.0
    %2208 = vmatpush1.msra.mxu0 0.0
    %2209 = vmatprep.subr.mxu0 0.0
    %2210 = vmatpush1.msra.mxu0 %v1650
    %2211 = vmatprep.subr.mxu0 0.0
    %2212 = vmatpush1.msra.mxu0 %v1649
    %2213 = vmatprep.subr.mxu0 0.0
    %2214 = vmatpush1.msra.mxu0 %v1648
    %2215 = vmatprep.subr.mxu0 0.0
    %2216 = vmatpush1.msra.mxu0 %v1647
    %2217 = vmatprep.subr.mxu0 0.0
    %2218 = vmatpush2.msra.mxu0 0.0
    %2219 = vmatprep.subr.mxu0 0.0
    %2220 = vmatpush2.msra.mxu0 0.0
    %2221 = vmatprep.subr.mxu0 0.0
    %2222 = vmatpush2.msra.mxu0 0.0
    %2223 = vmatprep.subr.mxu0 0.0
    %2224 = vmatpush2.msra.mxu0 0.0
    %2225 = vmatprep.subr.mxu0 0.0
    %2226 = vmatpush2.msra.mxu0 0.0
    %2227 = vmatprep.subr.mxu0 0.0
    %2228 = vmatpush2.msra.mxu0 0.0
    %2229 = vmatprep.subr.mxu0 0.0
    %2230 = vmatpush2.msra.mxu0 0.0
    %2231 = vmatprep.subr.mxu0 0.0
    %2232 = vmatpush2.msra.mxu0 0.0
    %2233 = vmatprep.subr.mxu0 0.0
    %2234 = vmatpush2.msra.mxu0 0.0
    %2235 = vmatprep.subr.mxu0 0.0
    %2236 = vmatpush2.msra.mxu0 0.0
    %2237 = vmatprep.subr.mxu0 0.0
    %2238 = vmatpush2.msra.mxu0 0.0
    %2239 = vmatprep.subr.mxu0 0.0
    %2240 = vmatpush2.msra.mxu0 0.0
    %2241 = vmatprep.subr.mxu0 0.0
    %2242 = vmatpush2.msra.mxu0 0.0
    %2243 = vmatprep.subr.mxu0 0.0
    %2244 = vmatpush2.msra.mxu0 0.0
    %2245 = vmatprep.subr.mxu0 0.0
    %2246 = vmatpush2.msra.mxu0 0.0
    %2247 = vmatprep.subr.mxu0 0.0
    %2248 = vmatpush2.msra.mxu0 0.0
    %2249 = vmatprep.mubr.f32.mxu0 0.0
    %2250 = vmatmul.mubr.f32.gmra.mxu0 %v2021
    %v2251 = vpop.f32.mrf.mxu0
    %v2252 = vadd.f32 %v1860, %v2251
    %v2253 = vpop.f32.mrf.mxu0
    %2254 = vdwg.mxu0
    %v2255 = vmax.f32 %v2252, 0.0
    %vm2256 = vcmp.ne.f32.partialorder %v2252, %v2252
    %v2257 = vadd.f32 %v2252, 0.0
    %v2258 = vand.u32 2147483647, %v2252
    %v2259 = vsub.f32 0.0, %v2258
    %v2260 = vmul.f32 %v2259, 1.442695
    %v2261 = vpow.pop %v2260
    %v2262 = vadd.f32 %v2261, 1.0
    %v2263 = vlog2.pop %v2262
    %v2264 = vmul.f32 %v2263, 0.6931472
    %v2265 = vmul.f32 -0.5, %v2261
    %v2266 = vadd.f32 %v2265, 1.0
    %v2267 = vmul.f32 %v2266, %v2261
    %v2268 = vand.u32 2147483647, %v2261
    %vm2269 = vcmp.lt.f32.partialorder %v2268, 0.0004427343
    %v2270 = vsel %vm2269, %v2267, %v2264
    %v2271 = vadd.f32 %v2255, %v2270
    %v2272 = vsel %vm2256, %v2257, %v2271
    %v2273 = vadd.f32 %v2272, 0.0001
    %v2274 = vlog2.pop %v2273
    %v2275 = vmul.f32 %v2274, 0.6931472
    %v2276 = vmul.f32 %v2090, %v1989
    %v2277 = vmul.f32 %v2184, %v1959
    %v2278 = vadd.f32 %v2276, %v2277
    %v2279 = vmul.f32 %v2275, %v1992
    %v2280 = vadd.f32 %v2278, %v2279
    %v2281 = vstv %s1988
    %v2282 = vmul.f32 %v2281, %v2280
    %v2283 = vadd.f32 %v1959, %v2282
    %v2284 = vmul.f32 %v2281, %v2283
    %v2285 = vadd.f32 %v1989, %v2284
    %v2286 = vrcp.pop %v1991
    %v2287 = vmul.f32 1.0, %v2286
    %v2288 = vlog2.pop %v2287
    %v2289 = vmul.f32 %v2288, 0.6931472
    %v2290 = vmul.f32 %v1991, %v1991
    %v2291 = vsub.f32 %v1990, %v2285
    %v2292 = vmul.f32 %v2291, %v2291
    %v2293 = vadd.f32 %v2290, %v2292
    %v2294 = vmul.f32 %v2293, %v1970
    %v2295 = vadd.f32 %v2289, %v2294
    %v2296 = vsub.f32 %v2295, 0.5
    %v2297 = vsel %vm1975, %v2296, 0.0
    %v2298 = vsel %vm778, %v2297, 0.0
    %2299 = vadd.xlane.f32.xlu0 %v2298
    %v2300 = vpop.xlane.xlu0 %2299
    %v2301 = vrot.slane %v2300, 4
    %v2302 = vadd.f32 %v2300, %v2301
    %v2303 = vrot.slane %v2302, 2
    %v2304 = vadd.f32 %v2302, %v2303
    %v2305 = vrot.slane %v2304, 1
    %v2306 = vadd.f32 %v2304, %v2305
    %s2307 = vtos %v2306
    %s2308 = sadd.f32 %s1987, %s2307
    %s2309 = sld [smem:[#allocation6 + $0x3]]
    %v2310 = vld [vmem:[#allocation2 + $0x10] sm:$0xff]
    %v2311 = vld [vmem:[#allocation3 + $0x18] sm:$0xff]
    %v2312 = vld [vmem:[#allocation4 + $0x18] sm:$0xff]
    %v2313 = vld [vmem:[%s2 + $0x18] sm:$0xff]
    %v2314 = vld [vmem:[#allocation5 + $0x10] sm:$0xff]
    %2316 = vset.pattern.permute.xlu0 0
    %2317 = vperm.xlu0 %2316, %v2283
    %v2318 = vpop.permute.xlu0 %2317
    %v2320 = vmul.f32 %v2318, %v1662
    %v2321 = vadd.f32 %v2314, %v2320
    %2322 = vset.pattern.permute.xlu0 1
    %2323 = vperm.xlu0 %2322, %v2283
    %v2324 = vpop.permute.xlu0 %2323
    %v2326 = vmul.f32 %v2324, %v1668
    %v2327 = vadd.f32 %v2321, %v2326
    %2328 = vset.pattern.permute.xlu0 2
    %2329 = vperm.xlu0 %2328, %v2283
    %v2330 = vpop.permute.xlu0 %2329
    %v2332 = vmul.f32 %v2330, %v1674
    %v2333 = vadd.f32 %v2327, %v2332
    %2334 = vset.pattern.permute.xlu0 3
    %2335 = vperm.xlu0 %2334, %v2283
    %v2336 = vpop.permute.xlu0 %2335
    %v2338 = vmul.f32 %v2336, %v1680
    %v2339 = vadd.f32 %v2333, %v2338
    %v2340 = vmax.f32 %v2339, 0.0
    %v2342 = vsel %vm1631, %v2340, 0
    %2344 = vmatprep.subr.mxu0 0.0
    %2345 = vmatpush1.msra.mxu0 0.0
    %2346 = vmatprep.subr.mxu0 0.0
    %2347 = vmatpush1.msra.mxu0 0.0
    %2348 = vmatprep.subr.mxu0 0.0
    %2349 = vmatpush1.msra.mxu0 0.0
    %2350 = vmatprep.subr.mxu0 0.0
    %2351 = vmatpush1.msra.mxu0 0.0
    %2352 = vmatprep.subr.mxu0 0.0
    %2353 = vmatpush1.msra.mxu0 0.0
    %2354 = vmatprep.subr.mxu0 0.0
    %2355 = vmatpush1.msra.mxu0 0.0
    %2356 = vmatprep.subr.mxu0 0.0
    %2357 = vmatpush1.msra.mxu0 0.0
    %2358 = vmatprep.subr.mxu0 0.0
    %2359 = vmatpush1.msra.mxu0 0.0
    %2360 = vmatprep.subr.mxu0 0.0
    %2361 = vmatpush1.msra.mxu0 0.0
    %2362 = vmatprep.subr.mxu0 0.0
    %2363 = vmatpush1.msra.mxu0 0.0
    %2364 = vmatprep.subr.mxu0 0.0
    %2365 = vmatpush1.msra.mxu0 0.0
    %2366 = vmatprep.subr.mxu0 0.0
    %2367 = vmatpush1.msra.mxu0 0.0
    %2368 = vmatprep.subr.mxu0 0.0
    %2369 = vmatpush1.msra.mxu0 %v1640
    %2370 = vmatprep.subr.mxu0 0.0
    %2371 = vmatpush1.msra.mxu0 %v1639
    %2372 = vmatprep.subr.mxu0 0.0
    %2373 = vmatpush1.msra.mxu0 %v1638
    %2374 = vmatprep.subr.mxu0 0.0
    %2375 = vmatpush1.msra.mxu0 %v1637
    %2376 = vmatprep.subr.mxu0 0.0
    %2377 = vmatpush2.msra.mxu0 0.0
    %2378 = vmatprep.subr.mxu0 0.0
    %2379 = vmatpush2.msra.mxu0 0.0
    %2380 = vmatprep.subr.mxu0 0.0
    %2381 = vmatpush2.msra.mxu0 0.0
    %2382 = vmatprep.subr.mxu0 0.0
    %2383 = vmatpush2.msra.mxu0 0.0
    %2384 = vmatprep.subr.mxu0 0.0
    %2385 = vmatpush2.msra.mxu0 0.0
    %2386 = vmatprep.subr.mxu0 0.0
    %2387 = vmatpush2.msra.mxu0 0.0
    %2388 = vmatprep.subr.mxu0 0.0
    %2389 = vmatpush2.msra.mxu0 0.0
    %2390 = vmatprep.subr.mxu0 0.0
    %2391 = vmatpush2.msra.mxu0 0.0
    %2392 = vmatprep.subr.mxu0 0.0
    %2393 = vmatpush2.msra.mxu0 0.0
    %2394 = vmatprep.subr.mxu0 0.0
    %2395 = vmatpush2.msra.mxu0 0.0
    %2396 = vmatprep.subr.mxu0 0.0
    %2397 = vmatpush2.msra.mxu0 0.0
    %2398 = vmatprep.subr.mxu0 0.0
    %2399 = vmatpush2.msra.mxu0 0.0
    %2400 = vmatprep.subr.mxu0 0.0
    %2401 = vmatpush2.msra.mxu0 0.0
    %2402 = vmatprep.subr.mxu0 0.0
    %2403 = vmatpush2.msra.mxu0 0.0
    %2404 = vmatprep.subr.mxu0 0.0
    %2405 = vmatpush2.msra.mxu0 0.0
    %2406 = vmatprep.subr.mxu0 0.0
    %2407 = vmatpush2.msra.mxu0 0.0
    %2408 = vmatprep.mubr.f32.mxu0 0.0
    %2409 = vmatmul.mubr.f32.gmra.mxu0 %v2342
    %v2410 = vpop.f32.mrf.mxu0
    %v2411 = vadd.f32 %v1687, %v2410
    %v2412 = vpop.f32.mrf.mxu0
    %2413 = vdwg.mxu0
    %2414 = vmatprep.subr.mxu0 0.0
    %2415 = vmatpush1.msra.mxu0 0.0
    %2416 = vmatprep.subr.mxu0 0.0
    %2417 = vmatpush1.msra.mxu0 0.0
    %2418 = vmatprep.subr.mxu0 0.0
    %2419 = vmatpush1.msra.mxu0 0.0
    %2420 = vmatprep.subr.mxu0 0.0
    %2421 = vmatpush1.msra.mxu0 0.0
    %2422 = vmatprep.subr.mxu0 0.0
    %2423 = vmatpush1.msra.mxu0 0.0
    %2424 = vmatprep.subr.mxu0 0.0
    %2425 = vmatpush1.msra.mxu0 0.0
    %2426 = vmatprep.subr.mxu0 0.0
    %2427 = vmatpush1.msra.mxu0 0.0
    %2428 = vmatprep.subr.mxu0 0.0
    %2429 = vmatpush1.msra.mxu0 0.0
    %2430 = vmatprep.subr.mxu0 0.0
    %2431 = vmatpush1.msra.mxu0 0.0
    %2432 = vmatprep.subr.mxu0 0.0
    %2433 = vmatpush1.msra.mxu0 0.0
    %2434 = vmatprep.subr.mxu0 0.0
    %2435 = vmatpush1.msra.mxu0 0.0
    %2436 = vmatprep.subr.mxu0 0.0
    %2437 = vmatpush1.msra.mxu0 0.0
    %2438 = vmatprep.subr.mxu0 0.0
    %2439 = vmatpush1.msra.mxu0 %v1645
    %2440 = vmatprep.subr.mxu0 0.0
    %2441 = vmatpush1.msra.mxu0 %v1644
    %2442 = vmatprep.subr.mxu0 0.0
    %2443 = vmatpush1.msra.mxu0 %v1643
    %2444 = vmatprep.subr.mxu0 0.0
    %2445 = vmatpush1.msra.mxu0 %v1642
    %2446 = vmatprep.subr.mxu0 0.0
    %2447 = vmatpush2.msra.mxu0 0.0
    %2448 = vmatprep.subr.mxu0 0.0
    %2449 = vmatpush2.msra.mxu0 0.0
    %2450 = vmatprep.subr.mxu0 0.0
    %2451 = vmatpush2.msra.mxu0 0.0
    %2452 = vmatprep.subr.mxu0 0.0
    %2453 = vmatpush2.msra.mxu0 0.0
    %2454 = vmatprep.subr.mxu0 0.0
    %2455 = vmatpush2.msra.mxu0 0.0
    %2456 = vmatprep.subr.mxu0 0.0
    %2457 = vmatpush2.msra.mxu0 0.0
    %2458 = vmatprep.subr.mxu0 0.0
    %2459 = vmatpush2.msra.mxu0 0.0
    %2460 = vmatprep.subr.mxu0 0.0
    %2461 = vmatpush2.msra.mxu0 0.0
    %2462 = vmatprep.subr.mxu0 0.0
    %2463 = vmatpush2.msra.mxu0 0.0
    %2464 = vmatprep.subr.mxu0 0.0
    %2465 = vmatpush2.msra.mxu0 0.0
    %2466 = vmatprep.subr.mxu0 0.0
    %2467 = vmatpush2.msra.mxu0 0.0
    %2468 = vmatprep.subr.mxu0 0.0
    %2469 = vmatpush2.msra.mxu0 0.0
    %2470 = vmatprep.subr.mxu0 0.0
    %2471 = vmatpush2.msra.mxu0 0.0
    %2472 = vmatprep.subr.mxu0 0.0
    %2473 = vmatpush2.msra.mxu0 0.0
    %2474 = vmatprep.subr.mxu0 0.0
    %2475 = vmatpush2.msra.mxu0 0.0
    %2476 = vmatprep.subr.mxu0 0.0
    %2477 = vmatpush2.msra.mxu0 0.0
    %2478 = vmatprep.mubr.f32.mxu0 0.0
    %2479 = vmatmul.mubr.f32.gmra.mxu0 %v2342
    %v2480 = vpop.f32.mrf.mxu0
    %v2481 = vadd.f32 %v1764, %v2480
    %v2482 = vpop.f32.mrf.mxu0
    %2483 = vdwg.mxu0
    %v2484 = vmax.f32 %v2481, 0.0
    %vm2485 = vcmp.ne.f32.partialorder %v2481, %v2481
    %v2486 = vadd.f32 %v2481, 0.0
    %v2487 = vand.u32 2147483647, %v2481
    %v2488 = vsub.f32 0.0, %v2487
    %v2489 = vmul.f32 %v2488, 1.442695
    %v2490 = vpow.pop %v2489
    %v2491 = vadd.f32 %v2490, 1.0
    %v2492 = vlog2.pop %v2491
    %v2493 = vmul.f32 %v2492, 0.6931472
    %v2494 = vmul.f32 -0.5, %v2490
    %v2495 = vadd.f32 %v2494, 1.0
    %v2496 = vmul.f32 %v2495, %v2490
    %v2497 = vand.u32 2147483647, %v2490
    %vm2498 = vcmp.lt.f32.partialorder %v2497, 0.0004427343
    %v2499 = vsel %vm2498, %v2496, %v2493
    %v2500 = vadd.f32 %v2484, %v2499
    %v2501 = vsel %vm2485, %v2486, %v2500
    %v2502 = vadd.f32 %v2501, 0.0001
    %v2503 = vlog2.pop %v2502
    %v2504 = vmul.f32 %v2503, 0.6931472
    %v2505 = vsub.f32 0.0, %v2504
    %2506 = vmatprep.subr.mxu0 0.0
    %2507 = vmatpush1.msra.mxu0 0.0
    %2508 = vmatprep.subr.mxu0 0.0
    %2509 = vmatpush1.msra.mxu0 0.0
    %2510 = vmatprep.subr.mxu0 0.0
    %2511 = vmatpush1.msra.mxu0 0.0
    %2512 = vmatprep.subr.mxu0 0.0
    %2513 = vmatpush1.msra.mxu0 0.0
    %2514 = vmatprep.subr.mxu0 0.0
    %2515 = vmatpush1.msra.mxu0 0.0
    %2516 = vmatprep.subr.mxu0 0.0
    %2517 = vmatpush1.msra.mxu0 0.0
    %2518 = vmatprep.subr.mxu0 0.0
    %2519 = vmatpush1.msra.mxu0 0.0
    %2520 = vmatprep.subr.mxu0 0.0
    %2521 = vmatpush1.msra.mxu0 0.0
    %2522 = vmatprep.subr.mxu0 0.0
    %2523 = vmatpush1.msra.mxu0 0.0
    %2524 = vmatprep.subr.mxu0 0.0
    %2525 = vmatpush1.msra.mxu0 0.0
    %2526 = vmatprep.subr.mxu0 0.0
    %2527 = vmatpush1.msra.mxu0 0.0
    %2528 = vmatprep.subr.mxu0 0.0
    %2529 = vmatpush1.msra.mxu0 0.0
    %2530 = vmatprep.subr.mxu0 0.0
    %2531 = vmatpush1.msra.mxu0 %v1650
    %2532 = vmatprep.subr.mxu0 0.0
    %2533 = vmatpush1.msra.mxu0 %v1649
    %2534 = vmatprep.subr.mxu0 0.0
    %2535 = vmatpush1.msra.mxu0 %v1648
    %2536 = vmatprep.subr.mxu0 0.0
    %2537 = vmatpush1.msra.mxu0 %v1647
    %2538 = vmatprep.subr.mxu0 0.0
    %2539 = vmatpush2.msra.mxu0 0.0
    %2540 = vmatprep.subr.mxu0 0.0
    %2541 = vmatpush2.msra.mxu0 0.0
    %2542 = vmatprep.subr.mxu0 0.0
    %2543 = vmatpush2.msra.mxu0 0.0
    %2544 = vmatprep.subr.mxu0 0.0
    %2545 = vmatpush2.msra.mxu0 0.0
    %2546 = vmatprep.subr.mxu0 0.0
    %2547 = vmatpush2.msra.mxu0 0.0
    %2548 = vmatprep.subr.mxu0 0.0
    %2549 = vmatpush2.msra.mxu0 0.0
    %2550 = vmatprep.subr.mxu0 0.0
    %2551 = vmatpush2.msra.mxu0 0.0
    %2552 = vmatprep.subr.mxu0 0.0
    %2553 = vmatpush2.msra.mxu0 0.0
    %2554 = vmatprep.subr.mxu0 0.0
    %2555 = vmatpush2.msra.mxu0 0.0
    %2556 = vmatprep.subr.mxu0 0.0
    %2557 = vmatpush2.msra.mxu0 0.0
    %2558 = vmatprep.subr.mxu0 0.0
    %2559 = vmatpush2.msra.mxu0 0.0
    %2560 = vmatprep.subr.mxu0 0.0
    %2561 = vmatpush2.msra.mxu0 0.0
    %2562 = vmatprep.subr.mxu0 0.0
    %2563 = vmatpush2.msra.mxu0 0.0
    %2564 = vmatprep.subr.mxu0 0.0
    %2565 = vmatpush2.msra.mxu0 0.0
    %2566 = vmatprep.subr.mxu0 0.0
    %2567 = vmatpush2.msra.mxu0 0.0
    %2568 = vmatprep.subr.mxu0 0.0
    %2569 = vmatpush2.msra.mxu0 0.0
    %2570 = vmatprep.mubr.f32.mxu0 0.0
    %2571 = vmatmul.mubr.f32.gmra.mxu0 %v2342
    %v2572 = vpop.f32.mrf.mxu0
    %v2573 = vadd.f32 %v1860, %v2572
    %v2574 = vpop.f32.mrf.mxu0
    %2575 = vdwg.mxu0
    %v2576 = vmax.f32 %v2573, 0.0
    %vm2577 = vcmp.ne.f32.partialorder %v2573, %v2573
    %v2578 = vadd.f32 %v2573, 0.0
    %v2579 = vand.u32 2147483647, %v2573
    %v2580 = vsub.f32 0.0, %v2579
    %v2581 = vmul.f32 %v2580, 1.442695
    %v2582 = vpow.pop %v2581
    %v2583 = vadd.f32 %v2582, 1.0
    %v2584 = vlog2.pop %v2583
    %v2585 = vmul.f32 %v2584, 0.6931472
    %v2586 = vmul.f32 -0.5, %v2582
    %v2587 = vadd.f32 %v2586, 1.0
    %v2588 = vmul.f32 %v2587, %v2582
    %v2589 = vand.u32 2147483647, %v2582
    %vm2590 = vcmp.lt.f32.partialorder %v2589, 0.0004427343
    %v2591 = vsel %vm2590, %v2588, %v2585
    %v2592 = vadd.f32 %v2576, %v2591
    %v2593 = vsel %vm2577, %v2578, %v2592
    %v2594 = vadd.f32 %v2593, 0.0001
    %v2595 = vlog2.pop %v2594
    %v2596 = vmul.f32 %v2595, 0.6931472
    %v2597 = vmul.f32 %v2411, %v2310
    %v2598 = vmul.f32 %v2505, %v2283
    %v2599 = vadd.f32 %v2597, %v2598
    %v2600 = vmul.f32 %v2596, %v2313
    %v2601 = vadd.f32 %v2599, %v2600
    %v2602 = vstv %s2309
    %v2603 = vmul.f32 %v2602, %v2601
    %v2604 = vadd.f32 %v2283, %v2603
    %v2605 = vmul.f32 %v2602, %v2604
    %v2606 = vadd.f32 %v2310, %v2605
    %v2607 = vrcp.pop %v2312
    %v2608 = vmul.f32 1.0, %v2607
    %v2609 = vlog2.pop %v2608
    %v2610 = vmul.f32 %v2609, 0.6931472
    %v2611 = vmul.f32 %v2312, %v2312
    %v2612 = vsub.f32 %v2311, %v2606
    %v2613 = vmul.f32 %v2612, %v2612
    %v2614 = vadd.f32 %v2611, %v2613
    %v2615 = vmul.f32 %v2614, %v1970
    %v2616 = vadd.f32 %v2610, %v2615
    %v2617 = vsub.f32 %v2616, 0.5
    %v2618 = vsel %vm1975, %v2617, 0.0
    %v2619 = vsel %vm778, %v2618, 0.0
    %2620 = vadd.xlane.f32.xlu0 %v2619
    %v2621 = vpop.xlane.xlu0 %2620
    %v2622 = vrot.slane %v2621, 4
    %v2623 = vadd.f32 %v2621, %v2622
    %v2624 = vrot.slane %v2623, 2
    %v2625 = vadd.f32 %v2623, %v2624
    %v2626 = vrot.slane %v2625, 1
    %v2627 = vadd.f32 %v2625, %v2626
    %s2628 = vtos %v2627
    %s2629 = sadd.f32 %s2308, %s2628
    %s2630 = sld [smem:[#allocation6 + $0x4]]
    %v2631 = vld [vmem:[#allocation2 + $0x18] sm:$0xff]
    %v2632 = vld [vmem:[#allocation3 + $0x20] sm:$0xff]
    %v2633 = vld [vmem:[#allocation4 + $0x20] sm:$0xff]
    %v2634 = vld [vmem:[%s2 + $0x20] sm:$0xff]
    %v2635 = vld [vmem:[#allocation5 + $0x18] sm:$0xff]
    %2637 = vset.pattern.permute.xlu0 0
    %2638 = vperm.xlu0 %2637, %v2604
    %v2639 = vpop.permute.xlu0 %2638
    %v2641 = vmul.f32 %v2639, %v1662
    %v2642 = vadd.f32 %v2635, %v2641
    %2643 = vset.pattern.permute.xlu0 1
    %2644 = vperm.xlu0 %2643, %v2604
    %v2645 = vpop.permute.xlu0 %2644
    %v2647 = vmul.f32 %v2645, %v1668
    %v2648 = vadd.f32 %v2642, %v2647
    %2649 = vset.pattern.permute.xlu0 2
    %2650 = vperm.xlu0 %2649, %v2604
    %v2651 = vpop.permute.xlu0 %2650
    %v2653 = vmul.f32 %v2651, %v1674
    %v2654 = vadd.f32 %v2648, %v2653
    %2655 = vset.pattern.permute.xlu0 3
    %2656 = vperm.xlu0 %2655, %v2604
    %v2657 = vpop.permute.xlu0 %2656
    %v2659 = vmul.f32 %v2657, %v1680
    %v2660 = vadd.f32 %v2654, %v2659
    %v2661 = vmax.f32 %v2660, 0.0
    %v2663 = vsel %vm1631, %v2661, 0
    %2665 = vmatprep.subr.mxu0 0.0
    %2666 = vmatpush1.msra.mxu0 0.0
    %2667 = vmatprep.subr.mxu0 0.0
    %2668 = vmatpush1.msra.mxu0 0.0
    %2669 = vmatprep.subr.mxu0 0.0
    %2670 = vmatpush1.msra.mxu0 0.0
    %2671 = vmatprep.subr.mxu0 0.0
    %2672 = vmatpush1.msra.mxu0 0.0
    %2673 = vmatprep.subr.mxu0 0.0
    %2674 = vmatpush1.msra.mxu0 0.0
    %2675 = vmatprep.subr.mxu0 0.0
    %2676 = vmatpush1.msra.mxu0 0.0
    %2677 = vmatprep.subr.mxu0 0.0
    %2678 = vmatpush1.msra.mxu0 0.0
    %2679 = vmatprep.subr.mxu0 0.0
    %2680 = vmatpush1.msra.mxu0 0.0
    %2681 = vmatprep.subr.mxu0 0.0
    %2682 = vmatpush1.msra.mxu0 0.0
    %2683 = vmatprep.subr.mxu0 0.0
    %2684 = vmatpush1.msra.mxu0 0.0
    %2685 = vmatprep.subr.mxu0 0.0
    %2686 = vmatpush1.msra.mxu0 0.0
    %2687 = vmatprep.subr.mxu0 0.0
    %2688 = vmatpush1.msra.mxu0 0.0
    %2689 = vmatprep.subr.mxu0 0.0
    %2690 = vmatpush1.msra.mxu0 %v1640
    %2691 = vmatprep.subr.mxu0 0.0
    %2692 = vmatpush1.msra.mxu0 %v1639
    %2693 = vmatprep.subr.mxu0 0.0
    %2694 = vmatpush1.msra.mxu0 %v1638
    %2695 = vmatprep.subr.mxu0 0.0
    %2696 = vmatpush1.msra.mxu0 %v1637
    %2697 = vmatprep.subr.mxu0 0.0
    %2698 = vmatpush2.msra.mxu0 0.0
    %2699 = vmatprep.subr.mxu0 0.0
    %2700 = vmatpush2.msra.mxu0 0.0
    %2701 = vmatprep.subr.mxu0 0.0
    %2702 = vmatpush2.msra.mxu0 0.0
    %2703 = vmatprep.subr.mxu0 0.0
    %2704 = vmatpush2.msra.mxu0 0.0
    %2705 = vmatprep.subr.mxu0 0.0
    %2706 = vmatpush2.msra.mxu0 0.0
    %2707 = vmatprep.subr.mxu0 0.0
    %2708 = vmatpush2.msra.mxu0 0.0
    %2709 = vmatprep.subr.mxu0 0.0
    %2710 = vmatpush2.msra.mxu0 0.0
    %2711 = vmatprep.subr.mxu0 0.0
    %2712 = vmatpush2.msra.mxu0 0.0
    %2713 = vmatprep.subr.mxu0 0.0
    %2714 = vmatpush2.msra.mxu0 0.0
    %2715 = vmatprep.subr.mxu0 0.0
    %2716 = vmatpush2.msra.mxu0 0.0
    %2717 = vmatprep.subr.mxu0 0.0
    %2718 = vmatpush2.msra.mxu0 0.0
    %2719 = vmatprep.subr.mxu0 0.0
    %2720 = vmatpush2.msra.mxu0 0.0
    %2721 = vmatprep.subr.mxu0 0.0
    %2722 = vmatpush2.msra.mxu0 0.0
    %2723 = vmatprep.subr.mxu0 0.0
    %2724 = vmatpush2.msra.mxu0 0.0
    %2725 = vmatprep.subr.mxu0 0.0
    %2726 = vmatpush2.msra.mxu0 0.0
    %2727 = vmatprep.subr.mxu0 0.0
    %2728 = vmatpush2.msra.mxu0 0.0
    %2729 = vmatprep.mubr.f32.mxu0 0.0
    %2730 = vmatmul.mubr.f32.gmra.mxu0 %v2663
    %v2731 = vpop.f32.mrf.mxu0
    %v2732 = vadd.f32 %v1687, %v2731
    %v2733 = vpop.f32.mrf.mxu0
    %2734 = vdwg.mxu0
    %2735 = vmatprep.subr.mxu0 0.0
    %2736 = vmatpush1.msra.mxu0 0.0
    %2737 = vmatprep.subr.mxu0 0.0
    %2738 = vmatpush1.msra.mxu0 0.0
    %2739 = vmatprep.subr.mxu0 0.0
    %2740 = vmatpush1.msra.mxu0 0.0
    %2741 = vmatprep.subr.mxu0 0.0
    %2742 = vmatpush1.msra.mxu0 0.0
    %2743 = vmatprep.subr.mxu0 0.0
    %2744 = vmatpush1.msra.mxu0 0.0
    %2745 = vmatprep.subr.mxu0 0.0
    %2746 = vmatpush1.msra.mxu0 0.0
    %2747 = vmatprep.subr.mxu0 0.0
    %2748 = vmatpush1.msra.mxu0 0.0
    %2749 = vmatprep.subr.mxu0 0.0
    %2750 = vmatpush1.msra.mxu0 0.0
    %2751 = vmatprep.subr.mxu0 0.0
    %2752 = vmatpush1.msra.mxu0 0.0
    %2753 = vmatprep.subr.mxu0 0.0
    %2754 = vmatpush1.msra.mxu0 0.0
    %2755 = vmatprep.subr.mxu0 0.0
    %2756 = vmatpush1.msra.mxu0 0.0
    %2757 = vmatprep.subr.mxu0 0.0
    %2758 = vmatpush1.msra.mxu0 0.0
    %2759 = vmatprep.subr.mxu0 0.0
    %2760 = vmatpush1.msra.mxu0 %v1645
    %2761 = vmatprep.subr.mxu0 0.0
    %2762 = vmatpush1.msra.mxu0 %v1644
    %2763 = vmatprep.subr.mxu0 0.0
    %2764 = vmatpush1.msra.mxu0 %v1643
    %2765 = vmatprep.subr.mxu0 0.0
    %2766 = vmatpush1.msra.mxu0 %v1642
    %2767 = vmatprep.subr.mxu0 0.0
    %2768 = vmatpush2.msra.mxu0 0.0
    %2769 = vmatprep.subr.mxu0 0.0
    %2770 = vmatpush2.msra.mxu0 0.0
    %2771 = vmatprep.subr.mxu0 0.0
    %2772 = vmatpush2.msra.mxu0 0.0
    %2773 = vmatprep.subr.mxu0 0.0
    %2774 = vmatpush2.msra.mxu0 0.0
    %2775 = vmatprep.subr.mxu0 0.0
    %2776 = vmatpush2.msra.mxu0 0.0
    %2777 = vmatprep.subr.mxu0 0.0
    %2778 = vmatpush2.msra.mxu0 0.0
    %2779 = vmatprep.subr.mxu0 0.0
    %2780 = vmatpush2.msra.mxu0 0.0
    %2781 = vmatprep.subr.mxu0 0.0
    %2782 = vmatpush2.msra.mxu0 0.0
    %2783 = vmatprep.subr.mxu0 0.0
    %2784 = vmatpush2.msra.mxu0 0.0
    %2785 = vmatprep.subr.mxu0 0.0
    %2786 = vmatpush2.msra.mxu0 0.0
    %2787 = vmatprep.subr.mxu0 0.0
    %2788 = vmatpush2.msra.mxu0 0.0
    %2789 = vmatprep.subr.mxu0 0.0
    %2790 = vmatpush2.msra.mxu0 0.0
    %2791 = vmatprep.subr.mxu0 0.0
    %2792 = vmatpush2.msra.mxu0 0.0
    %2793 = vmatprep.subr.mxu0 0.0
    %2794 = vmatpush2.msra.mxu0 0.0
    %2795 = vmatprep.subr.mxu0 0.0
    %2796 = vmatpush2.msra.mxu0 0.0
    %2797 = vmatprep.subr.mxu0 0.0
    %2798 = vmatpush2.msra.mxu0 0.0
    %2799 = vmatprep.mubr.f32.mxu0 0.0
    %2800 = vmatmul.mubr.f32.gmra.mxu0 %v2663
    %v2801 = vpop.f32.mrf.mxu0
    %v2802 = vadd.f32 %v1764, %v2801
    %v2803 = vpop.f32.mrf.mxu0
    %2804 = vdwg.mxu0
    %v2805 = vmax.f32 %v2802, 0.0
    %vm2806 = vcmp.ne.f32.partialorder %v2802, %v2802
    %v2807 = vadd.f32 %v2802, 0.0
    %v2808 = vand.u32 2147483647, %v2802
    %v2809 = vsub.f32 0.0, %v2808
    %v2810 = vmul.f32 %v2809, 1.442695
    %v2811 = vpow.pop %v2810
    %v2812 = vadd.f32 %v2811, 1.0
    %v2813 = vlog2.pop %v2812
    %v2814 = vmul.f32 %v2813, 0.6931472
    %v2815 = vmul.f32 -0.5, %v2811
    %v2816 = vadd.f32 %v2815, 1.0
    %v2817 = vmul.f32 %v2816, %v2811
    %v2818 = vand.u32 2147483647, %v2811
    %vm2819 = vcmp.lt.f32.partialorder %v2818, 0.0004427343
    %v2820 = vsel %vm2819, %v2817, %v2814
    %v2821 = vadd.f32 %v2805, %v2820
    %v2822 = vsel %vm2806, %v2807, %v2821
    %v2823 = vadd.f32 %v2822, 0.0001
    %v2824 = vlog2.pop %v2823
    %v2825 = vmul.f32 %v2824, 0.6931472
    %v2826 = vsub.f32 0.0, %v2825
    %2827 = vmatprep.subr.mxu0 0.0
    %2828 = vmatpush1.msra.mxu0 0.0
    %2829 = vmatprep.subr.mxu0 0.0
    %2830 = vmatpush1.msra.mxu0 0.0
    %2831 = vmatprep.subr.mxu0 0.0
    %2832 = vmatpush1.msra.mxu0 0.0
    %2833 = vmatprep.subr.mxu0 0.0
    %2834 = vmatpush1.msra.mxu0 0.0
    %2835 = vmatprep.subr.mxu0 0.0
    %2836 = vmatpush1.msra.mxu0 0.0
    %2837 = vmatprep.subr.mxu0 0.0
    %2838 = vmatpush1.msra.mxu0 0.0
    %2839 = vmatprep.subr.mxu0 0.0
    %2840 = vmatpush1.msra.mxu0 0.0
    %2841 = vmatprep.subr.mxu0 0.0
    %2842 = vmatpush1.msra.mxu0 0.0
    %2843 = vmatprep.subr.mxu0 0.0
    %2844 = vmatpush1.msra.mxu0 0.0
    %2845 = vmatprep.subr.mxu0 0.0
    %2846 = vmatpush1.msra.mxu0 0.0
    %2847 = vmatprep.subr.mxu0 0.0
    %2848 = vmatpush1.msra.mxu0 0.0
    %2849 = vmatprep.subr.mxu0 0.0
    %2850 = vmatpush1.msra.mxu0 0.0
    %2851 = vmatprep.subr.mxu0 0.0
    %2852 = vmatpush1.msra.mxu0 %v1650
    %2853 = vmatprep.subr.mxu0 0.0
    %2854 = vmatpush1.msra.mxu0 %v1649
    %2855 = vmatprep.subr.mxu0 0.0
    %2856 = vmatpush1.msra.mxu0 %v1648
    %2857 = vmatprep.subr.mxu0 0.0
    %2858 = vmatpush1.msra.mxu0 %v1647
    %2859 = vmatprep.subr.mxu0 0.0
    %2860 = vmatpush2.msra.mxu0 0.0
    %2861 = vmatprep.subr.mxu0 0.0
    %2862 = vmatpush2.msra.mxu0 0.0
    %2863 = vmatprep.subr.mxu0 0.0
    %2864 = vmatpush2.msra.mxu0 0.0
    %2865 = vmatprep.subr.mxu0 0.0
    %2866 = vmatpush2.msra.mxu0 0.0
    %2867 = vmatprep.subr.mxu0 0.0
    %2868 = vmatpush2.msra.mxu0 0.0
    %2869 = vmatprep.subr.mxu0 0.0
    %2870 = vmatpush2.msra.mxu0 0.0
    %2871 = vmatprep.subr.mxu0 0.0
    %2872 = vmatpush2.msra.mxu0 0.0
    %2873 = vmatprep.subr.mxu0 0.0
    %2874 = vmatpush2.msra.mxu0 0.0
    %2875 = vmatprep.subr.mxu0 0.0
    %2876 = vmatpush2.msra.mxu0 0.0
    %2877 = vmatprep.subr.mxu0 0.0
    %2878 = vmatpush2.msra.mxu0 0.0
    %2879 = vmatprep.subr.mxu0 0.0
    %2880 = vmatpush2.msra.mxu0 0.0
    %2881 = vmatprep.subr.mxu0 0.0
    %2882 = vmatpush2.msra.mxu0 0.0
    %2883 = vmatprep.subr.mxu0 0.0
    %2884 = vmatpush2.msra.mxu0 0.0
    %2885 = vmatprep.subr.mxu0 0.0
    %2886 = vmatpush2.msra.mxu0 0.0
    %2887 = vmatprep.subr.mxu0 0.0
    %2888 = vmatpush2.msra.mxu0 0.0
    %2889 = vmatprep.subr.mxu0 0.0
    %2890 = vmatpush2.msra.mxu0 0.0
    %2891 = vmatprep.mubr.f32.mxu0 0.0
    %2892 = vmatmul.mubr.f32.gmra.mxu0 %v2663
    %v2893 = vpop.f32.mrf.mxu0
    %v2894 = vadd.f32 %v1860, %v2893
    %v2895 = vpop.f32.mrf.mxu0
    %2896 = vdwg.mxu0
    %v2897 = vmax.f32 %v2894, 0.0
    %vm2898 = vcmp.ne.f32.partialorder %v2894, %v2894
    %v2899 = vadd.f32 %v2894, 0.0
    %v2900 = vand.u32 2147483647, %v2894
    %v2901 = vsub.f32 0.0, %v2900
    %v2902 = vmul.f32 %v2901, 1.442695
    %v2903 = vpow.pop %v2902
    %v2904 = vadd.f32 %v2903, 1.0
    %v2905 = vlog2.pop %v2904
    %v2906 = vmul.f32 %v2905, 0.6931472
    %v2907 = vmul.f32 -0.5, %v2903
    %v2908 = vadd.f32 %v2907, 1.0
    %v2909 = vmul.f32 %v2908, %v2903
    %v2910 = vand.u32 2147483647, %v2903
    %vm2911 = vcmp.lt.f32.partialorder %v2910, 0.0004427343
    %v2912 = vsel %vm2911, %v2909, %v2906
    %v2913 = vadd.f32 %v2897, %v2912
    %v2914 = vsel %vm2898, %v2899, %v2913
    %v2915 = vadd.f32 %v2914, 0.0001
    %v2916 = vlog2.pop %v2915
    %v2917 = vmul.f32 %v2916, 0.6931472
    %v2918 = vmul.f32 %v2732, %v2631
    %v2919 = vmul.f32 %v2826, %v2604
    %v2920 = vadd.f32 %v2918, %v2919
    %v2921 = vmul.f32 %v2917, %v2634
    %v2922 = vadd.f32 %v2920, %v2921
    %v2923 = vstv %s2630
    %v2924 = vmul.f32 %v2923, %v2922
    %v2925 = vadd.f32 %v2604, %v2924
    %v2926 = vmul.f32 %v2923, %v2925
    %v2927 = vadd.f32 %v2631, %v2926
    %v2928 = vrcp.pop %v2633
    %v2929 = vmul.f32 1.0, %v2928
    %v2930 = vlog2.pop %v2929
    %v2931 = vmul.f32 %v2930, 0.6931472
    %v2932 = vmul.f32 %v2633, %v2633
    %v2933 = vsub.f32 %v2632, %v2927
    %v2934 = vmul.f32 %v2933, %v2933
    %v2935 = vadd.f32 %v2932, %v2934
    %v2936 = vmul.f32 %v2935, %v1970
    %v2937 = vadd.f32 %v2931, %v2936
    %v2938 = vsub.f32 %v2937, 0.5
    %v2939 = vsel %vm1975, %v2938, 0.0
    %v2940 = vsel %vm778, %v2939, 0.0
    %2941 = vadd.xlane.f32.xlu0 %v2940
    %v2942 = vpop.xlane.xlu0 %2941
    %v2943 = vrot.slane %v2942, 4
    %v2944 = vadd.f32 %v2942, %v2943
    %v2945 = vrot.slane %v2944, 2
    %v2946 = vadd.f32 %v2944, %v2945
    %v2947 = vrot.slane %v2946, 1
    %v2948 = vadd.f32 %v2946, %v2947
    %s2949 = vtos %v2948
    %s2950 = sadd.f32 %s2629, %s2949
    %s2951 = smul.f32 %s1408, 0.1
    %s2952 = smul.f32 %s2950, 0.1
    %s2953 = ssub.f32 %s2951, %s2952
    %s2954 = scalar_lea.smem [#allocation9], 0
    %2955 = sst [smem:[%s2954]] %s2953
    %s2956 = scalar_lea.smem [#allocation9], 1
    %2957 = sst [smem:[%s2956]] %s2951
    %s2958 = scalar_lea.smem [#allocation9], 2
    %2959 = sst [smem:[%s2958]] %s2952
    // Predicated region
    $region34: #{tpu_custom_call.1} parent=1 // pred_check
      _
    $region35: #{tpu_custom_call.1} parent=1 // pred_check_branch
      %2961 = sbr.rel (0) target = $region37
    $region36: #{tpu_custom_call.1} parent=1 // pred_region
      %s2963 = ssub.s32 16, 16
      %2964 = vsyncadd [#allocation7], %s2963
      %2967 = dma.smem_to_hbm [#allocation9], 16, %s7, [#allocation7]
    $region37: #{tpu_custom_call.1} parent=1 // pred_fallthru
      _
    // Predicated region
    $region38: #{tpu_custom_call.1} parent=1 // pred_check
      _
    $region39: #{tpu_custom_call.1} parent=1 // pred_check_branch
      %2969 = sbr.rel (0) target = $region41
    $region40: #{tpu_custom_call.1} parent=1 // pred_region
      %2970 = dma.done [#allocation7], 16
    $region41: #{tpu_custom_call.1} parent=1 // pred_fallthru
      _
    %2971 = sfence
    %2972 = vsyncpa [#allocation7], 1
    %2973 = vsyncpa [#allocation8], 1

</llo_original>
